<compile_context>
chip_gen: v7x
topology: tpu7x:2x2x1
jax: 0.10.0
libtpu: 0.0.40
codegen_flags: <defaults>
</compile_context>

<pallas_src>
import functools

import jax
import jax.numpy as jnp
from jax import lax
from jax.experimental import pallas as pl
from jax.experimental.pallas import tpu as pltpu


# ----------------------------------------------------------------------------
# Plain-JAX glue: sample_and_group (farthest point sampling + ball query).
# ----------------------------------------------------------------------------
def square_distance(src, dst):
    # src (B,S,3), dst (B,N,3) -> (B,S,N) squared euclidean distances
    return jnp.sum((src[:, :, None, :] - dst[:, None, :, :]) ** 2, axis=-1)


def farthest_point_sample(xyz, npoint):
    B, N, _ = xyz.shape

    def body(i, state):
        centroids, distance, farthest = state
        centroids = centroids.at[:, i].set(farthest)
        centroid = jnp.take_along_axis(xyz, farthest[:, None, None], axis=1)  # (B,1,3)
        dist = jnp.sum((xyz - centroid) ** 2, axis=-1)                         # (B,N)
        distance = jnp.minimum(distance, dist)
        farthest = jnp.argmax(distance, axis=-1).astype(jnp.int32)
        return centroids, distance, farthest

    init = (jnp.zeros((B, npoint), jnp.int32),
            jnp.full((B, N), 1e10, jnp.float32),
            jnp.zeros((B,), jnp.int32))
    centroids, _, _ = lax.fori_loop(0, npoint, body, init)
    return centroids


def query_ball_point(radius, nsample, xyz, new_xyz):
    B, N, _ = xyz.shape
    S = new_xyz.shape[1]
    sqrdists = square_distance(new_xyz, xyz)                                   # (B,S,N)
    group_idx = jnp.broadcast_to(jnp.arange(N, dtype=jnp.int32), (B, S, N))
    group_idx = jnp.where(sqrdists > radius ** 2, N, group_idx)
    group_idx = jnp.sort(group_idx, axis=-1)[:, :, :nsample]
    group_first = group_idx[:, :, :1]
    group_idx = jnp.where(group_idx == N, group_first, group_idx)
    return group_idx


def index_points(points, idx):
    # points (B,N,C), idx (B,...) -> (B,...,C)
    B = points.shape[0]
    b_idx = jnp.arange(B).reshape((B,) + (1,) * (idx.ndim - 1))
    return points[b_idx, idx]


def sample_and_group(xyz, points, radius, npoint, nsample):
    new_xyz = index_points(xyz, farthest_point_sample(xyz, npoint))            # (B,S,3)
    idx = query_ball_point(radius, nsample, xyz, new_xyz)                      # (B,S,K)
    grouped_xyz = index_points(xyz, idx)                                       # (B,S,K,3)
    grouped_xyz_norm = grouped_xyz - new_xyz[:, :, None, :]
    if points is not None:
        grouped_points = index_points(points, idx)
        new_points = jnp.concatenate([grouped_xyz_norm, grouped_points], axis=-1)
    else:
        new_points = grouped_xyz_norm
    return new_xyz, new_points


# ----------------------------------------------------------------------------
# Device introspection / tile selection.
# ----------------------------------------------------------------------------
def _device_kind():
    try:
        return jax.devices()[0].device_kind.lower()
    except Exception:  # pragma: no cover - defensive
        return ""


def _round_up(x, m):
    return ((x + m - 1) // m) * m


def _target_rows(kind):
    """Rows (= tile_s * nsample) per grid step.  Per-step VMEM is ~1.5 KiB/row,
    so 16384 rows is ~25 MiB peak (fine on 128 MiB v5e/v6e); v7x (64 MiB) stays
    at 8192 rows (~13 MiB)."""
    if "v7" in kind or "tpu7" in kind:
        return 8192
    if any(t in kind for t in ("v2", "v3", "v4", "v5", "v6")):
        return 16384
    return 8192


def choose_tile_s(npoint, nsample, target_rows, min_steps=1):
    """Largest divisor of npoint such that tile_s*nsample <= target_rows, with
    rows % 128 == 0 (lane-aligned input block + pooling slices) and tile_s % 8
    == 0 (output block).  min_steps only matters on v7x (2 TCs) with B < 2."""
    divisors = [d for d in range(1, npoint + 1) if npoint % d == 0]

    def shape_ok(d):
        rows_ok = ((d * nsample) % 128 == 0) or d == npoint
        out_ok = (d % 8 == 0) or d == npoint
        return rows_ok and out_ok

    preds = (
        lambda d: shape_ok(d) and d * nsample <= target_rows
                  and npoint // d >= min_steps and d % 128 == 0,
        lambda d: shape_ok(d) and d * nsample <= target_rows and npoint // d >= min_steps,
        lambda d: shape_ok(d) and d * nsample <= target_rows,
        lambda d: shape_ok(d),
    )
    for pred in preds:
        cands = [d for d in divisors if pred(d)]
        if cands:
            return max(cands)
    return npoint


# ----------------------------------------------------------------------------
# Pallas kernel: transposed (channel-major) fused MLP + max-pool.
# ----------------------------------------------------------------------------
def sa_mlp_kernel(g_ref, w1_ref, w2_ref, w3_ref, out_ref, *,
                  nsample, tile_s, bf16_epilogue):
    # g_ref : (cin_pad, rows) f32, channel-major.  Lane r = k*tile_s + t (sample
    #         k, in-tile point t).  Channel index cin holds the constant 1s that
    #         carry all BN-folded biases through the matmuls.
    # w*_ref: transposed, bias-augmented weights (see _pack_params).
    def relu_to_bf16(h):
        if bf16_epilogue:                       # v6e/v7x: bf16 VALU -> half the VPU ops
            return jnp.maximum(h.astype(jnp.bfloat16), 0)
        return jnp.maximum(h, 0.0).astype(jnp.bfloat16)   # v5e: ReLU in f32

    g = g_ref[...]                                                       # (cin_pad, rows)
    h = jnp.dot(w1_ref[...], g, preferred_element_type=jnp.float32)     # (a1, rows) f32
    h = relu_to_bf16(h)
    h = jnp.dot(w2_ref[...], h, preferred_element_type=jnp.float32)     # (a2, rows) f32
    h = relu_to_bf16(h)
    h = jnp.dot(w3_ref[...], h, preferred_element_type=jnp.float32)     # (cout_p, rows) f32

    # Max over nsample: lanes are sample-major, so each sample is one lane-aligned
    # slice of width tile_s -> running VPU max, no relayout, no nsample alignment.
    m = h[:, :tile_s]
    for k in range(1, nsample):
        m = jnp.maximum(m, h[:, k * tile_s:(k + 1) * tile_s])
    m = jnp.maximum(m, 0.0)                      # final ReLU commutes with the max

    # Small (cout_p, tile_s) -> (tile_s, cout_p) transpose on the idle XLU keeps
    # the output block lane-dense (cout_p is a multiple of 128).
    out_ref[...] = jnp.transpose(m, (1, 0)).astype(out_ref.dtype)


# ----------------------------------------------------------------------------
# Wrapper-side packing.
# ----------------------------------------------------------------------------
def _pack_params(params, cin):
    """Transpose + bias-augment the BN-folded weights.

    Layer outputs gain one extra 'ones' channel (propagated by a 1.0 in the next
    weight matrix) so every shift lands inside the MXU accumulation.  Hidden
    dims are padded to multiples of 8 and cout to a multiple of 128 (lane-dense
    output)."""
    w1, t1, w2, t2, w3, t3 = params
    c1, c2, c3 = w1.shape[1], w2.shape[1], w3.shape[1]
    cin_p = _round_up(cin + 1, 8)
    a1 = _round_up(c1 + 1, 8)
    a2 = _round_up(c2 + 1, 8)
    cout_p = _round_up(c3, 128)

    w1t = jnp.zeros((a1, cin_p), jnp.float32)
    w1t = w1t.at[:c1, :cin].set(w1.T)
    w1t = w1t.at[:c1, cin].set(t1.reshape(-1))
    w1t = w1t.at[c1, cin].set(1.0)                  # propagate the ones channel

    w2t = jnp.zeros((a2, a1), jnp.float32)
    w2t = w2t.at[:c2, :c1].set(w2.T)
    w2t = w2t.at[:c2, c1].set(t2.reshape(-1))
    w2t = w2t.at[c2, c1].set(1.0)                   # propagate the ones channel

    w3t = jnp.zeros((cout_p, a2), jnp.float32)
    w3t = w3t.at[:c3, :c2].set(w3.T)
    w3t = w3t.at[:c3, c2].set(t3.reshape(-1))

    return w1t, w2t.astype(jnp.bfloat16), w3t.astype(jnp.bfloat16), cout_p


def _pack_grouped(grouped, tile_s, cin_p):
    """(B, npoint, nsample, cin) -> (B, cin_p, npoint*nsample) channel-major with
    the rows of each tile ordered sample-major (lane = k*tile_s + t).  Adds the
    ones channel and zero-pads channels to cin_p so the kernel block is fully
    dense in VMEM and the DMA uses large contiguous segments."""
    B, npoint, nsample, cin = grouped.shape
    nt = npoint // tile_s
    g = grouped.astype(jnp.float32).reshape(B, nt, tile_s, nsample, cin)
    g = g.transpose(0, 4, 1, 3, 2)                  # (B, cin, nt, nsample, tile_s)
    g = g.reshape(B, cin, npoint * nsample)
    ones = jnp.ones((B, 1, npoint * nsample), jnp.float32)
    pad = jnp.zeros((B, cin_p - cin - 1, npoint * nsample), jnp.float32)
    return jnp.concatenate([g, ones, pad], axis=1)  # (B, cin_p, npoint*nsample)


# ----------------------------------------------------------------------------
# SA.forward
# ----------------------------------------------------------------------------
def sa_forward(x, params, *, npoint, nsample, radius, points=None, tile_s=None):
    """SA.forward(x, points): returns (new_xyz, per-group max-pooled features)."""
    B = x.shape[0]
    new_x, grouped = sample_and_group(x, points, radius, npoint, nsample)  # (B,S,3),(B,S,K,cin)
    cin = grouped.shape[-1]
    cout = params[4].shape[1]

    kind = _device_kind()
    is_v7 = ("v7" in kind) or ("tpu7" in kind)
    is_pre_v6 = any(t in kind for t in ("v2", "v3", "v4", "v5"))
    bf16_epilogue = not is_pre_v6            # bf16 VALU only on v6e / v7x

    if tile_s is None:
        # min-steps only buys anything on v7x (2 TCs) when the batch axis can't
        # feed both cores; on v5e/v6e the grid is a sequential loop on one TC.
        min_steps = 2 if (is_v7 and B < 2) else 1
        tile_s = choose_tile_s(npoint, nsample, _target_rows(kind), min_steps)
    assert npoint % tile_s == 0
    rows = tile_s * nsample
    assert rows % 128 == 0 or tile_s == npoint

    w1t, w2t, w3t, cout_p = _pack_params(params, cin)
    cin_p = w1t.shape[1]
    gt = _pack_grouped(grouped, tile_s, cin_p)       # (B, cin_p, npoint*nsample)

    kernel = functools.partial(sa_mlp_kernel, nsample=nsample, tile_s=tile_s,
                               bf16_epilogue=bf16_epilogue)

    in_specs = [
        pl.BlockSpec((None, cin_p, rows), lambda b, s: (b, 0, s)),
        pl.BlockSpec(w1t.shape, lambda b, s: (0, 0)),
        pl.BlockSpec(w2t.shape, lambda b, s: (0, 0)),
        pl.BlockSpec(w3t.shape, lambda b, s: (0, 0)),
    ]
    out_specs = pl.BlockSpec((None, tile_s, cout_p), lambda b, s: (b, s, 0))

    # Budget at max tile: input 2x(cin_p*rows*4) + intermediates (~1.5 KiB/row)
    # + output 2x(tile_s*cout_p*4)  ->  ~25 MiB at rows=16384, ~13 MiB at 8192.
    vmem_limit = (48 if is_v7 else 64) * 1024 * 1024

    feats = pl.pallas_call(
        kernel,
        out_shape=jax.ShapeDtypeStruct((B, npoint, cout_p), jnp.float32),
        grid_spec=pltpu.PrefetchScalarGridSpec(
            num_scalar_prefetch=0,
            grid=(B, npoint // tile_s),
            in_specs=in_specs,
            out_specs=out_specs,
        ),
        compiler_params=pltpu.CompilerParams(
            dimension_semantics=("parallel", "parallel"),
            vmem_limit_bytes=vmem_limit,
        ),
    )(gt, w1t, w2t, w3t)

    if cout_p != cout:
        feats = feats[..., :cout]
    return new_x, feats


# ----------------------------------------------------------------------------
# Deterministic parameter init.  Conv2d 1x1 weight+bias and BatchNorm running
# stats are folded:  BN(conv(x)) = x @ (W*scale) + ((b-mean)*scale + beta)
# ----------------------------------------------------------------------------
def init_params(key, in_channel, mlp, eps=1e-5):
    params = []
    last = in_channel
    for out_c in mlp:
        key, kw, kb, kg, kbe, km, kv = jax.random.split(key, 7)
        w = jax.random.normal(kw, (last, out_c), jnp.float32) / jnp.sqrt(float(last))
        b = 0.1 * jax.random.normal(kb, (out_c,), jnp.float32)
        gamma = 1.0 + 0.1 * jax.random.normal(kg, (out_c,), jnp.float32)
        beta = 0.1 * jax.random.normal(kbe, (out_c,), jnp.float32)
        mean = 0.1 * jax.random.normal(km, (out_c,), jnp.float32)
        var = 1.0 + 0.1 * jnp.abs(jax.random.normal(kv, (out_c,), jnp.float32))
        scale = gamma / jnp.sqrt(var + eps)
        w_folded = w * scale[None, :]
        shift = (b - mean) * scale + beta
        params += [w_folded, shift.reshape(1, out_c)]
        last = out_c
    return params


def sa_mlp_ref(grouped, params):
    # pure-JAX reference mirroring the in-kernel math (incl. bf16 layers 2/3)
    B, S, K, C = grouped.shape
    w1, t1, w2, t2, w3, t3 = params
    h = grouped.reshape(B, S * K, C).astype(jnp.float32)
    h = jnp.maximum(h @ w1 + t1, 0.0).astype(jnp.bfloat16)
    h = jnp.dot(h, w2.astype(jnp.bfloat16), preferred_element_type=jnp.float32)
    h = jnp.maximum(h + t2.astype(jnp.bfloat16).astype(jnp.float32), 0.0).astype(jnp.bfloat16)
    h = jnp.dot(h, w3.astype(jnp.bfloat16), preferred_element_type=jnp.float32)
    h = jnp.maximum(h + t3.astype(jnp.bfloat16).astype(jnp.float32), 0.0)
    return jnp.max(h.reshape(B, S, K, -1), axis=2)


if __name__ == "__main__":
    key = jax.random.PRNGKey(0)
    kx, kp = jax.random.split(key)

    B, N = 2, 256
    npoint, nsample, radius = 128, 16, 0.4
    mlp = [64, 64, 128]

    x = jax.random.uniform(kx, (B, N, 3), jnp.float32)
    params = init_params(kp, 3, mlp)

    new_x, feats = sa_forward(x, params, npoint=npoint, nsample=nsample, radius=radius)
    jax.block_until_ready((new_x, feats))

    assert new_x.shape == (B, npoint, 3)
    assert feats.shape == (B, npoint, mlp[-1])

    # correctness check against a pure-JAX reference of the kernel math
    _, grouped = sample_and_group(x, None, radius, npoint, nsample)
    ref = sa_mlp_ref(grouped, params)
    assert jnp.allclose(feats, ref, rtol=1e-2, atol=1e-2), "kernel mismatch"

    print("KERNEL_OK")
</pallas_src>

<mosaic_0001>
module attributes {stable_mosaic.version = 11 : i64} {
  func.func @sa_mlp_kernel(%arg0: i32, %arg1: i32, %arg2: memref<1x8x2048xf32, #tpu.memory_space<vmem>>, %arg3: memref<72x8xf32, #tpu.memory_space<vmem>>, %arg4: memref<72x72xbf16, #tpu.memory_space<vmem>>, %arg5: memref<128x72xbf16, #tpu.memory_space<vmem>>, %arg6: memref<1x128x128xf32, #tpu.memory_space<vmem>>) attributes {dimension_semantics = [#tpu.dimension_semantics<parallel>, #tpu.dimension_semantics<parallel>], iteration_bounds = array<i64: 2, 1>, scalar_prefetch = 0 : i64, scratch_operands = 0 : i64, tpu.core_type = #tpu.core_type<tc>, window_params = [{transform_indices = @transform_0, window_bounds = array<i64: 1, 8, 2048>}, {pipeline_mode = #tpu.pipeline_mode<synchronous>, transform_indices = @transform_1, window_bounds = array<i64: 72, 8>}, {pipeline_mode = #tpu.pipeline_mode<synchronous>, transform_indices = @transform_2, window_bounds = array<i64: 72, 72>}, {pipeline_mode = #tpu.pipeline_mode<synchronous>, transform_indices = @transform_3, window_bounds = array<i64: 128, 72>}, {transform_indices = @transform_4, window_bounds = array<i64: 1, 128, 128>}]} {
    %c0 = arith.constant 0 : index
    %c0_0 = arith.constant 0 : index
    %c0_1 = arith.constant 0 : index
    %0 = vector.load %arg2[%c0, %c0_0, %c0_1] : memref<1x8x2048xf32, #tpu.memory_space<vmem>>, vector<1x8x2048xf32>
    %1 = vector.shape_cast %0 : vector<1x8x2048xf32> to vector<8x2048xf32>
    %c0_2 = arith.constant 0 : index
    %c0_3 = arith.constant 0 : index
    %2 = vector.load %arg3[%c0_2, %c0_3] : memref<72x8xf32, #tpu.memory_space<vmem>>, vector<72x8xf32>
    %cst = arith.constant dense<0.000000e+00> : vector<72x2048xf32>
    %3 = tpu.matmul %2, %1, %cst {dimension_numbers = #tpu.dot_dimension_numbers<[1], [0], [0], [1], [0, 0, 1, 1], [], []>} : vector<72x8xf32>, vector<8x2048xf32>, vector<72x2048xf32> -> vector<72x2048xf32>
    %4 = arith.truncf %3 : vector<72x2048xf32> to vector<72x2048xbf16>
    %cst_4 = arith.constant 0.000000e+00 : bf16
    %5 = vector.broadcast %cst_4 : bf16 to vector<72x2048xbf16>
    %6 = arith.maximumf %4, %5 : vector<72x2048xbf16>
    %c0_5 = arith.constant 0 : index
    %c0_6 = arith.constant 0 : index
    %7 = vector.load %arg4[%c0_5, %c0_6] : memref<72x72xbf16, #tpu.memory_space<vmem>>, vector<72x72xbf16>
    %cst_7 = arith.constant dense<0.000000e+00> : vector<72x2048xf32>
    %8 = tpu.matmul %7, %6, %cst_7 {dimension_numbers = #tpu.dot_dimension_numbers<[1], [0], [0], [1], [0, 0, 1, 1], [], []>} : vector<72x72xbf16>, vector<72x2048xbf16>, vector<72x2048xf32> -> vector<72x2048xf32>
    %9 = arith.truncf %8 : vector<72x2048xf32> to vector<72x2048xbf16>
    %cst_8 = arith.constant 0.000000e+00 : bf16
    %10 = vector.broadcast %cst_8 : bf16 to vector<72x2048xbf16>
    %11 = arith.maximumf %9, %10 : vector<72x2048xbf16>
    %c0_9 = arith.constant 0 : index
    %c0_10 = arith.constant 0 : index
    %12 = vector.load %arg5[%c0_9, %c0_10] : memref<128x72xbf16, #tpu.memory_space<vmem>>, vector<128x72xbf16>
    %cst_11 = arith.constant dense<0.000000e+00> : vector<128x2048xf32>
    %13 = tpu.matmul %12, %11, %cst_11 {dimension_numbers = #tpu.dot_dimension_numbers<[1], [0], [0], [1], [0, 0, 1, 1], [], []>} : vector<128x72xbf16>, vector<72x2048xbf16>, vector<128x2048xf32> -> vector<128x2048xf32>
    %14 = vector.extract_strided_slice %13 {offsets = [0, 0], sizes = [128, 128], strides = [1, 1]} : vector<128x2048xf32> to vector<128x128xf32>
    %15 = vector.extract_strided_slice %13 {offsets = [0, 128], sizes = [128, 128], strides = [1, 1]} : vector<128x2048xf32> to vector<128x128xf32>
    %16 = arith.maximumf %14, %15 : vector<128x128xf32>
    %17 = vector.extract_strided_slice %13 {offsets = [0, 256], sizes = [128, 128], strides = [1, 1]} : vector<128x2048xf32> to vector<128x128xf32>
    %18 = arith.maximumf %16, %17 : vector<128x128xf32>
    %19 = vector.extract_strided_slice %13 {offsets = [0, 384], sizes = [128, 128], strides = [1, 1]} : vector<128x2048xf32> to vector<128x128xf32>
    %20 = arith.maximumf %18, %19 : vector<128x128xf32>
    %21 = vector.extract_strided_slice %13 {offsets = [0, 512], sizes = [128, 128], strides = [1, 1]} : vector<128x2048xf32> to vector<128x128xf32>
    %22 = arith.maximumf %20, %21 : vector<128x128xf32>
    %23 = vector.extract_strided_slice %13 {offsets = [0, 640], sizes = [128, 128], strides = [1, 1]} : vector<128x2048xf32> to vector<128x128xf32>
    %24 = arith.maximumf %22, %23 : vector<128x128xf32>
    %25 = vector.extract_strided_slice %13 {offsets = [0, 768], sizes = [128, 128], strides = [1, 1]} : vector<128x2048xf32> to vector<128x128xf32>
    %26 = arith.maximumf %24, %25 : vector<128x128xf32>
    %27 = vector.extract_strided_slice %13 {offsets = [0, 896], sizes = [128, 128], strides = [1, 1]} : vector<128x2048xf32> to vector<128x128xf32>
    %28 = arith.maximumf %26, %27 : vector<128x128xf32>
    %29 = vector.extract_strided_slice %13 {offsets = [0, 1024], sizes = [128, 128], strides = [1, 1]} : vector<128x2048xf32> to vector<128x128xf32>
    %30 = arith.maximumf %28, %29 : vector<128x128xf32>
    %31 = vector.extract_strided_slice %13 {offsets = [0, 1152], sizes = [128, 128], strides = [1, 1]} : vector<128x2048xf32> to vector<128x128xf32>
    %32 = arith.maximumf %30, %31 : vector<128x128xf32>
    %33 = vector.extract_strided_slice %13 {offsets = [0, 1280], sizes = [128, 128], strides = [1, 1]} : vector<128x2048xf32> to vector<128x128xf32>
    %34 = arith.maximumf %32, %33 : vector<128x128xf32>
    %35 = vector.extract_strided_slice %13 {offsets = [0, 1408], sizes = [128, 128], strides = [1, 1]} : vector<128x2048xf32> to vector<128x128xf32>
    %36 = arith.maximumf %34, %35 : vector<128x128xf32>
    %37 = vector.extract_strided_slice %13 {offsets = [0, 1536], sizes = [128, 128], strides = [1, 1]} : vector<128x2048xf32> to vector<128x128xf32>
    %38 = arith.maximumf %36, %37 : vector<128x128xf32>
    %39 = vector.extract_strided_slice %13 {offsets = [0, 1664], sizes = [128, 128], strides = [1, 1]} : vector<128x2048xf32> to vector<128x128xf32>
    %40 = arith.maximumf %38, %39 : vector<128x128xf32>
    %41 = vector.extract_strided_slice %13 {offsets = [0, 1792], sizes = [128, 128], strides = [1, 1]} : vector<128x2048xf32> to vector<128x128xf32>
    %42 = arith.maximumf %40, %41 : vector<128x128xf32>
    %43 = vector.extract_strided_slice %13 {offsets = [0, 1920], sizes = [128, 128], strides = [1, 1]} : vector<128x2048xf32> to vector<128x128xf32>
    %44 = arith.maximumf %42, %43 : vector<128x128xf32>
    %cst_12 = arith.constant 0.000000e+00 : f32
    %45 = vector.broadcast %cst_12 : f32 to vector<128x128xf32>
    %46 = arith.maximumf %44, %45 : vector<128x128xf32>
    %47 = tpu.transpose %46, [1, 0] : vector<128x128xf32> -> vector<128x128xf32>
    %c0_13 = arith.constant 0 : index
    %c0_14 = arith.constant 0 : index
    %c0_15 = arith.constant 0 : index
    %48 = vector.load %arg6[%c0_13, %c0_14, %c0_15] : memref<1x128x128xf32, #tpu.memory_space<vmem>>, vector<1x128x128xf32>
    %49 = vector.shape_cast %48 : vector<1x128x128xf32> to vector<128x128xf32>
    %50 = vector.shape_cast %47 : vector<128x128xf32> to vector<1x128x128xf32>
    tpu.vector_store %arg6[%c0_13, %c0_14, %c0_15], %50 {strides = array<i32>} : memref<1x128x128xf32, #tpu.memory_space<vmem>>, vector<1x128x128xf32>,
    return
  }
  func.func @transform_0(%arg0: i32, %arg1: i32) -> (i32, i32, i32) {
    %c0_i32 = arith.constant 0 : i32
    %c0_i32_0 = arith.constant 0 : i32
    return %arg0, %c0_i32, %arg1 : i32, i32, i32
  }
  func.func @transform_1(%arg0: i32, %arg1: i32) -> (i32, i32) {
    %c0_i32 = arith.constant 0 : i32
    %c0_i32_0 = arith.constant 0 : i32
    %c0_i32_1 = arith.constant 0 : i32
    return %c0_i32, %c0_i32_0 : i32, i32
  }
  func.func @transform_2(%arg0: i32, %arg1: i32) -> (i32, i32) {
    %c0_i32 = arith.constant 0 : i32
    %c0_i32_0 = arith.constant 0 : i32
    %c0_i32_1 = arith.constant 0 : i32
    return %c0_i32, %c0_i32_0 : i32, i32
  }
  func.func @transform_3(%arg0: i32, %arg1: i32) -> (i32, i32) {
    %c0_i32 = arith.constant 0 : i32
    %c0_i32_0 = arith.constant 0 : i32
    %c0_i32_1 = arith.constant 0 : i32
    return %c0_i32, %c0_i32_0 : i32, i32
  }
  func.func @transform_4(%arg0: i32, %arg1: i32) -> (i32, i32, i32) {
    %c0_i32 = arith.constant 0 : i32
    %c0_i32_0 = arith.constant 0 : i32
    return %arg0, %arg1, %c0_i32 : i32, i32, i32
  }
}

</mosaic_0001>

<llo_original>
// kernel: tpu_custom_call.1
$region0: #{tpu_custom_call.1}
  #allocation0 [shape = 'u32[]', space=smem, size = 0x4, offset = 0x4, fixed_abs, tag = 'smem constant byte address 0x4 - core index']
  #allocation1 [shape = 'u32[144,128]{1,0:T(1,128)}', space=vmem, size = 0x12000, scoped, tag = 'internal scratch']
  %s0 = inlined_call_operand.hbm [shape: f32[2,8,2048], index: 0, kind: input, shape index: {}]
  %s1 = inlined_call_operand.hbm [shape: f32[72,8], index: 1, kind: input, shape index: {}]
  %s2 = inlined_call_operand.hbm [shape: bf16[72,72], index: 2, kind: input, shape index: {}]
  %s3 = inlined_call_operand.hbm [shape: bf16[128,72], index: 3, kind: input, shape index: {}]
  %s4 = inlined_call_operand.hbm [shape: f32[2,128,128], index: 4, kind: output, shape index: {}]
  %s5 = sld [smem:[#allocation0]]
  $region65: #{tpu_custom_call.1} parent=0
    _
  %s7 = ssub.s32 1, %s5
  %s8 = scalar_select 0, %s7, %s5
  $region1: #{tpu_custom_call.1} parent=0
    #allocation2 [shape = 'u8[131072]{0}', space=vmem, size = 0x20000, scoped, tag = 'input window, operand 0']
    #allocation3 [shape = 's32[2]{0}', space=sflag, size = 0x8, scoped, tag = 'scoped memory for tpu_custom_call.1']
    #allocation4 [shape = 's32[2]{0}', space=sflag, size = 0x8, scoped, tag = 'scoped memory for tpu_custom_call.1']
    #allocation5 [shape = 'u8[36864]{0}', space=vmem, size = 0x9000, scoped, tag = 'input window, operand 1, single buffered']
    #allocation6 [shape = 's32[1]{0}', space=sflag, size = 0x4, scoped, tag = 'scoped memory for tpu_custom_call.1']
    #allocation7 [shape = 'u8[18432]{0}', space=vmem, size = 0x4800, scoped, tag = 'input window, operand 2, single buffered']
    #allocation8 [shape = 'u8[32768]{0}', space=vmem, size = 0x8000, scoped, tag = 'input window, operand 3, single buffered']
    #allocation9 [shape = 's32[1]{0}', space=sflag, size = 0x4, scoped, tag = 'scoped memory for tpu_custom_call.1']
    #allocation10 [shape = 'u8[131072]{0}', space=vmem, size = 0x20000, scoped, tag = 'output window, operand 0']
    %9 = vsyncpa [#allocation3], 0
    %s10 = scalar_lea.sflag [#allocation3], 1
    %11 = vsyncpa %s10, 0
    %12 = vsyncpa [#allocation6], 0
    %13 = vsyncpa [#allocation9], 0
    %14 = vsyncpa [#allocation4], 0
    %s15 = scalar_lea.sflag [#allocation4], 1
    %16 = vsyncpa %s15, 0
    loop: start=0, step=1, limit=4
    $region2: #{tpu_custom_call.1} parent=1 // loop_pre_header
      _
    $region3: #{tpu_custom_call.1} parent=1 // loop_header
      %s18 = sphi 0, %s22
      %p19 = scmp.ge.s32.totalorder %s18, 4
      %s25 = sphi 0, %s37
      %s26 = sphi 0, %s33
      %s27 = sphi 0, %s25
      %s28 = sphi 0, %s26
      %s29 = sphi 0, %s27
      %s30 = sphi 0, %s28
      %s42 = sphi 0, %s44
      %s45 = sphi 0, %s42
      %s46 = sphi 0, %s45
      %s62 = sphi 0, %s46
      %s66 = sphi 0, %s66
      %s68 = sphi 0, %s66
      %s69 = sphi 0, %s68
      %s83 = sphi 0, %s69
      %s87 = sphi 0, %s87
      %s89 = sphi 0, %s87
      %s90 = sphi 0, %s89
      %s104 = sphi 0, %s90
      %s108 = sphi 0, %s108
      %s110 = sphi 0, %s108
      %s111 = sphi 0, %s110
      %s125 = sphi 0, %s111
      %s133 = sphi 0, %s135
      %s136 = sphi 0, %s133
      %s137 = sphi 0, %s136
      %s153 = sphi 0, %s137
    $region4: #{tpu_custom_call.1} parent=1 // loop_header_branch
      %21 = sbr.rel (%p19) target = $region8
    $region5: #{tpu_custom_call.1} parent=1 // loop_body
      %s23 = ssub.s32 %s18, 1
      %s24 = ssub.s32 %s18, 2
      %s31 = sadd.s32 1, %s26
      %p32 = scmp.ge.s32.totalorder %s31, 1
      %s33 = scalar_select %p32, 0, %s31
      %s34 = sadd.s32 1, %s25
      %s35 = scalar_select %p32, %s34, %s25
      %p36 = scmp.ge.s32.totalorder %s35, 2
      %s37 = scalar_select %p36, 0, %s35
      %s38 = ssub.s32 %s25, %s37
      %s39 = ssub.s32 %s26, %s33
      %s40 = sor.u32 %s38, %s39
      %p41 = scmp.eq.s32.totalorder %s40, 0
      %s43 = sadd.s32 %s42, 1
      %s44 = scalar_select %p41, %s42, %s43
      %p47 = pneg %p41
      %p48 = scmp.eq.s32.totalorder %s18, 1
      %p49 = por %p47, %p48
      %p50 = scmp.ne.s32.totalorder %s42, %s45
      %p51 = scmp.eq.s32.totalorder %s18, 0
      %p52 = por %p50, %p51
      %p53 = scmp.ne.s32.totalorder %s42, %s45
      %p54 = scmp.eq.s32.totalorder %s23, 1
      %p55 = por %p53, %p54
      %p56 = scmp.ne.s32.totalorder %s45, %s46
      %p57 = scmp.eq.s32.totalorder %s23, 0
      %p58 = por %p56, %p57
      %p59 = scmp.ne.s32.totalorder %s45, %s46
      %p60 = scmp.eq.s32.totalorder %s24, 1
      %p61 = por %p59, %p60
      %p63 = scmp.ne.s32.totalorder %s46, %s62
      %p64 = scmp.eq.s32.totalorder %s24, 0
      %p65 = por %p63, %p64
      %s67 = sadd.s32 %s66, 1
      %p70 = scmp.eq.s32.totalorder %s18, 1
      %p71 = scmp.ne.s32.totalorder %s66, %s68
      %p72 = scmp.eq.s32.totalorder %s18, 0
      %p73 = por %p71, %p72
      %p74 = scmp.ne.s32.totalorder %s66, %s68
      %p75 = scmp.eq.s32.totalorder %s23, 1
      %p76 = por %p74, %p75
      %p77 = scmp.ne.s32.totalorder %s68, %s69
      %p78 = scmp.eq.s32.totalorder %s23, 0
      %p79 = por %p77, %p78
      %p80 = scmp.ne.s32.totalorder %s68, %s69
      %p81 = scmp.eq.s32.totalorder %s24, 1
      %p82 = por %p80, %p81
      %p84 = scmp.ne.s32.totalorder %s69, %s83
      %p85 = scmp.eq.s32.totalorder %s24, 0
      %p86 = por %p84, %p85
      %s88 = sadd.s32 %s87, 1
      %p91 = scmp.eq.s32.totalorder %s18, 1
      %p92 = scmp.ne.s32.totalorder %s87, %s89
      %p93 = scmp.eq.s32.totalorder %s18, 0
      %p94 = por %p92, %p93
      %p95 = scmp.ne.s32.totalorder %s87, %s89
      %p96 = scmp.eq.s32.totalorder %s23, 1
      %p97 = por %p95, %p96
      %p98 = scmp.ne.s32.totalorder %s89, %s90
      %p99 = scmp.eq.s32.totalorder %s23, 0
      %p100 = por %p98, %p99
      %p101 = scmp.ne.s32.totalorder %s89, %s90
      %p102 = scmp.eq.s32.totalorder %s24, 1
      %p103 = por %p101, %p102
      %p105 = scmp.ne.s32.totalorder %s90, %s104
      %p106 = scmp.eq.s32.totalorder %s24, 0
      %p107 = por %p105, %p106
      %s109 = sadd.s32 %s108, 1
      %p112 = scmp.eq.s32.totalorder %s18, 1
      %p113 = scmp.ne.s32.totalorder %s108, %s110
      %p114 = scmp.eq.s32.totalorder %s18, 0
      %p115 = por %p113, %p114
      %p116 = scmp.ne.s32.totalorder %s108, %s110
      %p117 = scmp.eq.s32.totalorder %s23, 1
      %p118 = por %p116, %p117
      %p119 = scmp.ne.s32.totalorder %s110, %s111
      %p120 = scmp.eq.s32.totalorder %s23, 0
      %p121 = por %p119, %p120
      %p122 = scmp.ne.s32.totalorder %s110, %s111
      %p123 = scmp.eq.s32.totalorder %s24, 1
      %p124 = por %p122, %p123
      %p126 = scmp.ne.s32.totalorder %s111, %s125
      %p127 = scmp.eq.s32.totalorder %s24, 0
      %p128 = por %p126, %p127
      %s129 = ssub.s32 %s25, %s37
      %s130 = ssub.s32 %s26, %s33
      %s131 = sor.u32 %s129, %s130
      %p132 = scmp.eq.s32.totalorder %s131, 0
      %s134 = sadd.s32 %s133, 1
      %s135 = scalar_select %p132, %s133, %s134
      %p138 = pneg %p132
      %p139 = scmp.eq.s32.totalorder %s18, 1
      %p140 = por %p138, %p139
      %p141 = scmp.ne.s32.totalorder %s133, %s136
      %p142 = scmp.eq.s32.totalorder %s18, 0
      %p143 = por %p141, %p142
      %p144 = scmp.ne.s32.totalorder %s133, %s136
      %p145 = scmp.eq.s32.totalorder %s23, 1
      %p146 = por %p144, %p145
      %p147 = scmp.ne.s32.totalorder %s136, %s137
      %p148 = scmp.eq.s32.totalorder %s23, 0
      %p149 = por %p147, %p148
      %p150 = scmp.ne.s32.totalorder %s136, %s137
      %p151 = scmp.eq.s32.totalorder %s24, 1
      %p152 = por %p150, %p151
      %p154 = scmp.ne.s32.totalorder %s137, %s153
      %p155 = scmp.eq.s32.totalorder %s24, 0
      %p156 = por %p154, %p155
      %p157 = scmp.le.s32.totalorder 1, %s18
      %p158 = scmp.lt.s32.totalorder %s18, 3
      %p159 = pnand %p157, %p158
      %p160 = pneg %p159
      // Predicated region
      $region9: #{tpu_custom_call.1} parent=5 // pred_check
        _
      $region10: #{tpu_custom_call.1} parent=5 // pred_check_branch
        %162 = sbr.rel (%p159) target = $region12
      $region11: #{tpu_custom_call.1} parent=5 // pred_region
        %s163 = ssub.s32 %s18, 1
        // Predicated region
        $region13: #{tpu_custom_call.1} parent=11 // pred_check
          %p164 = pneg %p79
        $region14: #{tpu_custom_call.1} parent=11 // pred_check_branch
          %166 = sbr.rel (%p164) target = $region16
        $region15: #{tpu_custom_call.1} parent=11 // pred_region
          %s168 = ssub.s32 1152, 1152
          %169 = vsyncadd [#allocation6], %s168
          %s170 = sshll.u32 [#allocation5], 4
          %s171 = int_to_ptr.vmem [resolvable:$true] %s170
          %176 = dma.hbm_to_vmem [thread:$0]  %s1, 1152, %s171, [#allocation6], 128, 128, 8
        $region16: #{tpu_custom_call.1} parent=11 // pred_fallthru
          _
        // Predicated region
        $region17: #{tpu_custom_call.1} parent=11 // pred_check
          %p177 = pneg %p100
        $region18: #{tpu_custom_call.1} parent=11 // pred_check_branch
          %179 = sbr.rel (%p177) target = $region20
        $region19: #{tpu_custom_call.1} parent=11 // pred_region
          %s181 = ssub.s32 576, 576
          %182 = vsyncadd [#allocation6], %s181
          %s183 = sshll.u32 [#allocation7], 4
          %s184 = int_to_ptr.vmem [resolvable:$true] %s183
          %189 = dma.hbm_to_vmem [thread:$0]  %s2, 576, %s184, [#allocation6], 64, 64, 4
        $region20: #{tpu_custom_call.1} parent=11 // pred_fallthru
          _
        // Predicated region
        $region21: #{tpu_custom_call.1} parent=11 // pred_check
          %p190 = pneg %p121
        $region22: #{tpu_custom_call.1} parent=11 // pred_check_branch
          %192 = sbr.rel (%p190) target = $region24
        $region23: #{tpu_custom_call.1} parent=11 // pred_region
          %s194 = ssub.s32 1024, 1024
          %195 = vsyncadd [#allocation9], %s194
          %s196 = sshll.u32 [#allocation8], 4
          %s197 = int_to_ptr.vmem [resolvable:$true] %s196
          %202 = dma.hbm_to_vmem [thread:$0]  %s3, 1024, %s197, [#allocation9], 64, 64, 4
        $region24: #{tpu_custom_call.1} parent=11 // pred_fallthru
          _
      $region12: #{tpu_custom_call.1} parent=5 // pred_fallthru
        _
      %p203 = scmp.lt.s32.totalorder %s18, 2
      // Predicated region
      $region25: #{tpu_custom_call.1} parent=5 // pred_check
        %p204 = pneg %p203
      $region26: #{tpu_custom_call.1} parent=5 // pred_check_branch
        %206 = sbr.rel (%p204) target = $region28
      $region27: #{tpu_custom_call.1} parent=5 // pred_region
        // Predicated region
        $region29: #{tpu_custom_call.1} parent=27 // pred_check
          %p207 = pneg %p52
        $region30: #{tpu_custom_call.1} parent=27 // pred_check_branch
          %209 = sbr.rel (%p207) target = $region32
        $region31: #{tpu_custom_call.1} parent=27 // pred_region
          %s210 = sand.u32 %s42, 1
          %s211 = scalar_lea.sflag [#allocation3], %s210
          %s212 = sand.u32 %s42, 1
          %s213 = smul.addr %s212, 128
          %s214 = scalar_lea.vmem [#allocation2], %s213
          %s215 = smul.u32 16, %s26
          %s217 = ssub.s32 2048, 2048
          %218 = vsyncadd %s211, %s217
          %s219 = smul.addr %s25, 16
          %s220 = sadd.s32 %s215, %s219
          %s221 = smul.addr %s220, 128
          %s222 = scalar_lea.hbm %s0, %s221
          %s224 = sshll.u32 %s214, 4
          %s225 = int_to_ptr.vmem [resolvable:$true] %s224
          %227 = dma.hbm_to_vmem [thread:$0]  %s222, 2048, %s225, %s211
        $region32: #{tpu_custom_call.1} parent=27 // pred_fallthru
          _
      $region28: #{tpu_custom_call.1} parent=5 // pred_fallthru
        _
      %p228 = scmp.le.s32.totalorder 1, %s18
      %p229 = scmp.lt.s32.totalorder %s18, 3
      %p230 = pnand %p228, %p229
      %p231 = pneg %p230
      // Predicated region
      $region33: #{tpu_custom_call.1} parent=5 // pred_check
        _
      $region34: #{tpu_custom_call.1} parent=5 // pred_check_branch
        %233 = sbr.rel (%p230) target = $region36
      $region35: #{tpu_custom_call.1} parent=5 // pred_region
        %s234 = ssub.s32 %s18, 1
        %s235 = sand.u32 %s45, 1
        %s236 = scalar_lea.sflag [#allocation3], %s235
        %s237 = sand.u32 %s45, 1
        %s238 = smul.addr %s237, 128
        %s239 = scalar_lea.vmem [#allocation2], %s238
        // Predicated region
        $region37: #{tpu_custom_call.1} parent=35 // pred_check
          %p240 = pneg %p58
        $region38: #{tpu_custom_call.1} parent=35 // pred_check_branch
          %242 = sbr.rel (%p240) target = $region40
        $region39: #{tpu_custom_call.1} parent=35 // pred_region
          %243 = dma.done %s236, 2048
        $region40: #{tpu_custom_call.1} parent=35 // pred_fallthru
          _
        // Predicated region
        $region41: #{tpu_custom_call.1} parent=35 // pred_check
          %p244 = pneg %p79
        $region42: #{tpu_custom_call.1} parent=35 // pred_check_branch
          %246 = sbr.rel (%p244) target = $region44
        $region43: #{tpu_custom_call.1} parent=35 // pred_region
          %247 = dma.done [#allocation6], 1152
        $region44: #{tpu_custom_call.1} parent=35 // pred_fallthru
          _
        // Predicated region
        $region45: #{tpu_custom_call.1} parent=35 // pred_check
          %p248 = pneg %p100
        $region46: #{tpu_custom_call.1} parent=35 // pred_check_branch
          %250 = sbr.rel (%p248) target = $region48
        $region47: #{tpu_custom_call.1} parent=35 // pred_region
          %251 = dma.done [#allocation6], 576
        $region48: #{tpu_custom_call.1} parent=35 // pred_fallthru
          _
        // Predicated region
        $region49: #{tpu_custom_call.1} parent=35 // pred_check
          %p252 = pneg %p121
        $region50: #{tpu_custom_call.1} parent=35 // pred_check_branch
          %254 = sbr.rel (%p252) target = $region52
        $region51: #{tpu_custom_call.1} parent=35 // pred_region
          %255 = dma.done [#allocation9], 1024
        $region52: #{tpu_custom_call.1} parent=35 // pred_fallthru
          _
        %s256 = sand.u32 %s45, 1
        %s257 = scalar_lea.sflag [#allocation3], %s256
        %s258 = sand.u32 %s45, 1
        %s259 = smul.addr %s258, 128
        %s260 = scalar_lea.vmem [#allocation2], %s259
        %p261 = pneg %p58
        %p262 = pneg %p55
        %p263 = pneg %p79
        %p264 = pneg %p76
        %p265 = pneg %p100
        %p266 = pneg %p97
        %p267 = pneg %p121
        %p268 = pneg %p118
        %p269 = pneg %p149
        %p270 = pneg %p146
        %s271 = sand.u32 %s136, 1
        %s272 = scalar_lea.sflag [#allocation4], %s271
        %s273 = sand.u32 %s136, 1
        %s274 = smul.addr %s273, 128
        %s275 = scalar_lea.vmem [#allocation10], %s274
        %s276 = smul.u32 16, %s28
        %s277 = smul.u32 16, %s28
        %v279 = vld [vmem:[%s239] sm:$0xff]
        %v280 = vld [vmem:[%s239 + $0x8] sm:$0xff]
        %v281 = vld [vmem:[%s239 + $0x10] sm:$0xff]
        %v282 = vld [vmem:[%s239 + $0x18] sm:$0xff]
        %v283 = vld [vmem:[%s239 + $0x20] sm:$0xff]
        %v284 = vld [vmem:[%s239 + $0x28] sm:$0xff]
        %v285 = vld [vmem:[%s239 + $0x30] sm:$0xff]
        %v286 = vld [vmem:[%s239 + $0x38] sm:$0xff]
        %v287 = vld [vmem:[%s239 + $0x40] sm:$0xff]
        %v288 = vld [vmem:[%s239 + $0x48] sm:$0xff]
        %v289 = vld [vmem:[%s239 + $0x50] sm:$0xff]
        %v290 = vld [vmem:[%s239 + $0x58] sm:$0xff]
        %v291 = vld [vmem:[%s239 + $0x60] sm:$0xff]
        %v292 = vld [vmem:[%s239 + $0x68] sm:$0xff]
        %v293 = vld [vmem:[%s239 + $0x70] sm:$0xff]
        %v294 = vld [vmem:[%s239 + $0x78] sm:$0xff]
        %v295 = vld [vmem:[#allocation5] sm:$0xff]
        %v296 = vld [vmem:[#allocation5 + $0x8] sm:$0xff]
        %v297 = vld [vmem:[#allocation5 + $0x10] sm:$0xff]
        %v298 = vld [vmem:[#allocation5 + $0x18] sm:$0xff]
        %v299 = vld [vmem:[#allocation5 + $0x20] sm:$0xff]
        %v300 = vld [vmem:[#allocation5 + $0x28] sm:$0xff]
        %v301 = vld [vmem:[#allocation5 + $0x30] sm:$0xff]
        %v302 = vld [vmem:[#allocation5 + $0x38] sm:$0xff]
        %v303 = vld [vmem:[#allocation5 + $0x40] sm:$0xff]
        %vm304 = vcmask 64512
        %v306 = vsel %vm304, %v295, 0
        %v309 = vsel %vm304, %v296, 0
        %v312 = vsel %vm304, %v297, 0
        %v315 = vsel %vm304, %v298, 0
        %v318 = vsel %vm304, %v299, 0
        %v321 = vsel %vm304, %v300, 0
        %v324 = vsel %vm304, %v301, 0
        %v327 = vsel %vm304, %v302, 0
        %v330 = vsel %vm304, %v303, 0
        %332 = vmatprep.subr.mxu0 %v280
        %333 = vmatpush1.msra.mxu0 %v279
        %334 = vmatprep.subr.mxu0 0.0
        %335 = vmatpush1.msra.mxu0 0.0
        %336 = vmatprep.subr.mxu0 0.0
        %337 = vmatpush1.msra.mxu0 0.0
        %338 = vmatprep.subr.mxu0 0.0
        %339 = vmatpush1.msra.mxu0 0.0
        %340 = vmatprep.subr.mxu0 0.0
        %341 = vmatpush1.msra.mxu0 0.0
        %342 = vmatprep.subr.mxu0 0.0
        %343 = vmatpush1.msra.mxu0 0.0
        %344 = vmatprep.subr.mxu0 0.0
        %345 = vmatpush1.msra.mxu0 0.0
        %346 = vmatprep.subr.mxu0 0.0
        %347 = vmatpush1.msra.mxu0 0.0
        %348 = vmatprep.subr.mxu0 0.0
        %349 = vmatpush1.msra.mxu0 0.0
        %350 = vmatprep.subr.mxu0 0.0
        %351 = vmatpush1.msra.mxu0 0.0
        %352 = vmatprep.subr.mxu0 0.0
        %353 = vmatpush1.msra.mxu0 0.0
        %354 = vmatprep.subr.mxu0 0.0
        %355 = vmatpush1.msra.mxu0 0.0
        %356 = vmatprep.subr.mxu0 0.0
        %357 = vmatpush1.msra.mxu0 0.0
        %358 = vmatprep.subr.mxu0 0.0
        %359 = vmatpush1.msra.mxu0 0.0
        %360 = vmatprep.subr.mxu0 0.0
        %361 = vmatpush1.msra.mxu0 0.0
        %362 = vmatprep.subr.mxu0 0.0
        %363 = vmatpush1.msra.mxu0 0.0
        %364 = vmatprep.subr.mxu0 0.0
        %365 = vmatpush1.msra.mxu0 0.0
        %366 = vmatprep.subr.mxu0 0.0
        %367 = vmatpush1.msra.mxu0 0.0
        %368 = vmatprep.subr.mxu0 0.0
        %369 = vmatpush1.msra.mxu0 0.0
        %370 = vmatprep.subr.mxu0 0.0
        %371 = vmatpush1.msra.mxu0 0.0
        %372 = vmatprep.subr.mxu0 0.0
        %373 = vmatpush1.msra.mxu0 0.0
        %374 = vmatprep.subr.mxu0 0.0
        %375 = vmatpush1.msra.mxu0 0.0
        %376 = vmatprep.subr.mxu0 0.0
        %377 = vmatpush1.msra.mxu0 0.0
        %378 = vmatprep.subr.mxu0 0.0
        %379 = vmatpush1.msra.mxu0 0.0
        %380 = vmatprep.subr.mxu0 0.0
        %381 = vmatpush1.msra.mxu0 0.0
        %382 = vmatprep.subr.mxu0 0.0
        %383 = vmatpush1.msra.mxu0 0.0
        %384 = vmatprep.subr.mxu0 0.0
        %385 = vmatpush1.msra.mxu0 0.0
        %386 = vmatprep.subr.mxu0 0.0
        %387 = vmatpush1.msra.mxu0 0.0
        %388 = vmatprep.subr.mxu0 0.0
        %389 = vmatpush1.msra.mxu0 0.0
        %390 = vmatprep.subr.mxu0 0.0
        %391 = vmatpush1.msra.mxu0 0.0
        %392 = vmatprep.subr.mxu0 0.0
        %393 = vmatpush1.msra.mxu0 0.0
        %394 = vmatprep.subr.mxu0 0.0
        %395 = vmatpush1.msra.mxu0 0.0
        %396 = vmatprep.mubr.f32.mxu0 0.0
        %397 = vmatmul.mubr.f32.gmra.mrb[0].mxu0 %v306
        %v398 = vpop.f32.mrb[0].mxu0
        %v399 = vadd.f32 0.0, %v398
        %v400 = vpop.f32.mrb[0].mxu0
        %v401 = vadd.f32 0.0, %v400
        %402 = vmatprep.mubr.f32.mxu0 0.0
        %403 = vmatmul.mubr.f32.gmra.mrb[0].mxu0 %v309
        %v404 = vpop.f32.mrb[0].mxu0
        %v405 = vadd.f32 0.0, %v404
        %v406 = vpop.f32.mrb[0].mxu0
        %v407 = vadd.f32 0.0, %v406
        %408 = vmatprep.mubr.f32.mxu0 0.0
        %409 = vmatmul.mubr.f32.gmra.mrb[0].mxu0 %v312
        %v410 = vpop.f32.mrb[0].mxu0
        %v411 = vadd.f32 0.0, %v410
        %v412 = vpop.f32.mrb[0].mxu0
        %v413 = vadd.f32 0.0, %v412
        %414 = vmatprep.mubr.f32.mxu0 0.0
        %415 = vmatmul.mubr.f32.gmra.mrb[0].mxu0 %v315
        %v416 = vpop.f32.mrb[0].mxu0
        %v417 = vadd.f32 0.0, %v416
        %v418 = vpop.f32.mrb[0].mxu0
        %v419 = vadd.f32 0.0, %v418
        %420 = vmatprep.mubr.f32.mxu0 0.0
        %421 = vmatmul.mubr.f32.gmra.mrb[0].mxu0 %v318
        %v422 = vpop.f32.mrb[0].mxu0
        %v423 = vadd.f32 0.0, %v422
        %v424 = vpop.f32.mrb[0].mxu0
        %v425 = vadd.f32 0.0, %v424
        %426 = vmatprep.mubr.f32.mxu0 0.0
        %427 = vmatmul.mubr.f32.gmra.mrb[0].mxu0 %v321
        %v428 = vpop.f32.mrb[0].mxu0
        %v429 = vadd.f32 0.0, %v428
        %v430 = vpop.f32.mrb[0].mxu0
        %v431 = vadd.f32 0.0, %v430
        %432 = vmatprep.mubr.f32.mxu0 0.0
        %433 = vmatmul.mubr.f32.gmra.mrb[0].mxu0 %v324
        %v434 = vpop.f32.mrb[0].mxu0
        %v435 = vadd.f32 0.0, %v434
        %v436 = vpop.f32.mrb[0].mxu0
        %v437 = vadd.f32 0.0, %v436
        %438 = vmatprep.mubr.f32.mxu0 0.0
        %439 = vmatmul.mubr.f32.gmra.mrb[0].mxu0 %v327
        %v440 = vpop.f32.mrb[0].mxu0
        %v441 = vadd.f32 0.0, %v440
        %v442 = vpop.f32.mrb[0].mxu0
        %v443 = vadd.f32 0.0, %v442
        %444 = vmatprep.mubr.f32.mxu0 0.0
        %445 = vmatmul.mubr.f32.gmra.mrb[0].mxu0 %v330
        %v446 = vpop.f32.mrb[0].mxu0
        %v447 = vadd.f32 0.0, %v446
        %v448 = vpop.f32.mrb[0].mxu0
        %v449 = vadd.f32 0.0, %v448
        %450 = vdwg.mxu0
        %451 = vmatprep.subr.mxu0 %v282
        %452 = vmatpush1.msra.mxu0 %v281
        %453 = vmatprep.subr.mxu0 0.0
        %454 = vmatpush1.msra.mxu0 0.0
        %455 = vmatprep.subr.mxu0 0.0
        %456 = vmatpush1.msra.mxu0 0.0
        %457 = vmatprep.subr.mxu0 0.0
        %458 = vmatpush1.msra.mxu0 0.0
        %459 = vmatprep.subr.mxu0 0.0
        %460 = vmatpush1.msra.mxu0 0.0
        %461 = vmatprep.subr.mxu0 0.0
        %462 = vmatpush1.msra.mxu0 0.0
        %463 = vmatprep.subr.mxu0 0.0
        %464 = vmatpush1.msra.mxu0 0.0
        %465 = vmatprep.subr.mxu0 0.0
        %466 = vmatpush1.msra.mxu0 0.0
        %467 = vmatprep.subr.mxu0 0.0
        %468 = vmatpush1.msra.mxu0 0.0
        %469 = vmatprep.subr.mxu0 0.0
        %470 = vmatpush1.msra.mxu0 0.0
        %471 = vmatprep.subr.mxu0 0.0
        %472 = vmatpush1.msra.mxu0 0.0
        %473 = vmatprep.subr.mxu0 0.0
        %474 = vmatpush1.msra.mxu0 0.0
        %475 = vmatprep.subr.mxu0 0.0
        %476 = vmatpush1.msra.mxu0 0.0
        %477 = vmatprep.subr.mxu0 0.0
        %478 = vmatpush1.msra.mxu0 0.0
        %479 = vmatprep.subr.mxu0 0.0
        %480 = vmatpush1.msra.mxu0 0.0
        %481 = vmatprep.subr.mxu0 0.0
        %482 = vmatpush1.msra.mxu0 0.0
        %483 = vmatprep.subr.mxu0 0.0
        %484 = vmatpush1.msra.mxu0 0.0
        %485 = vmatprep.subr.mxu0 0.0
        %486 = vmatpush1.msra.mxu0 0.0
        %487 = vmatprep.subr.mxu0 0.0
        %488 = vmatpush1.msra.mxu0 0.0
        %489 = vmatprep.subr.mxu0 0.0
        %490 = vmatpush1.msra.mxu0 0.0
        %491 = vmatprep.subr.mxu0 0.0
        %492 = vmatpush1.msra.mxu0 0.0
        %493 = vmatprep.subr.mxu0 0.0
        %494 = vmatpush1.msra.mxu0 0.0
        %495 = vmatprep.subr.mxu0 0.0
        %496 = vmatpush1.msra.mxu0 0.0
        %497 = vmatprep.subr.mxu0 0.0
        %498 = vmatpush1.msra.mxu0 0.0
        %499 = vmatprep.subr.mxu0 0.0
        %500 = vmatpush1.msra.mxu0 0.0
        %501 = vmatprep.subr.mxu0 0.0
        %502 = vmatpush1.msra.mxu0 0.0
        %503 = vmatprep.subr.mxu0 0.0
        %504 = vmatpush1.msra.mxu0 0.0
        %505 = vmatprep.subr.mxu0 0.0
        %506 = vmatpush1.msra.mxu0 0.0
        %507 = vmatprep.subr.mxu0 0.0
        %508 = vmatpush1.msra.mxu0 0.0
        %509 = vmatprep.subr.mxu0 0.0
        %510 = vmatpush1.msra.mxu0 0.0
        %511 = vmatprep.subr.mxu0 0.0
        %512 = vmatpush1.msra.mxu0 0.0
        %513 = vmatprep.subr.mxu0 0.0
        %514 = vmatpush1.msra.mxu0 0.0
        %515 = vmatprep.mubr.f32.mxu0 0.0
        %516 = vmatmul.mubr.f32.gmra.mrb[0].mxu0 %v306
        %v517 = vpop.f32.mrb[0].mxu0
        %v518 = vadd.f32 0.0, %v517
        %v519 = vpop.f32.mrb[0].mxu0
        %v520 = vadd.f32 0.0, %v519
        %521 = vmatprep.mubr.f32.mxu0 0.0
        %522 = vmatmul.mubr.f32.gmra.mrb[0].mxu0 %v309
        %v523 = vpop.f32.mrb[0].mxu0
        %v524 = vadd.f32 0.0, %v523
        %v525 = vpop.f32.mrb[0].mxu0
        %v526 = vadd.f32 0.0, %v525
        %527 = vmatprep.mubr.f32.mxu0 0.0
        %528 = vmatmul.mubr.f32.gmra.mrb[0].mxu0 %v312
        %v529 = vpop.f32.mrb[0].mxu0
        %v530 = vadd.f32 0.0, %v529
        %v531 = vpop.f32.mrb[0].mxu0
        %v532 = vadd.f32 0.0, %v531
        %533 = vmatprep.mubr.f32.mxu0 0.0
        %534 = vmatmul.mubr.f32.gmra.mrb[0].mxu0 %v315
        %v535 = vpop.f32.mrb[0].mxu0
        %v536 = vadd.f32 0.0, %v535
        %v537 = vpop.f32.mrb[0].mxu0
        %v538 = vadd.f32 0.0, %v537
        %539 = vmatprep.mubr.f32.mxu0 0.0
        %540 = vmatmul.mubr.f32.gmra.mrb[0].mxu0 %v318
        %v541 = vpop.f32.mrb[0].mxu0
        %v542 = vadd.f32 0.0, %v541
        %v543 = vpop.f32.mrb[0].mxu0
        %v544 = vadd.f32 0.0, %v543
        %545 = vmatprep.mubr.f32.mxu0 0.0
        %546 = vmatmul.mubr.f32.gmra.mrb[0].mxu0 %v321
        %v547 = vpop.f32.mrb[0].mxu0
        %v548 = vadd.f32 0.0, %v547
        %v549 = vpop.f32.mrb[0].mxu0
        %v550 = vadd.f32 0.0, %v549
        %551 = vmatprep.mubr.f32.mxu0 0.0
        %552 = vmatmul.mubr.f32.gmra.mrb[0].mxu0 %v324
        %v553 = vpop.f32.mrb[0].mxu0
        %v554 = vadd.f32 0.0, %v553
        %v555 = vpop.f32.mrb[0].mxu0
        %v556 = vadd.f32 0.0, %v555
        %557 = vmatprep.mubr.f32.mxu0 0.0
        %558 = vmatmul.mubr.f32.gmra.mrb[0].mxu0 %v327
        %v559 = vpop.f32.mrb[0].mxu0
        %v560 = vadd.f32 0.0, %v559
        %v561 = vpop.f32.mrb[0].mxu0
        %v562 = vadd.f32 0.0, %v561
        %563 = vmatprep.mubr.f32.mxu0 0.0
        %564 = vmatmul.mubr.f32.gmra.mrb[0].mxu0 %v330
        %v565 = vpop.f32.mrb[0].mxu0
        %v566 = vadd.f32 0.0, %v565
        %v567 = vpop.f32.mrb[0].mxu0
        %v568 = vadd.f32 0.0, %v567
        %569 = vdwg.mxu0
        %570 = vmatprep.subr.mxu0 %v284
        %571 = vmatpush1.msra.mxu0 %v283
        %572 = vmatprep.subr.mxu0 0.0
        %573 = vmatpush1.msra.mxu0 0.0
        %574 = vmatprep.subr.mxu0 0.0
        %575 = vmatpush1.msra.mxu0 0.0
        %576 = vmatprep.subr.mxu0 0.0
        %577 = vmatpush1.msra.mxu0 0.0
        %578 = vmatprep.subr.mxu0 0.0
        %579 = vmatpush1.msra.mxu0 0.0
        %580 = vmatprep.subr.mxu0 0.0
        %581 = vmatpush1.msra.mxu0 0.0
        %582 = vmatprep.subr.mxu0 0.0
        %583 = vmatpush1.msra.mxu0 0.0
        %584 = vmatprep.subr.mxu0 0.0
        %585 = vmatpush1.msra.mxu0 0.0
        %586 = vmatprep.subr.mxu0 0.0
        %587 = vmatpush1.msra.mxu0 0.0
        %588 = vmatprep.subr.mxu0 0.0
        %589 = vmatpush1.msra.mxu0 0.0
        %590 = vmatprep.subr.mxu0 0.0
        %591 = vmatpush1.msra.mxu0 0.0
        %592 = vmatprep.subr.mxu0 0.0
        %593 = vmatpush1.msra.mxu0 0.0
        %594 = vmatprep.subr.mxu0 0.0
        %595 = vmatpush1.msra.mxu0 0.0
        %596 = vmatprep.subr.mxu0 0.0
        %597 = vmatpush1.msra.mxu0 0.0
        %598 = vmatprep.subr.mxu0 0.0
        %599 = vmatpush1.msra.mxu0 0.0
        %600 = vmatprep.subr.mxu0 0.0
        %601 = vmatpush1.msra.mxu0 0.0
        %602 = vmatprep.subr.mxu0 0.0
        %603 = vmatpush1.msra.mxu0 0.0
        %604 = vmatprep.subr.mxu0 0.0
        %605 = vmatpush1.msra.mxu0 0.0
        %606 = vmatprep.subr.mxu0 0.0
        %607 = vmatpush1.msra.mxu0 0.0
        %608 = vmatprep.subr.mxu0 0.0
        %609 = vmatpush1.msra.mxu0 0.0
        %610 = vmatprep.subr.mxu0 0.0
        %611 = vmatpush1.msra.mxu0 0.0
        %612 = vmatprep.subr.mxu0 0.0
        %613 = vmatpush1.msra.mxu0 0.0
        %614 = vmatprep.subr.mxu0 0.0
        %615 = vmatpush1.msra.mxu0 0.0
        %616 = vmatprep.subr.mxu0 0.0
        %617 = vmatpush1.msra.mxu0 0.0
        %618 = vmatprep.subr.mxu0 0.0
        %619 = vmatpush1.msra.mxu0 0.0
        %620 = vmatprep.subr.mxu0 0.0
        %621 = vmatpush1.msra.mxu0 0.0
        %622 = vmatprep.subr.mxu0 0.0
        %623 = vmatpush1.msra.mxu0 0.0
        %624 = vmatprep.subr.mxu0 0.0
        %625 = vmatpush1.msra.mxu0 0.0
        %626 = vmatprep.subr.mxu0 0.0
        %627 = vmatpush1.msra.mxu0 0.0
        %628 = vmatprep.subr.mxu0 0.0
        %629 = vmatpush1.msra.mxu0 0.0
        %630 = vmatprep.subr.mxu0 0.0
        %631 = vmatpush1.msra.mxu0 0.0
        %632 = vmatprep.subr.mxu0 0.0
        %633 = vmatpush1.msra.mxu0 0.0
        %634 = vmatprep.mubr.f32.mxu0 0.0
        %635 = vmatmul.mubr.f32.gmra.mrb[0].mxu0 %v306
        %v636 = vpop.f32.mrb[0].mxu0
        %v637 = vadd.f32 0.0, %v636
        %v638 = vpop.f32.mrb[0].mxu0
        %v639 = vadd.f32 0.0, %v638
        %640 = vmatprep.mubr.f32.mxu0 0.0
        %641 = vmatmul.mubr.f32.gmra.mrb[0].mxu0 %v309
        %v642 = vpop.f32.mrb[0].mxu0
        %v643 = vadd.f32 0.0, %v642
        %v644 = vpop.f32.mrb[0].mxu0
        %v645 = vadd.f32 0.0, %v644
        %646 = vmatprep.mubr.f32.mxu0 0.0
        %647 = vmatmul.mubr.f32.gmra.mrb[0].mxu0 %v312
        %v648 = vpop.f32.mrb[0].mxu0
        %v649 = vadd.f32 0.0, %v648
        %v650 = vpop.f32.mrb[0].mxu0
        %v651 = vadd.f32 0.0, %v650
        %652 = vmatprep.mubr.f32.mxu0 0.0
        %653 = vmatmul.mubr.f32.gmra.mrb[0].mxu0 %v315
        %v654 = vpop.f32.mrb[0].mxu0
        %v655 = vadd.f32 0.0, %v654
        %v656 = vpop.f32.mrb[0].mxu0
        %v657 = vadd.f32 0.0, %v656
        %658 = vmatprep.mubr.f32.mxu0 0.0
        %659 = vmatmul.mubr.f32.gmra.mrb[0].mxu0 %v318
        %v660 = vpop.f32.mrb[0].mxu0
        %v661 = vadd.f32 0.0, %v660
        %v662 = vpop.f32.mrb[0].mxu0
        %v663 = vadd.f32 0.0, %v662
        %664 = vmatprep.mubr.f32.mxu0 0.0
        %665 = vmatmul.mubr.f32.gmra.mrb[0].mxu0 %v321
        %v666 = vpop.f32.mrb[0].mxu0
        %v667 = vadd.f32 0.0, %v666
        %v668 = vpop.f32.mrb[0].mxu0
        %v669 = vadd.f32 0.0, %v668
        %670 = vmatprep.mubr.f32.mxu0 0.0
        %671 = vmatmul.mubr.f32.gmra.mrb[0].mxu0 %v324
        %v672 = vpop.f32.mrb[0].mxu0
        %v673 = vadd.f32 0.0, %v672
        %v674 = vpop.f32.mrb[0].mxu0
        %v675 = vadd.f32 0.0, %v674
        %676 = vmatprep.mubr.f32.mxu0 0.0
        %677 = vmatmul.mubr.f32.gmra.mrb[0].mxu0 %v327
        %v678 = vpop.f32.mrb[0].mxu0
        %v679 = vadd.f32 0.0, %v678
        %v680 = vpop.f32.mrb[0].mxu0
        %v681 = vadd.f32 0.0, %v680
        %682 = vmatprep.mubr.f32.mxu0 0.0
        %683 = vmatmul.mubr.f32.gmra.mrb[0].mxu0 %v330
        %v684 = vpop.f32.mrb[0].mxu0
        %v685 = vadd.f32 0.0, %v684
        %v686 = vpop.f32.mrb[0].mxu0
        %v687 = vadd.f32 0.0, %v686
        %688 = vdwg.mxu0
        %689 = vmatprep.subr.mxu0 %v286
        %690 = vmatpush1.msra.mxu0 %v285
        %691 = vmatprep.subr.mxu0 0.0
        %692 = vmatpush1.msra.mxu0 0.0
        %693 = vmatprep.subr.mxu0 0.0
        %694 = vmatpush1.msra.mxu0 0.0
        %695 = vmatprep.subr.mxu0 0.0
        %696 = vmatpush1.msra.mxu0 0.0
        %697 = vmatprep.subr.mxu0 0.0
        %698 = vmatpush1.msra.mxu0 0.0
        %699 = vmatprep.subr.mxu0 0.0
        %700 = vmatpush1.msra.mxu0 0.0
        %701 = vmatprep.subr.mxu0 0.0
        %702 = vmatpush1.msra.mxu0 0.0
        %703 = vmatprep.subr.mxu0 0.0
        %704 = vmatpush1.msra.mxu0 0.0
        %705 = vmatprep.subr.mxu0 0.0
        %706 = vmatpush1.msra.mxu0 0.0
        %707 = vmatprep.subr.mxu0 0.0
        %708 = vmatpush1.msra.mxu0 0.0
        %709 = vmatprep.subr.mxu0 0.0
        %710 = vmatpush1.msra.mxu0 0.0
        %711 = vmatprep.subr.mxu0 0.0
        %712 = vmatpush1.msra.mxu0 0.0
        %713 = vmatprep.subr.mxu0 0.0
        %714 = vmatpush1.msra.mxu0 0.0
        %715 = vmatprep.subr.mxu0 0.0
        %716 = vmatpush1.msra.mxu0 0.0
        %717 = vmatprep.subr.mxu0 0.0
        %718 = vmatpush1.msra.mxu0 0.0
        %719 = vmatprep.subr.mxu0 0.0
        %720 = vmatpush1.msra.mxu0 0.0
        %721 = vmatprep.subr.mxu0 0.0
        %722 = vmatpush1.msra.mxu0 0.0
        %723 = vmatprep.subr.mxu0 0.0
        %724 = vmatpush1.msra.mxu0 0.0
        %725 = vmatprep.subr.mxu0 0.0
        %726 = vmatpush1.msra.mxu0 0.0
        %727 = vmatprep.subr.mxu0 0.0
        %728 = vmatpush1.msra.mxu0 0.0
        %729 = vmatprep.subr.mxu0 0.0
        %730 = vmatpush1.msra.mxu0 0.0
        %731 = vmatprep.subr.mxu0 0.0
        %732 = vmatpush1.msra.mxu0 0.0
        %733 = vmatprep.subr.mxu0 0.0
        %734 = vmatpush1.msra.mxu0 0.0
        %735 = vmatprep.subr.mxu0 0.0
        %736 = vmatpush1.msra.mxu0 0.0
        %737 = vmatprep.subr.mxu0 0.0
        %738 = vmatpush1.msra.mxu0 0.0
        %739 = vmatprep.subr.mxu0 0.0
        %740 = vmatpush1.msra.mxu0 0.0
        %741 = vmatprep.subr.mxu0 0.0
        %742 = vmatpush1.msra.mxu0 0.0
        %743 = vmatprep.subr.mxu0 0.0
        %744 = vmatpush1.msra.mxu0 0.0
        %745 = vmatprep.subr.mxu0 0.0
        %746 = vmatpush1.msra.mxu0 0.0
        %747 = vmatprep.subr.mxu0 0.0
        %748 = vmatpush1.msra.mxu0 0.0
        %749 = vmatprep.subr.mxu0 0.0
        %750 = vmatpush1.msra.mxu0 0.0
        %751 = vmatprep.subr.mxu0 0.0
        %752 = vmatpush1.msra.mxu0 0.0
        %753 = vmatprep.mubr.f32.mxu0 0.0
        %754 = vmatmul.mubr.f32.gmra.mrb[0].mxu0 %v306
        %v755 = vpop.f32.mrb[0].mxu0
        %v756 = vadd.f32 0.0, %v755
        %v757 = vpop.f32.mrb[0].mxu0
        %v758 = vadd.f32 0.0, %v757
        %759 = vmatprep.mubr.f32.mxu0 0.0
        %760 = vmatmul.mubr.f32.gmra.mrb[0].mxu0 %v309
        %v761 = vpop.f32.mrb[0].mxu0
        %v762 = vadd.f32 0.0, %v761
        %v763 = vpop.f32.mrb[0].mxu0
        %v764 = vadd.f32 0.0, %v763
        %765 = vmatprep.mubr.f32.mxu0 0.0
        %766 = vmatmul.mubr.f32.gmra.mrb[0].mxu0 %v312
        %v767 = vpop.f32.mrb[0].mxu0
        %v768 = vadd.f32 0.0, %v767
        %v769 = vpop.f32.mrb[0].mxu0
        %v770 = vadd.f32 0.0, %v769
        %771 = vmatprep.mubr.f32.mxu0 0.0
        %772 = vmatmul.mubr.f32.gmra.mrb[0].mxu0 %v315
        %v773 = vpop.f32.mrb[0].mxu0
        %v774 = vadd.f32 0.0, %v773
        %v775 = vpop.f32.mrb[0].mxu0
        %v776 = vadd.f32 0.0, %v775
        %777 = vmatprep.mubr.f32.mxu0 0.0
        %778 = vmatmul.mubr.f32.gmra.mrb[0].mxu0 %v318
        %v779 = vpop.f32.mrb[0].mxu0
        %v780 = vadd.f32 0.0, %v779
        %v781 = vpop.f32.mrb[0].mxu0
        %v782 = vadd.f32 0.0, %v781
        %783 = vmatprep.mubr.f32.mxu0 0.0
        %784 = vmatmul.mubr.f32.gmra.mrb[0].mxu0 %v321
        %v785 = vpop.f32.mrb[0].mxu0
        %v786 = vadd.f32 0.0, %v785
        %v787 = vpop.f32.mrb[0].mxu0
        %v788 = vadd.f32 0.0, %v787
        %789 = vmatprep.mubr.f32.mxu0 0.0
        %790 = vmatmul.mubr.f32.gmra.mrb[0].mxu0 %v324
        %v791 = vpop.f32.mrb[0].mxu0
        %v792 = vadd.f32 0.0, %v791
        %v793 = vpop.f32.mrb[0].mxu0
        %v794 = vadd.f32 0.0, %v793
        %795 = vmatprep.mubr.f32.mxu0 0.0
        %796 = vmatmul.mubr.f32.gmra.mrb[0].mxu0 %v327
        %v797 = vpop.f32.mrb[0].mxu0
        %v798 = vadd.f32 0.0, %v797
        %v799 = vpop.f32.mrb[0].mxu0
        %v800 = vadd.f32 0.0, %v799
        %801 = vmatprep.mubr.f32.mxu0 0.0
        %802 = vmatmul.mubr.f32.gmra.mrb[0].mxu0 %v330
        %v803 = vpop.f32.mrb[0].mxu0
        %v804 = vadd.f32 0.0, %v803
        %v805 = vpop.f32.mrb[0].mxu0
        %v806 = vadd.f32 0.0, %v805
        %807 = vdwg.mxu0
        %808 = vmatprep.subr.mxu0 %v288
        %809 = vmatpush1.msra.mxu0 %v287
        %810 = vmatprep.subr.mxu0 0.0
        %811 = vmatpush1.msra.mxu0 0.0
        %812 = vmatprep.subr.mxu0 0.0
        %813 = vmatpush1.msra.mxu0 0.0
        %814 = vmatprep.subr.mxu0 0.0
        %815 = vmatpush1.msra.mxu0 0.0
        %816 = vmatprep.subr.mxu0 0.0
        %817 = vmatpush1.msra.mxu0 0.0
        %818 = vmatprep.subr.mxu0 0.0
        %819 = vmatpush1.msra.mxu0 0.0
        %820 = vmatprep.subr.mxu0 0.0
        %821 = vmatpush1.msra.mxu0 0.0
        %822 = vmatprep.subr.mxu0 0.0
        %823 = vmatpush1.msra.mxu0 0.0
        %824 = vmatprep.subr.mxu0 0.0
        %825 = vmatpush1.msra.mxu0 0.0
        %826 = vmatprep.subr.mxu0 0.0
        %827 = vmatpush1.msra.mxu0 0.0
        %828 = vmatprep.subr.mxu0 0.0
        %829 = vmatpush1.msra.mxu0 0.0
        %830 = vmatprep.subr.mxu0 0.0
        %831 = vmatpush1.msra.mxu0 0.0
        %832 = vmatprep.subr.mxu0 0.0
        %833 = vmatpush1.msra.mxu0 0.0
        %834 = vmatprep.subr.mxu0 0.0
        %835 = vmatpush1.msra.mxu0 0.0
        %836 = vmatprep.subr.mxu0 0.0
        %837 = vmatpush1.msra.mxu0 0.0
        %838 = vmatprep.subr.mxu0 0.0
        %839 = vmatpush1.msra.mxu0 0.0
        %840 = vmatprep.subr.mxu0 0.0
        %841 = vmatpush1.msra.mxu0 0.0
        %842 = vmatprep.subr.mxu0 0.0
        %843 = vmatpush1.msra.mxu0 0.0
        %844 = vmatprep.subr.mxu0 0.0
        %845 = vmatpush1.msra.mxu0 0.0
        %846 = vmatprep.subr.mxu0 0.0
        %847 = vmatpush1.msra.mxu0 0.0
        %848 = vmatprep.subr.mxu0 0.0
        %849 = vmatpush1.msra.mxu0 0.0
        %850 = vmatprep.subr.mxu0 0.0
        %851 = vmatpush1.msra.mxu0 0.0
        %852 = vmatprep.subr.mxu0 0.0
        %853 = vmatpush1.msra.mxu0 0.0
        %854 = vmatprep.subr.mxu0 0.0
        %855 = vmatpush1.msra.mxu0 0.0
        %856 = vmatprep.subr.mxu0 0.0
        %857 = vmatpush1.msra.mxu0 0.0
        %858 = vmatprep.subr.mxu0 0.0
        %859 = vmatpush1.msra.mxu0 0.0
        %860 = vmatprep.subr.mxu0 0.0
        %861 = vmatpush1.msra.mxu0 0.0
        %862 = vmatprep.subr.mxu0 0.0
        %863 = vmatpush1.msra.mxu0 0.0
        %864 = vmatprep.subr.mxu0 0.0
        %865 = vmatpush1.msra.mxu0 0.0
        %866 = vmatprep.subr.mxu0 0.0
        %867 = vmatpush1.msra.mxu0 0.0
        %868 = vmatprep.subr.mxu0 0.0
        %869 = vmatpush1.msra.mxu0 0.0
        %870 = vmatprep.subr.mxu0 0.0
        %871 = vmatpush1.msra.mxu0 0.0
        %872 = vmatprep.mubr.f32.mxu0 0.0
        %873 = vmatmul.mubr.f32.gmra.mrb[0].mxu0 %v306
        %v874 = vpop.f32.mrb[0].mxu0
        %v875 = vadd.f32 0.0, %v874
        %v876 = vpop.f32.mrb[0].mxu0
        %v877 = vadd.f32 0.0, %v876
        %878 = vmatprep.mubr.f32.mxu0 0.0
        %879 = vmatmul.mubr.f32.gmra.mrb[0].mxu0 %v309
        %v880 = vpop.f32.mrb[0].mxu0
        %v881 = vadd.f32 0.0, %v880
        %v882 = vpop.f32.mrb[0].mxu0
        %v883 = vadd.f32 0.0, %v882
        %884 = vmatprep.mubr.f32.mxu0 0.0
        %885 = vmatmul.mubr.f32.gmra.mrb[0].mxu0 %v312
        %v886 = vpop.f32.mrb[0].mxu0
        %v887 = vadd.f32 0.0, %v886
        %v888 = vpop.f32.mrb[0].mxu0
        %v889 = vadd.f32 0.0, %v888
        %890 = vmatprep.mubr.f32.mxu0 0.0
        %891 = vmatmul.mubr.f32.gmra.mrb[0].mxu0 %v315
        %v892 = vpop.f32.mrb[0].mxu0
        %v893 = vadd.f32 0.0, %v892
        %v894 = vpop.f32.mrb[0].mxu0
        %v895 = vadd.f32 0.0, %v894
        %896 = vmatprep.mubr.f32.mxu0 0.0
        %897 = vmatmul.mubr.f32.gmra.mrb[0].mxu0 %v318
        %v898 = vpop.f32.mrb[0].mxu0
        %v899 = vadd.f32 0.0, %v898
        %v900 = vpop.f32.mrb[0].mxu0
        %v901 = vadd.f32 0.0, %v900
        %902 = vmatprep.mubr.f32.mxu0 0.0
        %903 = vmatmul.mubr.f32.gmra.mrb[0].mxu0 %v321
        %v904 = vpop.f32.mrb[0].mxu0
        %v905 = vadd.f32 0.0, %v904
        %v906 = vpop.f32.mrb[0].mxu0
        %v907 = vadd.f32 0.0, %v906
        %908 = vmatprep.mubr.f32.mxu0 0.0
        %909 = vmatmul.mubr.f32.gmra.mrb[0].mxu0 %v324
        %v910 = vpop.f32.mrb[0].mxu0
        %v911 = vadd.f32 0.0, %v910
        %v912 = vpop.f32.mrb[0].mxu0
        %v913 = vadd.f32 0.0, %v912
        %914 = vmatprep.mubr.f32.mxu0 0.0
        %915 = vmatmul.mubr.f32.gmra.mrb[0].mxu0 %v327
        %v916 = vpop.f32.mrb[0].mxu0
        %v917 = vadd.f32 0.0, %v916
        %v918 = vpop.f32.mrb[0].mxu0
        %v919 = vadd.f32 0.0, %v918
        %920 = vmatprep.mubr.f32.mxu0 0.0
        %921 = vmatmul.mubr.f32.gmra.mrb[0].mxu0 %v330
        %v922 = vpop.f32.mrb[0].mxu0
        %v923 = vadd.f32 0.0, %v922
        %v924 = vpop.f32.mrb[0].mxu0
        %v925 = vadd.f32 0.0, %v924
        %926 = vdwg.mxu0
        %927 = vmatprep.subr.mxu0 %v290
        %928 = vmatpush1.msra.mxu0 %v289
        %929 = vmatprep.subr.mxu0 0.0
        %930 = vmatpush1.msra.mxu0 0.0
        %931 = vmatprep.subr.mxu0 0.0
        %932 = vmatpush1.msra.mxu0 0.0
        %933 = vmatprep.subr.mxu0 0.0
        %934 = vmatpush1.msra.mxu0 0.0
        %935 = vmatprep.subr.mxu0 0.0
        %936 = vmatpush1.msra.mxu0 0.0
        %937 = vmatprep.subr.mxu0 0.0
        %938 = vmatpush1.msra.mxu0 0.0
        %939 = vmatprep.subr.mxu0 0.0
        %940 = vmatpush1.msra.mxu0 0.0
        %941 = vmatprep.subr.mxu0 0.0
        %942 = vmatpush1.msra.mxu0 0.0
        %943 = vmatprep.subr.mxu0 0.0
        %944 = vmatpush1.msra.mxu0 0.0
        %945 = vmatprep.subr.mxu0 0.0
        %946 = vmatpush1.msra.mxu0 0.0
        %947 = vmatprep.subr.mxu0 0.0
        %948 = vmatpush1.msra.mxu0 0.0
        %949 = vmatprep.subr.mxu0 0.0
        %950 = vmatpush1.msra.mxu0 0.0
        %951 = vmatprep.subr.mxu0 0.0
        %952 = vmatpush1.msra.mxu0 0.0
        %953 = vmatprep.subr.mxu0 0.0
        %954 = vmatpush1.msra.mxu0 0.0
        %955 = vmatprep.subr.mxu0 0.0
        %956 = vmatpush1.msra.mxu0 0.0
        %957 = vmatprep.subr.mxu0 0.0
        %958 = vmatpush1.msra.mxu0 0.0
        %959 = vmatprep.subr.mxu0 0.0
        %960 = vmatpush1.msra.mxu0 0.0
        %961 = vmatprep.subr.mxu0 0.0
        %962 = vmatpush1.msra.mxu0 0.0
        %963 = vmatprep.subr.mxu0 0.0
        %964 = vmatpush1.msra.mxu0 0.0
        %965 = vmatprep.subr.mxu0 0.0
        %966 = vmatpush1.msra.mxu0 0.0
        %967 = vmatprep.subr.mxu0 0.0
        %968 = vmatpush1.msra.mxu0 0.0
        %969 = vmatprep.subr.mxu0 0.0
        %970 = vmatpush1.msra.mxu0 0.0
        %971 = vmatprep.subr.mxu0 0.0
        %972 = vmatpush1.msra.mxu0 0.0
        %973 = vmatprep.subr.mxu0 0.0
        %974 = vmatpush1.msra.mxu0 0.0
        %975 = vmatprep.subr.mxu0 0.0
        %976 = vmatpush1.msra.mxu0 0.0
        %977 = vmatprep.subr.mxu0 0.0
        %978 = vmatpush1.msra.mxu0 0.0
        %979 = vmatprep.subr.mxu0 0.0
        %980 = vmatpush1.msra.mxu0 0.0
        %981 = vmatprep.subr.mxu0 0.0
        %982 = vmatpush1.msra.mxu0 0.0
        %983 = vmatprep.subr.mxu0 0.0
        %984 = vmatpush1.msra.mxu0 0.0
        %985 = vmatprep.subr.mxu0 0.0
        %986 = vmatpush1.msra.mxu0 0.0
        %987 = vmatprep.subr.mxu0 0.0
        %988 = vmatpush1.msra.mxu0 0.0
        %989 = vmatprep.subr.mxu0 0.0
        %990 = vmatpush1.msra.mxu0 0.0
        %991 = vmatprep.mubr.f32.mxu0 0.0
        %992 = vmatmul.mubr.f32.gmra.mrb[0].mxu0 %v306
        %v993 = vpop.f32.mrb[0].mxu0
        %v994 = vadd.f32 0.0, %v993
        %v995 = vpop.f32.mrb[0].mxu0
        %v996 = vadd.f32 0.0, %v995
        %997 = vmatprep.mubr.f32.mxu0 0.0
        %998 = vmatmul.mubr.f32.gmra.mrb[0].mxu0 %v309
        %v999 = vpop.f32.mrb[0].mxu0
        %v1000 = vadd.f32 0.0, %v999
        %v1001 = vpop.f32.mrb[0].mxu0
        %v1002 = vadd.f32 0.0, %v1001
        %1003 = vmatprep.mubr.f32.mxu0 0.0
        %1004 = vmatmul.mubr.f32.gmra.mrb[0].mxu0 %v312
        %v1005 = vpop.f32.mrb[0].mxu0
        %v1006 = vadd.f32 0.0, %v1005
        %v1007 = vpop.f32.mrb[0].mxu0
        %v1008 = vadd.f32 0.0, %v1007
        %1009 = vmatprep.mubr.f32.mxu0 0.0
        %1010 = vmatmul.mubr.f32.gmra.mrb[0].mxu0 %v315
        %v1011 = vpop.f32.mrb[0].mxu0
        %v1012 = vadd.f32 0.0, %v1011
        %v1013 = vpop.f32.mrb[0].mxu0
        %v1014 = vadd.f32 0.0, %v1013
        %1015 = vmatprep.mubr.f32.mxu0 0.0
        %1016 = vmatmul.mubr.f32.gmra.mrb[0].mxu0 %v318
        %v1017 = vpop.f32.mrb[0].mxu0
        %v1018 = vadd.f32 0.0, %v1017
        %v1019 = vpop.f32.mrb[0].mxu0
        %v1020 = vadd.f32 0.0, %v1019
        %1021 = vmatprep.mubr.f32.mxu0 0.0
        %1022 = vmatmul.mubr.f32.gmra.mrb[0].mxu0 %v321
        %v1023 = vpop.f32.mrb[0].mxu0
        %v1024 = vadd.f32 0.0, %v1023
        %v1025 = vpop.f32.mrb[0].mxu0
        %v1026 = vadd.f32 0.0, %v1025
        %1027 = vmatprep.mubr.f32.mxu0 0.0
        %1028 = vmatmul.mubr.f32.gmra.mrb[0].mxu0 %v324
        %v1029 = vpop.f32.mrb[0].mxu0
        %v1030 = vadd.f32 0.0, %v1029
        %v1031 = vpop.f32.mrb[0].mxu0
        %v1032 = vadd.f32 0.0, %v1031
        %1033 = vmatprep.mubr.f32.mxu0 0.0
        %1034 = vmatmul.mubr.f32.gmra.mrb[0].mxu0 %v327
        %v1035 = vpop.f32.mrb[0].mxu0
        %v1036 = vadd.f32 0.0, %v1035
        %v1037 = vpop.f32.mrb[0].mxu0
        %v1038 = vadd.f32 0.0, %v1037
        %1039 = vmatprep.mubr.f32.mxu0 0.0
        %1040 = vmatmul.mubr.f32.gmra.mrb[0].mxu0 %v330
        %v1041 = vpop.f32.mrb[0].mxu0
        %v1042 = vadd.f32 0.0, %v1041
        %v1043 = vpop.f32.mrb[0].mxu0
        %v1044 = vadd.f32 0.0, %v1043
        %1045 = vdwg.mxu0
        %1046 = vmatprep.subr.mxu0 %v292
        %1047 = vmatpush1.msra.mxu0 %v291
        %1048 = vmatprep.subr.mxu0 0.0
        %1049 = vmatpush1.msra.mxu0 0.0
        %1050 = vmatprep.subr.mxu0 0.0
        %1051 = vmatpush1.msra.mxu0 0.0
        %1052 = vmatprep.subr.mxu0 0.0
        %1053 = vmatpush1.msra.mxu0 0.0
        %1054 = vmatprep.subr.mxu0 0.0
        %1055 = vmatpush1.msra.mxu0 0.0
        %1056 = vmatprep.subr.mxu0 0.0
        %1057 = vmatpush1.msra.mxu0 0.0
        %1058 = vmatprep.subr.mxu0 0.0
        %1059 = vmatpush1.msra.mxu0 0.0
        %1060 = vmatprep.subr.mxu0 0.0
        %1061 = vmatpush1.msra.mxu0 0.0
        %1062 = vmatprep.subr.mxu0 0.0
        %1063 = vmatpush1.msra.mxu0 0.0
        %1064 = vmatprep.subr.mxu0 0.0
        %1065 = vmatpush1.msra.mxu0 0.0
        %1066 = vmatprep.subr.mxu0 0.0
        %1067 = vmatpush1.msra.mxu0 0.0
        %1068 = vmatprep.subr.mxu0 0.0
        %1069 = vmatpush1.msra.mxu0 0.0
        %1070 = vmatprep.subr.mxu0 0.0
        %1071 = vmatpush1.msra.mxu0 0.0
        %1072 = vmatprep.subr.mxu0 0.0
        %1073 = vmatpush1.msra.mxu0 0.0
        %1074 = vmatprep.subr.mxu0 0.0
        %1075 = vmatpush1.msra.mxu0 0.0
        %1076 = vmatprep.subr.mxu0 0.0
        %1077 = vmatpush1.msra.mxu0 0.0
        %1078 = vmatprep.subr.mxu0 0.0
        %1079 = vmatpush1.msra.mxu0 0.0
        %1080 = vmatprep.subr.mxu0 0.0
        %1081 = vmatpush1.msra.mxu0 0.0
        %1082 = vmatprep.subr.mxu0 0.0
        %1083 = vmatpush1.msra.mxu0 0.0
        %1084 = vmatprep.subr.mxu0 0.0
        %1085 = vmatpush1.msra.mxu0 0.0
        %1086 = vmatprep.subr.mxu0 0.0
        %1087 = vmatpush1.msra.mxu0 0.0
        %1088 = vmatprep.subr.mxu0 0.0
        %1089 = vmatpush1.msra.mxu0 0.0
        %1090 = vmatprep.subr.mxu0 0.0
        %1091 = vmatpush1.msra.mxu0 0.0
        %1092 = vmatprep.subr.mxu0 0.0
        %1093 = vmatpush1.msra.mxu0 0.0
        %1094 = vmatprep.subr.mxu0 0.0
        %1095 = vmatpush1.msra.mxu0 0.0
        %1096 = vmatprep.subr.mxu0 0.0
        %1097 = vmatpush1.msra.mxu0 0.0
        %1098 = vmatprep.subr.mxu0 0.0
        %1099 = vmatpush1.msra.mxu0 0.0
        %1100 = vmatprep.subr.mxu0 0.0
        %1101 = vmatpush1.msra.mxu0 0.0
        %1102 = vmatprep.subr.mxu0 0.0
        %1103 = vmatpush1.msra.mxu0 0.0
        %1104 = vmatprep.subr.mxu0 0.0
        %1105 = vmatpush1.msra.mxu0 0.0
        %1106 = vmatprep.subr.mxu0 0.0
        %1107 = vmatpush1.msra.mxu0 0.0
        %1108 = vmatprep.subr.mxu0 0.0
        %1109 = vmatpush1.msra.mxu0 0.0
        %1110 = vmatprep.mubr.f32.mxu0 0.0
        %1111 = vmatmul.mubr.f32.gmra.mrb[0].mxu0 %v306
        %v1112 = vpop.f32.mrb[0].mxu0
        %v1113 = vadd.f32 0.0, %v1112
        %v1114 = vpop.f32.mrb[0].mxu0
        %v1115 = vadd.f32 0.0, %v1114
        %1116 = vmatprep.mubr.f32.mxu0 0.0
        %1117 = vmatmul.mubr.f32.gmra.mrb[0].mxu0 %v309
        %v1118 = vpop.f32.mrb[0].mxu0
        %v1119 = vadd.f32 0.0, %v1118
        %v1120 = vpop.f32.mrb[0].mxu0
        %v1121 = vadd.f32 0.0, %v1120
        %1122 = vmatprep.mubr.f32.mxu0 0.0
        %1123 = vmatmul.mubr.f32.gmra.mrb[0].mxu0 %v312
        %v1124 = vpop.f32.mrb[0].mxu0
        %v1125 = vadd.f32 0.0, %v1124
        %v1126 = vpop.f32.mrb[0].mxu0
        %v1127 = vadd.f32 0.0, %v1126
        %1128 = vmatprep.mubr.f32.mxu0 0.0
        %1129 = vmatmul.mubr.f32.gmra.mrb[0].mxu0 %v315
        %v1130 = vpop.f32.mrb[0].mxu0
        %v1131 = vadd.f32 0.0, %v1130
        %v1132 = vpop.f32.mrb[0].mxu0
        %v1133 = vadd.f32 0.0, %v1132
        %1134 = vmatprep.mubr.f32.mxu0 0.0
        %1135 = vmatmul.mubr.f32.gmra.mrb[0].mxu0 %v318
        %v1136 = vpop.f32.mrb[0].mxu0
        %v1137 = vadd.f32 0.0, %v1136
        %v1138 = vpop.f32.mrb[0].mxu0
        %v1139 = vadd.f32 0.0, %v1138
        %1140 = vmatprep.mubr.f32.mxu0 0.0
        %1141 = vmatmul.mubr.f32.gmra.mrb[0].mxu0 %v321
        %v1142 = vpop.f32.mrb[0].mxu0
        %v1143 = vadd.f32 0.0, %v1142
        %v1144 = vpop.f32.mrb[0].mxu0
        %v1145 = vadd.f32 0.0, %v1144
        %1146 = vmatprep.mubr.f32.mxu0 0.0
        %1147 = vmatmul.mubr.f32.gmra.mrb[0].mxu0 %v324
        %v1148 = vpop.f32.mrb[0].mxu0
        %v1149 = vadd.f32 0.0, %v1148
        %v1150 = vpop.f32.mrb[0].mxu0
        %v1151 = vadd.f32 0.0, %v1150
        %1152 = vmatprep.mubr.f32.mxu0 0.0
        %1153 = vmatmul.mubr.f32.gmra.mrb[0].mxu0 %v327
        %v1154 = vpop.f32.mrb[0].mxu0
        %v1155 = vadd.f32 0.0, %v1154
        %v1156 = vpop.f32.mrb[0].mxu0
        %v1157 = vadd.f32 0.0, %v1156
        %1158 = vmatprep.mubr.f32.mxu0 0.0
        %1159 = vmatmul.mubr.f32.gmra.mrb[0].mxu0 %v330
        %v1160 = vpop.f32.mrb[0].mxu0
        %v1161 = vadd.f32 0.0, %v1160
        %v1162 = vpop.f32.mrb[0].mxu0
        %v1163 = vadd.f32 0.0, %v1162
        %1164 = vdwg.mxu0
        %1165 = vmatprep.subr.mxu0 %v294
        %1166 = vmatpush1.msra.mxu0 %v293
        %1167 = vmatprep.subr.mxu0 0.0
        %1168 = vmatpush1.msra.mxu0 0.0
        %1169 = vmatprep.subr.mxu0 0.0
        %1170 = vmatpush1.msra.mxu0 0.0
        %1171 = vmatprep.subr.mxu0 0.0
        %1172 = vmatpush1.msra.mxu0 0.0
        %1173 = vmatprep.subr.mxu0 0.0
        %1174 = vmatpush1.msra.mxu0 0.0
        %1175 = vmatprep.subr.mxu0 0.0
        %1176 = vmatpush1.msra.mxu0 0.0
        %1177 = vmatprep.subr.mxu0 0.0
        %1178 = vmatpush1.msra.mxu0 0.0
        %1179 = vmatprep.subr.mxu0 0.0
        %1180 = vmatpush1.msra.mxu0 0.0
        %1181 = vmatprep.subr.mxu0 0.0
        %1182 = vmatpush1.msra.mxu0 0.0
        %1183 = vmatprep.subr.mxu0 0.0
        %1184 = vmatpush1.msra.mxu0 0.0
        %1185 = vmatprep.subr.mxu0 0.0
        %1186 = vmatpush1.msra.mxu0 0.0
        %1187 = vmatprep.subr.mxu0 0.0
        %1188 = vmatpush1.msra.mxu0 0.0
        %1189 = vmatprep.subr.mxu0 0.0
        %1190 = vmatpush1.msra.mxu0 0.0
        %1191 = vmatprep.subr.mxu0 0.0
        %1192 = vmatpush1.msra.mxu0 0.0
        %1193 = vmatprep.subr.mxu0 0.0
        %1194 = vmatpush1.msra.mxu0 0.0
        %1195 = vmatprep.subr.mxu0 0.0
        %1196 = vmatpush1.msra.mxu0 0.0
        %1197 = vmatprep.subr.mxu0 0.0
        %1198 = vmatpush1.msra.mxu0 0.0
        %1199 = vmatprep.subr.mxu0 0.0
        %1200 = vmatpush1.msra.mxu0 0.0
        %1201 = vmatprep.subr.mxu0 0.0
        %1202 = vmatpush1.msra.mxu0 0.0
        %1203 = vmatprep.subr.mxu0 0.0
        %1204 = vmatpush1.msra.mxu0 0.0
        %1205 = vmatprep.subr.mxu0 0.0
        %1206 = vmatpush1.msra.mxu0 0.0
        %1207 = vmatprep.subr.mxu0 0.0
        %1208 = vmatpush1.msra.mxu0 0.0
        %1209 = vmatprep.subr.mxu0 0.0
        %1210 = vmatpush1.msra.mxu0 0.0
        %1211 = vmatprep.subr.mxu0 0.0
        %1212 = vmatpush1.msra.mxu0 0.0
        %1213 = vmatprep.subr.mxu0 0.0
        %1214 = vmatpush1.msra.mxu0 0.0
        %1215 = vmatprep.subr.mxu0 0.0
        %1216 = vmatpush1.msra.mxu0 0.0
        %1217 = vmatprep.subr.mxu0 0.0
        %1218 = vmatpush1.msra.mxu0 0.0
        %1219 = vmatprep.subr.mxu0 0.0
        %1220 = vmatpush1.msra.mxu0 0.0
        %1221 = vmatprep.subr.mxu0 0.0
        %1222 = vmatpush1.msra.mxu0 0.0
        %1223 = vmatprep.subr.mxu0 0.0
        %1224 = vmatpush1.msra.mxu0 0.0
        %1225 = vmatprep.subr.mxu0 0.0
        %1226 = vmatpush1.msra.mxu0 0.0
        %1227 = vmatprep.subr.mxu0 0.0
        %1228 = vmatpush1.msra.mxu0 0.0
        %1229 = vmatprep.mubr.f32.mxu0 0.0
        %1230 = vmatmul.mubr.f32.gmra.mrb[0].mxu0 %v306
        %v1231 = vpop.f32.mrb[0].mxu0
        %v1232 = vadd.f32 0.0, %v1231
        %v1233 = vpop.f32.mrb[0].mxu0
        %v1234 = vadd.f32 0.0, %v1233
        %1235 = vmatprep.mubr.f32.mxu0 0.0
        %1236 = vmatmul.mubr.f32.gmra.mrb[0].mxu0 %v309
        %v1237 = vpop.f32.mrb[0].mxu0
        %v1238 = vadd.f32 0.0, %v1237
        %v1239 = vpop.f32.mrb[0].mxu0
        %v1240 = vadd.f32 0.0, %v1239
        %1241 = vmatprep.mubr.f32.mxu0 0.0
        %1242 = vmatmul.mubr.f32.gmra.mrb[0].mxu0 %v312
        %v1243 = vpop.f32.mrb[0].mxu0
        %v1244 = vadd.f32 0.0, %v1243
        %v1245 = vpop.f32.mrb[0].mxu0
        %v1246 = vadd.f32 0.0, %v1245
        %1247 = vmatprep.mubr.f32.mxu0 0.0
        %1248 = vmatmul.mubr.f32.gmra.mrb[0].mxu0 %v315
        %v1249 = vpop.f32.mrb[0].mxu0
        %v1250 = vadd.f32 0.0, %v1249
        %v1251 = vpop.f32.mrb[0].mxu0
        %v1252 = vadd.f32 0.0, %v1251
        %1253 = vmatprep.mubr.f32.mxu0 0.0
        %1254 = vmatmul.mubr.f32.gmra.mrb[0].mxu0 %v318
        %v1255 = vpop.f32.mrb[0].mxu0
        %v1256 = vadd.f32 0.0, %v1255
        %v1257 = vpop.f32.mrb[0].mxu0
        %v1258 = vadd.f32 0.0, %v1257
        %1259 = vmatprep.mubr.f32.mxu0 0.0
        %1260 = vmatmul.mubr.f32.gmra.mrb[0].mxu0 %v321
        %v1261 = vpop.f32.mrb[0].mxu0
        %v1262 = vadd.f32 0.0, %v1261
        %v1263 = vpop.f32.mrb[0].mxu0
        %v1264 = vadd.f32 0.0, %v1263
        %1265 = vmatprep.mubr.f32.mxu0 0.0
        %1266 = vmatmul.mubr.f32.gmra.mrb[0].mxu0 %v324
        %v1267 = vpop.f32.mrb[0].mxu0
        %v1268 = vadd.f32 0.0, %v1267
        %v1269 = vpop.f32.mrb[0].mxu0
        %v1270 = vadd.f32 0.0, %v1269
        %1271 = vmatprep.mubr.f32.mxu0 0.0
        %1272 = vmatmul.mubr.f32.gmra.mrb[0].mxu0 %v327
        %v1273 = vpop.f32.mrb[0].mxu0
        %v1274 = vadd.f32 0.0, %v1273
        %v1275 = vpop.f32.mrb[0].mxu0
        %v1276 = vadd.f32 0.0, %v1275
        %1277 = vmatprep.mubr.f32.mxu0 0.0
        %1278 = vmatmul.mubr.f32.gmra.mrb[0].mxu0 %v330
        %v1279 = vpop.f32.mrb[0].mxu0
        %v1280 = vadd.f32 0.0, %v1279
        %v1281 = vpop.f32.mrb[0].mxu0
        %v1282 = vadd.f32 0.0, %v1281
        %1283 = vdwg.mxu0
        %v1284 = vpack.c.bf16 %v405, %v399
        %v1285 = vpack.c.bf16 %v407, %v401
        %v1286 = vpack.c.bf16 %v524, %v518
        %v1287 = vpack.c.bf16 %v526, %v520
        %v1288 = vpack.c.bf16 %v643, %v637
        %v1289 = vpack.c.bf16 %v645, %v639
        %v1290 = vpack.c.bf16 %v762, %v756
        %v1291 = vpack.c.bf16 %v764, %v758
        %v1292 = vpack.c.bf16 %v881, %v875
        %v1293 = vpack.c.bf16 %v883, %v877
        %v1294 = vpack.c.bf16 %v1000, %v994
        %v1295 = vpack.c.bf16 %v1002, %v996
        %v1296 = vpack.c.bf16 %v1119, %v1113
        %v1297 = vpack.c.bf16 %v1121, %v1115
        %v1298 = vpack.c.bf16 %v1238, %v1232
        %v1299 = vpack.c.bf16 %v1240, %v1234
        %v1300 = vpack.c.bf16 %v417, %v411
        %v1301 = vpack.c.bf16 %v419, %v413
        %v1302 = vpack.c.bf16 %v536, %v530
        %v1303 = vpack.c.bf16 %v538, %v532
        %v1304 = vpack.c.bf16 %v655, %v649
        %v1305 = vpack.c.bf16 %v657, %v651
        %v1306 = vpack.c.bf16 %v774, %v768
        %v1307 = vpack.c.bf16 %v776, %v770
        %v1308 = vpack.c.bf16 %v893, %v887
        %v1309 = vpack.c.bf16 %v895, %v889
        %v1310 = vpack.c.bf16 %v1012, %v1006
        %v1311 = vpack.c.bf16 %v1014, %v1008
        %v1312 = vpack.c.bf16 %v1131, %v1125
        %v1313 = vpack.c.bf16 %v1133, %v1127
        %v1314 = vpack.c.bf16 %v1250, %v1244
        %v1315 = vpack.c.bf16 %v1252, %v1246
        %v1316 = vpack.c.bf16 %v429, %v423
        %v1317 = vpack.c.bf16 %v431, %v425
        %v1318 = vpack.c.bf16 %v548, %v542
        %v1319 = vpack.c.bf16 %v550, %v544
        %v1320 = vpack.c.bf16 %v667, %v661
        %v1321 = vpack.c.bf16 %v669, %v663
        %v1322 = vpack.c.bf16 %v786, %v780
        %v1323 = vpack.c.bf16 %v788, %v782
        %v1324 = vpack.c.bf16 %v905, %v899
        %v1325 = vpack.c.bf16 %v907, %v901
        %v1326 = vpack.c.bf16 %v1024, %v1018
        %v1327 = vpack.c.bf16 %v1026, %v1020
        %v1328 = vpack.c.bf16 %v1143, %v1137
        %v1329 = vpack.c.bf16 %v1145, %v1139
        %v1330 = vpack.c.bf16 %v1262, %v1256
        %v1331 = vpack.c.bf16 %v1264, %v1258
        %v1332 = vpack.c.bf16 %v441, %v435
        %v1333 = vpack.c.bf16 %v443, %v437
        %v1334 = vpack.c.bf16 %v560, %v554
        %v1335 = vpack.c.bf16 %v562, %v556
        %v1336 = vpack.c.bf16 %v679, %v673
        %v1337 = vpack.c.bf16 %v681, %v675
        %v1338 = vpack.c.bf16 %v798, %v792
        %v1339 = vpack.c.bf16 %v800, %v794
        %v1340 = vpack.c.bf16 %v917, %v911
        %v1341 = vpack.c.bf16 %v919, %v913
        %v1342 = vpack.c.bf16 %v1036, %v1030
        %v1343 = vpack.c.bf16 %v1038, %v1032
        %v1344 = vpack.c.bf16 %v1155, %v1149
        %v1345 = vpack.c.bf16 %v1157, %v1151
        %v1346 = vpack.c.bf16 %v1274, %v1268
        %v1347 = vpack.c.bf16 %v1276, %v1270
        %v1348 = vpack.c.bf16 %v447, %v447
        %v1349 = vpack.c.bf16 %v449, %v449
        %v1350 = vpack.c.bf16 %v566, %v566
        %v1351 = vpack.c.bf16 %v568, %v568
        %v1352 = vpack.c.bf16 %v685, %v685
        %v1353 = vpack.c.bf16 %v687, %v687
        %v1354 = vpack.c.bf16 %v804, %v804
        %v1355 = vpack.c.bf16 %v806, %v806
        %v1356 = vpack.c.bf16 %v923, %v923
        %v1357 = vpack.c.bf16 %v925, %v925
        %v1358 = vpack.c.bf16 %v1042, %v1042
        %v1359 = vpack.c.bf16 %v1044, %v1044
        %v1360 = vpack.c.bf16 %v1161, %v1161
        %v1361 = vpack.c.bf16 %v1163, %v1163
        %v1362 = vpack.c.bf16 %v1280, %v1280
        %v1363 = vpack.c.bf16 %v1282, %v1282
        %v1364 = vmax.bf16 %v1284, 0
        %v1365 = vmax.bf16 %v1285, 0
        %v1366 = vmax.bf16 %v1286, 0
        %v1367 = vmax.bf16 %v1287, 0
        %v1368 = vmax.bf16 %v1288, 0
        %v1369 = vmax.bf16 %v1289, 0
        %v1370 = vmax.bf16 %v1290, 0
        %v1371 = vmax.bf16 %v1291, 0
        %v1372 = vmax.bf16 %v1292, 0
        %v1373 = vmax.bf16 %v1293, 0
        %v1374 = vmax.bf16 %v1294, 0
        %v1375 = vmax.bf16 %v1295, 0
        %v1376 = vmax.bf16 %v1296, 0
        %v1377 = vmax.bf16 %v1297, 0
        %v1378 = vmax.bf16 %v1298, 0
        %v1379 = vmax.bf16 %v1299, 0
        %v1380 = vmax.bf16 %v1300, 0
        %v1381 = vmax.bf16 %v1301, 0
        %v1382 = vmax.bf16 %v1302, 0
        %v1383 = vmax.bf16 %v1303, 0
        %v1384 = vmax.bf16 %v1304, 0
        %v1385 = vmax.bf16 %v1305, 0
        %v1386 = vmax.bf16 %v1306, 0
        %v1387 = vmax.bf16 %v1307, 0
        %v1388 = vmax.bf16 %v1308, 0
        %v1389 = vmax.bf16 %v1309, 0
        %v1390 = vmax.bf16 %v1310, 0
        %v1391 = vmax.bf16 %v1311, 0
        %v1392 = vmax.bf16 %v1312, 0
        %v1393 = vmax.bf16 %v1313, 0
        %v1394 = vmax.bf16 %v1314, 0
        %v1395 = vmax.bf16 %v1315, 0
        %v1396 = vmax.bf16 %v1316, 0
        %v1397 = vmax.bf16 %v1317, 0
        %v1398 = vmax.bf16 %v1318, 0
        %v1399 = vmax.bf16 %v1319, 0
        %v1400 = vmax.bf16 %v1320, 0
        %v1401 = vmax.bf16 %v1321, 0
        %v1402 = vmax.bf16 %v1322, 0
        %v1403 = vmax.bf16 %v1323, 0
        %v1404 = vmax.bf16 %v1324, 0
        %v1405 = vmax.bf16 %v1325, 0
        %v1406 = vmax.bf16 %v1326, 0
        %v1407 = vmax.bf16 %v1327, 0
        %v1408 = vmax.bf16 %v1328, 0
        %v1409 = vmax.bf16 %v1329, 0
        %v1410 = vmax.bf16 %v1330, 0
        %v1411 = vmax.bf16 %v1331, 0
        %v1412 = vmax.bf16 %v1332, 0
        %v1413 = vmax.bf16 %v1333, 0
        %v1414 = vmax.bf16 %v1334, 0
        %v1415 = vmax.bf16 %v1335, 0
        %v1416 = vmax.bf16 %v1336, 0
        %v1417 = vmax.bf16 %v1337, 0
        %v1418 = vmax.bf16 %v1338, 0
        %v1419 = vmax.bf16 %v1339, 0
        %v1420 = vmax.bf16 %v1340, 0
        %v1421 = vmax.bf16 %v1341, 0
        %v1422 = vmax.bf16 %v1342, 0
        %v1423 = vmax.bf16 %v1343, 0
        %v1424 = vmax.bf16 %v1344, 0
        %v1425 = vmax.bf16 %v1345, 0
        %v1426 = vmax.bf16 %v1346, 0
        %v1427 = vmax.bf16 %v1347, 0
        %v1428 = vmax.bf16 %v1348, 0
        %v1429 = vmax.bf16 %v1349, 0
        %v1430 = vmax.bf16 %v1350, 0
        %v1431 = vmax.bf16 %v1351, 0
        %v1432 = vmax.bf16 %v1352, 0
        %v1433 = vmax.bf16 %v1353, 0
        %v1434 = vmax.bf16 %v1354, 0
        %v1435 = vmax.bf16 %v1355, 0
        %v1436 = vmax.bf16 %v1356, 0
        %v1437 = vmax.bf16 %v1357, 0
        %v1438 = vmax.bf16 %v1358, 0
        %v1439 = vmax.bf16 %v1359, 0
        %v1440 = vmax.bf16 %v1360, 0
        %v1441 = vmax.bf16 %v1361, 0
        %v1442 = vmax.bf16 %v1362, 0
        %v1443 = vmax.bf16 %v1363, 0
        %v1444 = vld [vmem:[#allocation7] sm:$0xf]
        %v1445 = vld [vmem:[#allocation7 + $0x4] sm:$0xf]
        %v1446 = vld [vmem:[#allocation7 + $0x8] sm:$0xf]
        %v1447 = vld [vmem:[#allocation7 + $0xc] sm:$0xf]
        %v1448 = vld [vmem:[#allocation7 + $0x10] sm:$0xf]
        %v1449 = vld [vmem:[#allocation7 + $0x14] sm:$0xf]
        %v1450 = vld [vmem:[#allocation7 + $0x18] sm:$0xf]
        %v1451 = vld [vmem:[#allocation7 + $0x1c] sm:$0xf]
        %v1452 = vld [vmem:[#allocation7 + $0x20] sm:$0xf]
        %v1462 = vunpack.c.l.b16 %v1444
        %v1463 = vunpack.c.l.b16 %v1445
        %v1464 = vunpack.c.l.b16 %v1446
        %v1465 = vunpack.c.l.b16 %v1447
        %v1466 = vunpack.c.l.b16 %v1448
        %v1467 = vunpack.c.l.b16 %v1449
        %v1468 = vunpack.c.l.b16 %v1450
        %v1469 = vunpack.c.l.b16 %v1451
        %v1470 = vunpack.c.l.b16 %v1452
        %v1471 = vpack.c.b16 %v1463, %v1462
        %v1472 = vpack.c.b16 %v1465, %v1464
        %v1473 = vpack.c.b16 %v1467, %v1466
        %v1474 = vpack.c.b16 %v1469, %v1468
        %v1475 = vpack.c.b16 %v1470, %v1470
        %vm1476 = vcmask 588800
        %v1478 = vsel %vm1476, %v1471, 0
        %v1481 = vsel %vm1476, %v1472, 0
        %v1484 = vsel %vm1476, %v1473, 0
        %v1487 = vsel %vm1476, %v1474, 0
        %v1490 = vsel %vm1476, %v1475, 0
        %vm1492 = vcmask 1043456
        %v1494 = vsel %vm1492, %v1428, 0
        %v1497 = vsel %vm1492, %v1429, 0
        %v1500 = vsel %vm1492, %v1430, 0
        %v1503 = vsel %vm1492, %v1431, 0
        %v1506 = vsel %vm1492, %v1432, 0
        %v1509 = vsel %vm1492, %v1433, 0
        %v1512 = vsel %vm1492, %v1434, 0
        %v1515 = vsel %vm1492, %v1435, 0
        %v1518 = vsel %vm1492, %v1436, 0
        %v1521 = vsel %vm1492, %v1437, 0
        %v1524 = vsel %vm1492, %v1438, 0
        %v1527 = vsel %vm1492, %v1439, 0
        %v1530 = vsel %vm1492, %v1440, 0
        %v1533 = vsel %vm1492, %v1441, 0
        %v1536 = vsel %vm1492, %v1442, 0
        %v1539 = vsel %vm1492, %v1443, 0
        %1541 = vmatprep.subr.bf16.mxu0 %v1365
        %1542 = vmatpush1.bf16.msra.mxu0 %v1364
        %1543 = vmatprep.subr.bf16.mxu0 %v1381
        %1544 = vmatpush1.bf16.msra.mxu0 %v1380
        %1545 = vmatprep.subr.bf16.mxu0 %v1397
        %1546 = vmatpush1.bf16.msra.mxu0 %v1396
        %1547 = vmatprep.subr.bf16.mxu0 %v1413
        %1548 = vmatpush1.bf16.msra.mxu0 %v1412
        %1549 = vmatprep.subr.bf16.mxu0 %v1497
        %1550 = vmatpush1.bf16.msra.mxu0 %v1494
        %1551 = vmatprep.subr.bf16.mxu0 0
        %1552 = vmatpush1.bf16.msra.mxu0 0
        %1553 = vmatprep.subr.bf16.mxu0 0
        %1554 = vmatpush1.bf16.msra.mxu0 0
        %1555 = vmatprep.subr.bf16.mxu0 0
        %1556 = vmatpush1.bf16.msra.mxu0 0
        %1557 = vmatprep.subr.bf16.mxu0 0
        %1558 = vmatpush1.bf16.msra.mxu0 0
        %1559 = vmatprep.subr.bf16.mxu0 0
        %1560 = vmatpush1.bf16.msra.mxu0 0
        %1561 = vmatprep.subr.bf16.mxu0 0
        %1562 = vmatpush1.bf16.msra.mxu0 0
        %1563 = vmatprep.subr.bf16.mxu0 0
        %1564 = vmatpush1.bf16.msra.mxu0 0
        %1565 = vmatprep.subr.bf16.mxu0 0
        %1566 = vmatpush1.bf16.msra.mxu0 0
        %1567 = vmatprep.subr.bf16.mxu0 0
        %1568 = vmatpush1.bf16.msra.mxu0 0
        %1569 = vmatprep.subr.bf16.mxu0 0
        %1570 = vmatpush1.bf16.msra.mxu0 0
        %1571 = vmatprep.subr.bf16.mxu0 0
        %1572 = vmatpush1.bf16.msra.mxu0 0
        %1573 = vmatprep.mubr.bf16.mxu0 0
        %1574 = vmatmul.mubr.bf16.gmra.mrb[0].mxu0 %v1478
        %v1575 = vpop.f32.mrb[0].mxu0
        %v1576 = vadd.f32 0.0, %v1575
        %v1577 = vpop.f32.mrb[0].mxu0
        %v1578 = vadd.f32 0.0, %v1577
        %v1579 = vpop.f32.mrb[0].mxu0
        %v1580 = vadd.f32 0.0, %v1579
        %v1581 = vpop.f32.mrb[0].mxu0
        %v1582 = vadd.f32 0.0, %v1581
        %1583 = vmatprep.mubr.bf16.mxu0 0
        %1584 = vmatmul.mubr.bf16.gmra.mrb[0].mxu0 %v1481
        %v1585 = vpop.f32.mrb[0].mxu0
        %v1586 = vadd.f32 0.0, %v1585
        %v1587 = vpop.f32.mrb[0].mxu0
        %v1588 = vadd.f32 0.0, %v1587
        %v1589 = vpop.f32.mrb[0].mxu0
        %v1590 = vadd.f32 0.0, %v1589
        %v1591 = vpop.f32.mrb[0].mxu0
        %v1592 = vadd.f32 0.0, %v1591
        %1593 = vmatprep.mubr.bf16.mxu0 0
        %1594 = vmatmul.mubr.bf16.gmra.mrb[0].mxu0 %v1484
        %v1595 = vpop.f32.mrb[0].mxu0
        %v1596 = vadd.f32 0.0, %v1595
        %v1597 = vpop.f32.mrb[0].mxu0
        %v1598 = vadd.f32 0.0, %v1597
        %v1599 = vpop.f32.mrb[0].mxu0
        %v1600 = vadd.f32 0.0, %v1599
        %v1601 = vpop.f32.mrb[0].mxu0
        %v1602 = vadd.f32 0.0, %v1601
        %1603 = vmatprep.mubr.bf16.mxu0 0
        %1604 = vmatmul.mubr.bf16.gmra.mrb[0].mxu0 %v1487
        %v1605 = vpop.f32.mrb[0].mxu0
        %v1606 = vadd.f32 0.0, %v1605
        %v1607 = vpop.f32.mrb[0].mxu0
        %v1608 = vadd.f32 0.0, %v1607
        %v1609 = vpop.f32.mrb[0].mxu0
        %v1610 = vadd.f32 0.0, %v1609
        %v1611 = vpop.f32.mrb[0].mxu0
        %v1612 = vadd.f32 0.0, %v1611
        %1613 = vmatprep.mubr.bf16.mxu0 0
        %1614 = vmatmul.mubr.bf16.gmra.mrb[0].mxu0 %v1490
        %v1615 = vpop.f32.mrb[0].mxu0
        %v1616 = vadd.f32 0.0, %v1615
        %v1617 = vpop.f32.mrb[0].mxu0
        %v1618 = vadd.f32 0.0, %v1617
        %v1619 = vpop.f32.mrb[0].mxu0
        %v1620 = vpop.f32.mrb[0].mxu0
        %1621 = vdwg.mxu0
        %1622 = vmatprep.subr.bf16.mxu0 %v1367
        %1623 = vmatpush1.bf16.msra.mxu0 %v1366
        %1624 = vmatprep.subr.bf16.mxu0 %v1383
        %1625 = vmatpush1.bf16.msra.mxu0 %v1382
        %1626 = vmatprep.subr.bf16.mxu0 %v1399
        %1627 = vmatpush1.bf16.msra.mxu0 %v1398
        %1628 = vmatprep.subr.bf16.mxu0 %v1415
        %1629 = vmatpush1.bf16.msra.mxu0 %v1414
        %1630 = vmatprep.subr.bf16.mxu0 %v1503
        %1631 = vmatpush1.bf16.msra.mxu0 %v1500
        %1632 = vmatprep.subr.bf16.mxu0 0
        %1633 = vmatpush1.bf16.msra.mxu0 0
        %1634 = vmatprep.subr.bf16.mxu0 0
        %1635 = vmatpush1.bf16.msra.mxu0 0
        %1636 = vmatprep.subr.bf16.mxu0 0
        %1637 = vmatpush1.bf16.msra.mxu0 0
        %1638 = vmatprep.subr.bf16.mxu0 0
        %1639 = vmatpush1.bf16.msra.mxu0 0
        %1640 = vmatprep.subr.bf16.mxu0 0
        %1641 = vmatpush1.bf16.msra.mxu0 0
        %1642 = vmatprep.subr.bf16.mxu0 0
        %1643 = vmatpush1.bf16.msra.mxu0 0
        %1644 = vmatprep.subr.bf16.mxu0 0
        %1645 = vmatpush1.bf16.msra.mxu0 0
        %1646 = vmatprep.subr.bf16.mxu0 0
        %1647 = vmatpush1.bf16.msra.mxu0 0
        %1648 = vmatprep.subr.bf16.mxu0 0
        %1649 = vmatpush1.bf16.msra.mxu0 0
        %1650 = vmatprep.subr.bf16.mxu0 0
        %1651 = vmatpush1.bf16.msra.mxu0 0
        %1652 = vmatprep.subr.bf16.mxu0 0
        %1653 = vmatpush1.bf16.msra.mxu0 0
        %1654 = vmatprep.mubr.bf16.mxu0 0
        %1655 = vmatmul.mubr.bf16.gmra.mrb[0].mxu0 %v1478
        %v1656 = vpop.f32.mrb[0].mxu0
        %v1657 = vadd.f32 0.0, %v1656
        %v1658 = vpop.f32.mrb[0].mxu0
        %v1659 = vadd.f32 0.0, %v1658
        %v1660 = vpop.f32.mrb[0].mxu0
        %v1661 = vadd.f32 0.0, %v1660
        %v1662 = vpop.f32.mrb[0].mxu0
        %v1663 = vadd.f32 0.0, %v1662
        %1664 = vmatprep.mubr.bf16.mxu0 0
        %1665 = vmatmul.mubr.bf16.gmra.mrb[0].mxu0 %v1481
        %v1666 = vpop.f32.mrb[0].mxu0
        %v1667 = vadd.f32 0.0, %v1666
        %v1668 = vpop.f32.mrb[0].mxu0
        %v1669 = vadd.f32 0.0, %v1668
        %v1670 = vpop.f32.mrb[0].mxu0
        %v1671 = vadd.f32 0.0, %v1670
        %v1672 = vpop.f32.mrb[0].mxu0
        %v1673 = vadd.f32 0.0, %v1672
        %1674 = vmatprep.mubr.bf16.mxu0 0
        %1675 = vmatmul.mubr.bf16.gmra.mrb[0].mxu0 %v1484
        %v1676 = vpop.f32.mrb[0].mxu0
        %v1677 = vadd.f32 0.0, %v1676
        %v1678 = vpop.f32.mrb[0].mxu0
        %v1679 = vadd.f32 0.0, %v1678
        %v1680 = vpop.f32.mrb[0].mxu0
        %v1681 = vadd.f32 0.0, %v1680
        %v1682 = vpop.f32.mrb[0].mxu0
        %v1683 = vadd.f32 0.0, %v1682
        %1684 = vmatprep.mubr.bf16.mxu0 0
        %1685 = vmatmul.mubr.bf16.gmra.mrb[0].mxu0 %v1487
        %v1686 = vpop.f32.mrb[0].mxu0
        %v1687 = vadd.f32 0.0, %v1686
        %v1688 = vpop.f32.mrb[0].mxu0
        %v1689 = vadd.f32 0.0, %v1688
        %v1690 = vpop.f32.mrb[0].mxu0
        %v1691 = vadd.f32 0.0, %v1690
        %v1692 = vpop.f32.mrb[0].mxu0
        %v1693 = vadd.f32 0.0, %v1692
        %1694 = vmatprep.mubr.bf16.mxu0 0
        %1695 = vmatmul.mubr.bf16.gmra.mrb[0].mxu0 %v1490
        %v1696 = vpop.f32.mrb[0].mxu0
        %v1697 = vadd.f32 0.0, %v1696
        %v1698 = vpop.f32.mrb[0].mxu0
        %v1699 = vadd.f32 0.0, %v1698
        %v1700 = vpop.f32.mrb[0].mxu0
        %v1701 = vpop.f32.mrb[0].mxu0
        %1702 = vdwg.mxu0
        %1703 = vmatprep.subr.bf16.mxu0 %v1369
        %1704 = vmatpush1.bf16.msra.mxu0 %v1368
        %1705 = vmatprep.subr.bf16.mxu0 %v1385
        %1706 = vmatpush1.bf16.msra.mxu0 %v1384
        %1707 = vmatprep.subr.bf16.mxu0 %v1401
        %1708 = vmatpush1.bf16.msra.mxu0 %v1400
        %1709 = vmatprep.subr.bf16.mxu0 %v1417
        %1710 = vmatpush1.bf16.msra.mxu0 %v1416
        %1711 = vmatprep.subr.bf16.mxu0 %v1509
        %1712 = vmatpush1.bf16.msra.mxu0 %v1506
        %1713 = vmatprep.subr.bf16.mxu0 0
        %1714 = vmatpush1.bf16.msra.mxu0 0
        %1715 = vmatprep.subr.bf16.mxu0 0
        %1716 = vmatpush1.bf16.msra.mxu0 0
        %1717 = vmatprep.subr.bf16.mxu0 0
        %1718 = vmatpush1.bf16.msra.mxu0 0
        %1719 = vmatprep.subr.bf16.mxu0 0
        %1720 = vmatpush1.bf16.msra.mxu0 0
        %1721 = vmatprep.subr.bf16.mxu0 0
        %1722 = vmatpush1.bf16.msra.mxu0 0
        %1723 = vmatprep.subr.bf16.mxu0 0
        %1724 = vmatpush1.bf16.msra.mxu0 0
        %1725 = vmatprep.subr.bf16.mxu0 0
        %1726 = vmatpush1.bf16.msra.mxu0 0
        %1727 = vmatprep.subr.bf16.mxu0 0
        %1728 = vmatpush1.bf16.msra.mxu0 0
        %1729 = vmatprep.subr.bf16.mxu0 0
        %1730 = vmatpush1.bf16.msra.mxu0 0
        %1731 = vmatprep.subr.bf16.mxu0 0
        %1732 = vmatpush1.bf16.msra.mxu0 0
        %1733 = vmatprep.subr.bf16.mxu0 0
        %1734 = vmatpush1.bf16.msra.mxu0 0
        %1735 = vmatprep.mubr.bf16.mxu0 0
        %1736 = vmatmul.mubr.bf16.gmra.mrb[0].mxu0 %v1478
        %v1737 = vpop.f32.mrb[0].mxu0
        %v1738 = vadd.f32 0.0, %v1737
        %v1739 = vpop.f32.mrb[0].mxu0
        %v1740 = vadd.f32 0.0, %v1739
        %v1741 = vpop.f32.mrb[0].mxu0
        %v1742 = vadd.f32 0.0, %v1741
        %v1743 = vpop.f32.mrb[0].mxu0
        %v1744 = vadd.f32 0.0, %v1743
        %1745 = vmatprep.mubr.bf16.mxu0 0
        %1746 = vmatmul.mubr.bf16.gmra.mrb[0].mxu0 %v1481
        %v1747 = vpop.f32.mrb[0].mxu0
        %v1748 = vadd.f32 0.0, %v1747
        %v1749 = vpop.f32.mrb[0].mxu0
        %v1750 = vadd.f32 0.0, %v1749
        %v1751 = vpop.f32.mrb[0].mxu0
        %v1752 = vadd.f32 0.0, %v1751
        %v1753 = vpop.f32.mrb[0].mxu0
        %v1754 = vadd.f32 0.0, %v1753
        %1755 = vmatprep.mubr.bf16.mxu0 0
        %1756 = vmatmul.mubr.bf16.gmra.mrb[0].mxu0 %v1484
        %v1757 = vpop.f32.mrb[0].mxu0
        %v1758 = vadd.f32 0.0, %v1757
        %v1759 = vpop.f32.mrb[0].mxu0
        %v1760 = vadd.f32 0.0, %v1759
        %v1761 = vpop.f32.mrb[0].mxu0
        %v1762 = vadd.f32 0.0, %v1761
        %v1763 = vpop.f32.mrb[0].mxu0
        %v1764 = vadd.f32 0.0, %v1763
        %1765 = vmatprep.mubr.bf16.mxu0 0
        %1766 = vmatmul.mubr.bf16.gmra.mrb[0].mxu0 %v1487
        %v1767 = vpop.f32.mrb[0].mxu0
        %v1768 = vadd.f32 0.0, %v1767
        %v1769 = vpop.f32.mrb[0].mxu0
        %v1770 = vadd.f32 0.0, %v1769
        %v1771 = vpop.f32.mrb[0].mxu0
        %v1772 = vadd.f32 0.0, %v1771
        %v1773 = vpop.f32.mrb[0].mxu0
        %v1774 = vadd.f32 0.0, %v1773
        %1775 = vmatprep.mubr.bf16.mxu0 0
        %1776 = vmatmul.mubr.bf16.gmra.mrb[0].mxu0 %v1490
        %v1777 = vpop.f32.mrb[0].mxu0
        %v1778 = vadd.f32 0.0, %v1777
        %v1779 = vpop.f32.mrb[0].mxu0
        %v1780 = vadd.f32 0.0, %v1779
        %v1781 = vpop.f32.mrb[0].mxu0
        %v1782 = vpop.f32.mrb[0].mxu0
        %1783 = vdwg.mxu0
        %1784 = vmatprep.subr.bf16.mxu0 %v1371
        %1785 = vmatpush1.bf16.msra.mxu0 %v1370
        %1786 = vmatprep.subr.bf16.mxu0 %v1387
        %1787 = vmatpush1.bf16.msra.mxu0 %v1386
        %1788 = vmatprep.subr.bf16.mxu0 %v1403
        %1789 = vmatpush1.bf16.msra.mxu0 %v1402
        %1790 = vmatprep.subr.bf16.mxu0 %v1419
        %1791 = vmatpush1.bf16.msra.mxu0 %v1418
        %1792 = vmatprep.subr.bf16.mxu0 %v1515
        %1793 = vmatpush1.bf16.msra.mxu0 %v1512
        %1794 = vmatprep.subr.bf16.mxu0 0
        %1795 = vmatpush1.bf16.msra.mxu0 0
        %1796 = vmatprep.subr.bf16.mxu0 0
        %1797 = vmatpush1.bf16.msra.mxu0 0
        %1798 = vmatprep.subr.bf16.mxu0 0
        %1799 = vmatpush1.bf16.msra.mxu0 0
        %1800 = vmatprep.subr.bf16.mxu0 0
        %1801 = vmatpush1.bf16.msra.mxu0 0
        %1802 = vmatprep.subr.bf16.mxu0 0
        %1803 = vmatpush1.bf16.msra.mxu0 0
        %1804 = vmatprep.subr.bf16.mxu0 0
        %1805 = vmatpush1.bf16.msra.mxu0 0
        %1806 = vmatprep.subr.bf16.mxu0 0
        %1807 = vmatpush1.bf16.msra.mxu0 0
        %1808 = vmatprep.subr.bf16.mxu0 0
        %1809 = vmatpush1.bf16.msra.mxu0 0
        %1810 = vmatprep.subr.bf16.mxu0 0
        %1811 = vmatpush1.bf16.msra.mxu0 0
        %1812 = vmatprep.subr.bf16.mxu0 0
        %1813 = vmatpush1.bf16.msra.mxu0 0
        %1814 = vmatprep.subr.bf16.mxu0 0
        %1815 = vmatpush1.bf16.msra.mxu0 0
        %1816 = vmatprep.mubr.bf16.mxu0 0
        %1817 = vmatmul.mubr.bf16.gmra.mrb[0].mxu0 %v1478
        %v1818 = vpop.f32.mrb[0].mxu0
        %v1819 = vadd.f32 0.0, %v1818
        %v1820 = vpop.f32.mrb[0].mxu0
        %v1821 = vadd.f32 0.0, %v1820
        %v1822 = vpop.f32.mrb[0].mxu0
        %v1823 = vadd.f32 0.0, %v1822
        %v1824 = vpop.f32.mrb[0].mxu0
        %v1825 = vadd.f32 0.0, %v1824
        %1826 = vmatprep.mubr.bf16.mxu0 0
        %1827 = vmatmul.mubr.bf16.gmra.mrb[0].mxu0 %v1481
        %v1828 = vpop.f32.mrb[0].mxu0
        %v1829 = vadd.f32 0.0, %v1828
        %v1830 = vpop.f32.mrb[0].mxu0
        %v1831 = vadd.f32 0.0, %v1830
        %v1832 = vpop.f32.mrb[0].mxu0
        %v1833 = vadd.f32 0.0, %v1832
        %v1834 = vpop.f32.mrb[0].mxu0
        %v1835 = vadd.f32 0.0, %v1834
        %1836 = vmatprep.mubr.bf16.mxu0 0
        %1837 = vmatmul.mubr.bf16.gmra.mrb[0].mxu0 %v1484
        %v1838 = vpop.f32.mrb[0].mxu0
        %v1839 = vadd.f32 0.0, %v1838
        %v1840 = vpop.f32.mrb[0].mxu0
        %v1841 = vadd.f32 0.0, %v1840
        %v1842 = vpop.f32.mrb[0].mxu0
        %v1843 = vadd.f32 0.0, %v1842
        %v1844 = vpop.f32.mrb[0].mxu0
        %v1845 = vadd.f32 0.0, %v1844
        %1846 = vmatprep.mubr.bf16.mxu0 0
        %1847 = vmatmul.mubr.bf16.gmra.mrb[0].mxu0 %v1487
        %v1848 = vpop.f32.mrb[0].mxu0
        %v1849 = vadd.f32 0.0, %v1848
        %v1850 = vpop.f32.mrb[0].mxu0
        %v1851 = vadd.f32 0.0, %v1850
        %v1852 = vpop.f32.mrb[0].mxu0
        %v1853 = vadd.f32 0.0, %v1852
        %v1854 = vpop.f32.mrb[0].mxu0
        %v1855 = vadd.f32 0.0, %v1854
        %1856 = vmatprep.mubr.bf16.mxu0 0
        %1857 = vmatmul.mubr.bf16.gmra.mrb[0].mxu0 %v1490
        %v1858 = vpop.f32.mrb[0].mxu0
        %v1859 = vadd.f32 0.0, %v1858
        %v1860 = vpop.f32.mrb[0].mxu0
        %v1861 = vadd.f32 0.0, %v1860
        %v1862 = vpop.f32.mrb[0].mxu0
        %v1863 = vpop.f32.mrb[0].mxu0
        %1864 = vdwg.mxu0
        %1865 = vmatprep.subr.bf16.mxu0 %v1373
        %1866 = vmatpush1.bf16.msra.mxu0 %v1372
        %1867 = vmatprep.subr.bf16.mxu0 %v1389
        %1868 = vmatpush1.bf16.msra.mxu0 %v1388
        %1869 = vmatprep.subr.bf16.mxu0 %v1405
        %1870 = vmatpush1.bf16.msra.mxu0 %v1404
        %1871 = vmatprep.subr.bf16.mxu0 %v1421
        %1872 = vmatpush1.bf16.msra.mxu0 %v1420
        %1873 = vmatprep.subr.bf16.mxu0 %v1521
        %1874 = vmatpush1.bf16.msra.mxu0 %v1518
        %1875 = vmatprep.subr.bf16.mxu0 0
        %1876 = vmatpush1.bf16.msra.mxu0 0
        %1877 = vmatprep.subr.bf16.mxu0 0
        %1878 = vmatpush1.bf16.msra.mxu0 0
        %1879 = vmatprep.subr.bf16.mxu0 0
        %1880 = vmatpush1.bf16.msra.mxu0 0
        %1881 = vmatprep.subr.bf16.mxu0 0
        %1882 = vmatpush1.bf16.msra.mxu0 0
        %1883 = vmatprep.subr.bf16.mxu0 0
        %1884 = vmatpush1.bf16.msra.mxu0 0
        %1885 = vmatprep.subr.bf16.mxu0 0
        %1886 = vmatpush1.bf16.msra.mxu0 0
        %1887 = vmatprep.subr.bf16.mxu0 0
        %1888 = vmatpush1.bf16.msra.mxu0 0
        %1889 = vmatprep.subr.bf16.mxu0 0
        %1890 = vmatpush1.bf16.msra.mxu0 0
        %1891 = vmatprep.subr.bf16.mxu0 0
        %1892 = vmatpush1.bf16.msra.mxu0 0
        %1893 = vmatprep.subr.bf16.mxu0 0
        %1894 = vmatpush1.bf16.msra.mxu0 0
        %1895 = vmatprep.subr.bf16.mxu0 0
        %1896 = vmatpush1.bf16.msra.mxu0 0
        %1897 = vmatprep.mubr.bf16.mxu0 0
        %1898 = vmatmul.mubr.bf16.gmra.mrb[0].mxu0 %v1478
        %v1899 = vpop.f32.mrb[0].mxu0
        %v1900 = vadd.f32 0.0, %v1899
        %v1901 = vpop.f32.mrb[0].mxu0
        %v1902 = vadd.f32 0.0, %v1901
        %v1903 = vpop.f32.mrb[0].mxu0
        %v1904 = vadd.f32 0.0, %v1903
        %v1905 = vpop.f32.mrb[0].mxu0
        %v1906 = vadd.f32 0.0, %v1905
        %1907 = vmatprep.mubr.bf16.mxu0 0
        %1908 = vmatmul.mubr.bf16.gmra.mrb[0].mxu0 %v1481
        %v1909 = vpop.f32.mrb[0].mxu0
        %v1910 = vadd.f32 0.0, %v1909
        %v1911 = vpop.f32.mrb[0].mxu0
        %v1912 = vadd.f32 0.0, %v1911
        %v1913 = vpop.f32.mrb[0].mxu0
        %v1914 = vadd.f32 0.0, %v1913
        %v1915 = vpop.f32.mrb[0].mxu0
        %v1916 = vadd.f32 0.0, %v1915
        %1917 = vmatprep.mubr.bf16.mxu0 0
        %1918 = vmatmul.mubr.bf16.gmra.mrb[0].mxu0 %v1484
        %v1919 = vpop.f32.mrb[0].mxu0
        %v1920 = vadd.f32 0.0, %v1919
        %v1921 = vpop.f32.mrb[0].mxu0
        %v1922 = vadd.f32 0.0, %v1921
        %v1923 = vpop.f32.mrb[0].mxu0
        %v1924 = vadd.f32 0.0, %v1923
        %v1925 = vpop.f32.mrb[0].mxu0
        %v1926 = vadd.f32 0.0, %v1925
        %1927 = vmatprep.mubr.bf16.mxu0 0
        %1928 = vmatmul.mubr.bf16.gmra.mrb[0].mxu0 %v1487
        %v1929 = vpop.f32.mrb[0].mxu0
        %v1930 = vadd.f32 0.0, %v1929
        %v1931 = vpop.f32.mrb[0].mxu0
        %v1932 = vadd.f32 0.0, %v1931
        %v1933 = vpop.f32.mrb[0].mxu0
        %v1934 = vadd.f32 0.0, %v1933
        %v1935 = vpop.f32.mrb[0].mxu0
        %v1936 = vadd.f32 0.0, %v1935
        %1937 = vmatprep.mubr.bf16.mxu0 0
        %1938 = vmatmul.mubr.bf16.gmra.mrb[0].mxu0 %v1490
        %v1939 = vpop.f32.mrb[0].mxu0
        %v1940 = vadd.f32 0.0, %v1939
        %v1941 = vpop.f32.mrb[0].mxu0
        %v1942 = vadd.f32 0.0, %v1941
        %v1943 = vpop.f32.mrb[0].mxu0
        %v1944 = vpop.f32.mrb[0].mxu0
        %1945 = vdwg.mxu0
        %1946 = vmatprep.subr.bf16.mxu0 %v1375
        %1947 = vmatpush1.bf16.msra.mxu0 %v1374
        %1948 = vmatprep.subr.bf16.mxu0 %v1391
        %1949 = vmatpush1.bf16.msra.mxu0 %v1390
        %1950 = vmatprep.subr.bf16.mxu0 %v1407
        %1951 = vmatpush1.bf16.msra.mxu0 %v1406
        %1952 = vmatprep.subr.bf16.mxu0 %v1423
        %1953 = vmatpush1.bf16.msra.mxu0 %v1422
        %1954 = vmatprep.subr.bf16.mxu0 %v1527
        %1955 = vmatpush1.bf16.msra.mxu0 %v1524
        %1956 = vmatprep.subr.bf16.mxu0 0
        %1957 = vmatpush1.bf16.msra.mxu0 0
        %1958 = vmatprep.subr.bf16.mxu0 0
        %1959 = vmatpush1.bf16.msra.mxu0 0
        %1960 = vmatprep.subr.bf16.mxu0 0
        %1961 = vmatpush1.bf16.msra.mxu0 0
        %1962 = vmatprep.subr.bf16.mxu0 0
        %1963 = vmatpush1.bf16.msra.mxu0 0
        %1964 = vmatprep.subr.bf16.mxu0 0
        %1965 = vmatpush1.bf16.msra.mxu0 0
        %1966 = vmatprep.subr.bf16.mxu0 0
        %1967 = vmatpush1.bf16.msra.mxu0 0
        %1968 = vmatprep.subr.bf16.mxu0 0
        %1969 = vmatpush1.bf16.msra.mxu0 0
        %1970 = vmatprep.subr.bf16.mxu0 0
        %1971 = vmatpush1.bf16.msra.mxu0 0
        %1972 = vmatprep.subr.bf16.mxu0 0
        %1973 = vmatpush1.bf16.msra.mxu0 0
        %1974 = vmatprep.subr.bf16.mxu0 0
        %1975 = vmatpush1.bf16.msra.mxu0 0
        %1976 = vmatprep.subr.bf16.mxu0 0
        %1977 = vmatpush1.bf16.msra.mxu0 0
        %1978 = vmatprep.mubr.bf16.mxu0 0
        %1979 = vmatmul.mubr.bf16.gmra.mrb[0].mxu0 %v1478
        %v1980 = vpop.f32.mrb[0].mxu0
        %v1981 = vadd.f32 0.0, %v1980
        %v1982 = vpop.f32.mrb[0].mxu0
        %v1983 = vadd.f32 0.0, %v1982
        %v1984 = vpop.f32.mrb[0].mxu0
        %v1985 = vadd.f32 0.0, %v1984
        %v1986 = vpop.f32.mrb[0].mxu0
        %v1987 = vadd.f32 0.0, %v1986
        %1988 = vmatprep.mubr.bf16.mxu0 0
        %1989 = vmatmul.mubr.bf16.gmra.mrb[0].mxu0 %v1481
        %v1990 = vpop.f32.mrb[0].mxu0
        %v1991 = vadd.f32 0.0, %v1990
        %v1992 = vpop.f32.mrb[0].mxu0
        %v1993 = vadd.f32 0.0, %v1992
        %v1994 = vpop.f32.mrb[0].mxu0
        %v1995 = vadd.f32 0.0, %v1994
        %v1996 = vpop.f32.mrb[0].mxu0
        %v1997 = vadd.f32 0.0, %v1996
        %1998 = vmatprep.mubr.bf16.mxu0 0
        %1999 = vmatmul.mubr.bf16.gmra.mrb[0].mxu0 %v1484
        %v2000 = vpop.f32.mrb[0].mxu0
        %v2001 = vadd.f32 0.0, %v2000
        %v2002 = vpop.f32.mrb[0].mxu0
        %v2003 = vadd.f32 0.0, %v2002
        %v2004 = vpop.f32.mrb[0].mxu0
        %v2005 = vadd.f32 0.0, %v2004
        %v2006 = vpop.f32.mrb[0].mxu0
        %v2007 = vadd.f32 0.0, %v2006
        %2008 = vmatprep.mubr.bf16.mxu0 0
        %2009 = vmatmul.mubr.bf16.gmra.mrb[0].mxu0 %v1487
        %v2010 = vpop.f32.mrb[0].mxu0
        %v2011 = vadd.f32 0.0, %v2010
        %v2012 = vpop.f32.mrb[0].mxu0
        %v2013 = vadd.f32 0.0, %v2012
        %v2014 = vpop.f32.mrb[0].mxu0
        %v2015 = vadd.f32 0.0, %v2014
        %v2016 = vpop.f32.mrb[0].mxu0
        %v2017 = vadd.f32 0.0, %v2016
        %2018 = vmatprep.mubr.bf16.mxu0 0
        %2019 = vmatmul.mubr.bf16.gmra.mrb[0].mxu0 %v1490
        %v2020 = vpop.f32.mrb[0].mxu0
        %v2021 = vadd.f32 0.0, %v2020
        %v2022 = vpop.f32.mrb[0].mxu0
        %v2023 = vadd.f32 0.0, %v2022
        %v2024 = vpop.f32.mrb[0].mxu0
        %v2025 = vpop.f32.mrb[0].mxu0
        %2026 = vdwg.mxu0
        %2027 = vmatprep.subr.bf16.mxu0 %v1377
        %2028 = vmatpush1.bf16.msra.mxu0 %v1376
        %2029 = vmatprep.subr.bf16.mxu0 %v1393
        %2030 = vmatpush1.bf16.msra.mxu0 %v1392
        %2031 = vmatprep.subr.bf16.mxu0 %v1409
        %2032 = vmatpush1.bf16.msra.mxu0 %v1408
        %2033 = vmatprep.subr.bf16.mxu0 %v1425
        %2034 = vmatpush1.bf16.msra.mxu0 %v1424
        %2035 = vmatprep.subr.bf16.mxu0 %v1533
        %2036 = vmatpush1.bf16.msra.mxu0 %v1530
        %2037 = vmatprep.subr.bf16.mxu0 0
        %2038 = vmatpush1.bf16.msra.mxu0 0
        %2039 = vmatprep.subr.bf16.mxu0 0
        %2040 = vmatpush1.bf16.msra.mxu0 0
        %2041 = vmatprep.subr.bf16.mxu0 0
        %2042 = vmatpush1.bf16.msra.mxu0 0
        %2043 = vmatprep.subr.bf16.mxu0 0
        %2044 = vmatpush1.bf16.msra.mxu0 0
        %2045 = vmatprep.subr.bf16.mxu0 0
        %2046 = vmatpush1.bf16.msra.mxu0 0
        %2047 = vmatprep.subr.bf16.mxu0 0
        %2048 = vmatpush1.bf16.msra.mxu0 0
        %2049 = vmatprep.subr.bf16.mxu0 0
        %2050 = vmatpush1.bf16.msra.mxu0 0
        %2051 = vmatprep.subr.bf16.mxu0 0
        %2052 = vmatpush1.bf16.msra.mxu0 0
        %2053 = vmatprep.subr.bf16.mxu0 0
        %2054 = vmatpush1.bf16.msra.mxu0 0
        %2055 = vmatprep.subr.bf16.mxu0 0
        %2056 = vmatpush1.bf16.msra.mxu0 0
        %2057 = vmatprep.subr.bf16.mxu0 0
        %2058 = vmatpush1.bf16.msra.mxu0 0
        %2059 = vmatprep.mubr.bf16.mxu0 0
        %2060 = vmatmul.mubr.bf16.gmra.mrb[0].mxu0 %v1478
        %v2061 = vpop.f32.mrb[0].mxu0
        %v2062 = vadd.f32 0.0, %v2061
        %v2063 = vpop.f32.mrb[0].mxu0
        %v2064 = vadd.f32 0.0, %v2063
        %v2065 = vpop.f32.mrb[0].mxu0
        %v2066 = vadd.f32 0.0, %v2065
        %v2067 = vpop.f32.mrb[0].mxu0
        %v2068 = vadd.f32 0.0, %v2067
        %2069 = vmatprep.mubr.bf16.mxu0 0
        %2070 = vmatmul.mubr.bf16.gmra.mrb[0].mxu0 %v1481
        %v2071 = vpop.f32.mrb[0].mxu0
        %v2072 = vadd.f32 0.0, %v2071
        %v2073 = vpop.f32.mrb[0].mxu0
        %v2074 = vadd.f32 0.0, %v2073
        %v2075 = vpop.f32.mrb[0].mxu0
        %v2076 = vadd.f32 0.0, %v2075
        %v2077 = vpop.f32.mrb[0].mxu0
        %v2078 = vadd.f32 0.0, %v2077
        %2079 = vmatprep.mubr.bf16.mxu0 0
        %2080 = vmatmul.mubr.bf16.gmra.mrb[0].mxu0 %v1484
        %v2081 = vpop.f32.mrb[0].mxu0
        %v2082 = vadd.f32 0.0, %v2081
        %v2083 = vpop.f32.mrb[0].mxu0
        %v2084 = vadd.f32 0.0, %v2083
        %v2085 = vpop.f32.mrb[0].mxu0
        %v2086 = vadd.f32 0.0, %v2085
        %v2087 = vpop.f32.mrb[0].mxu0
        %v2088 = vadd.f32 0.0, %v2087
        %2089 = vmatprep.mubr.bf16.mxu0 0
        %2090 = vmatmul.mubr.bf16.gmra.mrb[0].mxu0 %v1487
        %v2091 = vpop.f32.mrb[0].mxu0
        %v2092 = vadd.f32 0.0, %v2091
        %v2093 = vpop.f32.mrb[0].mxu0
        %v2094 = vadd.f32 0.0, %v2093
        %v2095 = vpop.f32.mrb[0].mxu0
        %v2096 = vadd.f32 0.0, %v2095
        %v2097 = vpop.f32.mrb[0].mxu0
        %v2098 = vadd.f32 0.0, %v2097
        %2099 = vmatprep.mubr.bf16.mxu0 0
        %2100 = vmatmul.mubr.bf16.gmra.mrb[0].mxu0 %v1490
        %v2101 = vpop.f32.mrb[0].mxu0
        %v2102 = vadd.f32 0.0, %v2101
        %v2103 = vpop.f32.mrb[0].mxu0
        %v2104 = vadd.f32 0.0, %v2103
        %v2105 = vpop.f32.mrb[0].mxu0
        %v2106 = vpop.f32.mrb[0].mxu0
        %2107 = vdwg.mxu0
        %2108 = vmatprep.subr.bf16.mxu0 %v1379
        %2109 = vmatpush1.bf16.msra.mxu0 %v1378
        %2110 = vmatprep.subr.bf16.mxu0 %v1395
        %2111 = vmatpush1.bf16.msra.mxu0 %v1394
        %2112 = vmatprep.subr.bf16.mxu0 %v1411
        %2113 = vmatpush1.bf16.msra.mxu0 %v1410
        %2114 = vmatprep.subr.bf16.mxu0 %v1427
        %2115 = vmatpush1.bf16.msra.mxu0 %v1426
        %2116 = vmatprep.subr.bf16.mxu0 %v1539
        %2117 = vmatpush1.bf16.msra.mxu0 %v1536
        %2118 = vmatprep.subr.bf16.mxu0 0
        %2119 = vmatpush1.bf16.msra.mxu0 0
        %2120 = vmatprep.subr.bf16.mxu0 0
        %2121 = vmatpush1.bf16.msra.mxu0 0
        %2122 = vmatprep.subr.bf16.mxu0 0
        %2123 = vmatpush1.bf16.msra.mxu0 0
        %2124 = vmatprep.subr.bf16.mxu0 0
        %2125 = vmatpush1.bf16.msra.mxu0 0
        %2126 = vmatprep.subr.bf16.mxu0 0
        %2127 = vmatpush1.bf16.msra.mxu0 0
        %2128 = vmatprep.subr.bf16.mxu0 0
        %2129 = vmatpush1.bf16.msra.mxu0 0
        %2130 = vmatprep.subr.bf16.mxu0 0
        %2131 = vmatpush1.bf16.msra.mxu0 0
        %2132 = vmatprep.subr.bf16.mxu0 0
        %2133 = vmatpush1.bf16.msra.mxu0 0
        %2134 = vmatprep.subr.bf16.mxu0 0
        %2135 = vmatpush1.bf16.msra.mxu0 0
        %2136 = vmatprep.subr.bf16.mxu0 0
        %2137 = vmatpush1.bf16.msra.mxu0 0
        %2138 = vmatprep.subr.bf16.mxu0 0
        %2139 = vmatpush1.bf16.msra.mxu0 0
        %2140 = vmatprep.mubr.bf16.mxu0 0
        %2141 = vmatmul.mubr.bf16.gmra.mrb[0].mxu0 %v1478
        %v2142 = vpop.f32.mrb[0].mxu0
        %v2143 = vadd.f32 0.0, %v2142
        %v2144 = vpop.f32.mrb[0].mxu0
        %v2145 = vadd.f32 0.0, %v2144
        %v2146 = vpop.f32.mrb[0].mxu0
        %v2147 = vadd.f32 0.0, %v2146
        %v2148 = vpop.f32.mrb[0].mxu0
        %v2149 = vadd.f32 0.0, %v2148
        %2150 = vmatprep.mubr.bf16.mxu0 0
        %2151 = vmatmul.mubr.bf16.gmra.mrb[0].mxu0 %v1481
        %v2152 = vpop.f32.mrb[0].mxu0
        %v2153 = vadd.f32 0.0, %v2152
        %v2154 = vpop.f32.mrb[0].mxu0
        %v2155 = vadd.f32 0.0, %v2154
        %v2156 = vpop.f32.mrb[0].mxu0
        %v2157 = vadd.f32 0.0, %v2156
        %v2158 = vpop.f32.mrb[0].mxu0
        %v2159 = vadd.f32 0.0, %v2158
        %2160 = vmatprep.mubr.bf16.mxu0 0
        %2161 = vmatmul.mubr.bf16.gmra.mrb[0].mxu0 %v1484
        %v2162 = vpop.f32.mrb[0].mxu0
        %v2163 = vadd.f32 0.0, %v2162
        %v2164 = vpop.f32.mrb[0].mxu0
        %v2165 = vadd.f32 0.0, %v2164
        %v2166 = vpop.f32.mrb[0].mxu0
        %v2167 = vadd.f32 0.0, %v2166
        %v2168 = vpop.f32.mrb[0].mxu0
        %v2169 = vadd.f32 0.0, %v2168
        %2170 = vmatprep.mubr.bf16.mxu0 0
        %2171 = vmatmul.mubr.bf16.gmra.mrb[0].mxu0 %v1487
        %v2172 = vpop.f32.mrb[0].mxu0
        %v2173 = vadd.f32 0.0, %v2172
        %v2174 = vpop.f32.mrb[0].mxu0
        %v2175 = vadd.f32 0.0, %v2174
        %v2176 = vpop.f32.mrb[0].mxu0
        %v2177 = vadd.f32 0.0, %v2176
        %v2178 = vpop.f32.mrb[0].mxu0
        %v2179 = vadd.f32 0.0, %v2178
        %2180 = vmatprep.mubr.bf16.mxu0 0
        %2181 = vmatmul.mubr.bf16.gmra.mrb[0].mxu0 %v1490
        %v2182 = vpop.f32.mrb[0].mxu0
        %v2183 = vadd.f32 0.0, %v2182
        %v2184 = vpop.f32.mrb[0].mxu0
        %v2185 = vadd.f32 0.0, %v2184
        %v2186 = vpop.f32.mrb[0].mxu0
        %v2187 = vpop.f32.mrb[0].mxu0
        %2188 = vdwg.mxu0
        %v2189 = vpack.c.bf16 %v1580, %v1576
        %v2190 = vpack.c.bf16 %v1582, %v1578
        %v2191 = vpack.c.bf16 %v1661, %v1657
        %v2192 = vpack.c.bf16 %v1663, %v1659
        %v2193 = vpack.c.bf16 %v1742, %v1738
        %v2194 = vpack.c.bf16 %v1744, %v1740
        %v2195 = vpack.c.bf16 %v1823, %v1819
        %v2196 = vpack.c.bf16 %v1825, %v1821
        %v2197 = vpack.c.bf16 %v1904, %v1900
        %v2198 = vpack.c.bf16 %v1906, %v1902
        %v2199 = vpack.c.bf16 %v1985, %v1981
        %v2200 = vpack.c.bf16 %v1987, %v1983
        %v2201 = vpack.c.bf16 %v2066, %v2062
        %v2202 = vpack.c.bf16 %v2068, %v2064
        %v2203 = vpack.c.bf16 %v2147, %v2143
        %v2204 = vpack.c.bf16 %v2149, %v2145
        %v2205 = vpack.c.bf16 %v1590, %v1586
        %v2206 = vpack.c.bf16 %v1592, %v1588
        %v2207 = vpack.c.bf16 %v1671, %v1667
        %v2208 = vpack.c.bf16 %v1673, %v1669
        %v2209 = vpack.c.bf16 %v1752, %v1748
        %v2210 = vpack.c.bf16 %v1754, %v1750
        %v2211 = vpack.c.bf16 %v1833, %v1829
        %v2212 = vpack.c.bf16 %v1835, %v1831
        %v2213 = vpack.c.bf16 %v1914, %v1910
        %v2214 = vpack.c.bf16 %v1916, %v1912
        %v2215 = vpack.c.bf16 %v1995, %v1991
        %v2216 = vpack.c.bf16 %v1997, %v1993
        %v2217 = vpack.c.bf16 %v2076, %v2072
        %v2218 = vpack.c.bf16 %v2078, %v2074
        %v2219 = vpack.c.bf16 %v2157, %v2153
        %v2220 = vpack.c.bf16 %v2159, %v2155
        %v2221 = vpack.c.bf16 %v1600, %v1596
        %v2222 = vpack.c.bf16 %v1602, %v1598
        %v2223 = vpack.c.bf16 %v1681, %v1677
        %v2224 = vpack.c.bf16 %v1683, %v1679
        %v2225 = vpack.c.bf16 %v1762, %v1758
        %v2226 = vpack.c.bf16 %v1764, %v1760
        %v2227 = vpack.c.bf16 %v1843, %v1839
        %v2228 = vpack.c.bf16 %v1845, %v1841
        %v2229 = vpack.c.bf16 %v1924, %v1920
        %v2230 = vpack.c.bf16 %v1926, %v1922
        %v2231 = vpack.c.bf16 %v2005, %v2001
        %v2232 = vpack.c.bf16 %v2007, %v2003
        %v2233 = vpack.c.bf16 %v2086, %v2082
        %v2234 = vpack.c.bf16 %v2088, %v2084
        %v2235 = vpack.c.bf16 %v2167, %v2163
        %v2236 = vpack.c.bf16 %v2169, %v2165
        %v2237 = vpack.c.bf16 %v1610, %v1606
        %v2238 = vpack.c.bf16 %v1612, %v1608
        %v2239 = vpack.c.bf16 %v1691, %v1687
        %v2240 = vpack.c.bf16 %v1693, %v1689
        %v2241 = vpack.c.bf16 %v1772, %v1768
        %v2242 = vpack.c.bf16 %v1774, %v1770
        %v2243 = vpack.c.bf16 %v1853, %v1849
        %v2244 = vpack.c.bf16 %v1855, %v1851
        %v2245 = vpack.c.bf16 %v1934, %v1930
        %v2246 = vpack.c.bf16 %v1936, %v1932
        %v2247 = vpack.c.bf16 %v2015, %v2011
        %v2248 = vpack.c.bf16 %v2017, %v2013
        %v2249 = vpack.c.bf16 %v2096, %v2092
        %v2250 = vpack.c.bf16 %v2098, %v2094
        %v2251 = vpack.c.bf16 %v2177, %v2173
        %v2252 = vpack.c.bf16 %v2179, %v2175
        %v2253 = vpack.c.bf16 %v1616, %v1616
        %v2254 = vpack.c.bf16 %v1618, %v1618
        %v2255 = vpack.c.bf16 %v1697, %v1697
        %v2256 = vpack.c.bf16 %v1699, %v1699
        %v2257 = vpack.c.bf16 %v1778, %v1778
        %v2258 = vpack.c.bf16 %v1780, %v1780
        %v2259 = vpack.c.bf16 %v1859, %v1859
        %v2260 = vpack.c.bf16 %v1861, %v1861
        %v2261 = vpack.c.bf16 %v1940, %v1940
        %v2262 = vpack.c.bf16 %v1942, %v1942
        %v2263 = vpack.c.bf16 %v2021, %v2021
        %v2264 = vpack.c.bf16 %v2023, %v2023
        %v2265 = vpack.c.bf16 %v2102, %v2102
        %v2266 = vpack.c.bf16 %v2104, %v2104
        %v2267 = vpack.c.bf16 %v2183, %v2183
        %v2268 = vpack.c.bf16 %v2185, %v2185
        %v2269 = vmax.bf16 %v2189, 0
        %v2270 = vmax.bf16 %v2190, 0
        %v2271 = vmax.bf16 %v2191, 0
        %v2272 = vmax.bf16 %v2192, 0
        %v2273 = vmax.bf16 %v2193, 0
        %v2274 = vmax.bf16 %v2194, 0
        %v2275 = vmax.bf16 %v2195, 0
        %v2276 = vmax.bf16 %v2196, 0
        %v2277 = vmax.bf16 %v2197, 0
        %v2278 = vmax.bf16 %v2198, 0
        %v2279 = vmax.bf16 %v2199, 0
        %v2280 = vmax.bf16 %v2200, 0
        %v2281 = vmax.bf16 %v2201, 0
        %v2282 = vmax.bf16 %v2202, 0
        %v2283 = vmax.bf16 %v2203, 0
        %v2284 = vmax.bf16 %v2204, 0
        %v2285 = vmax.bf16 %v2205, 0
        %v2286 = vmax.bf16 %v2206, 0
        %v2287 = vmax.bf16 %v2207, 0
        %v2288 = vmax.bf16 %v2208, 0
        %v2289 = vmax.bf16 %v2209, 0
        %v2290 = vmax.bf16 %v2210, 0
        %v2291 = vmax.bf16 %v2211, 0
        %v2292 = vmax.bf16 %v2212, 0
        %v2293 = vmax.bf16 %v2213, 0
        %v2294 = vmax.bf16 %v2214, 0
        %v2295 = vmax.bf16 %v2215, 0
        %v2296 = vmax.bf16 %v2216, 0
        %v2297 = vmax.bf16 %v2217, 0
        %v2298 = vmax.bf16 %v2218, 0
        %v2299 = vmax.bf16 %v2219, 0
        %v2300 = vmax.bf16 %v2220, 0
        %v2301 = vmax.bf16 %v2221, 0
        %v2302 = vmax.bf16 %v2222, 0
        %v2303 = vmax.bf16 %v2223, 0
        %v2304 = vmax.bf16 %v2224, 0
        %v2305 = vmax.bf16 %v2225, 0
        %v2306 = vmax.bf16 %v2226, 0
        %v2307 = vmax.bf16 %v2227, 0
        %v2308 = vmax.bf16 %v2228, 0
        %v2309 = vmax.bf16 %v2229, 0
        %v2310 = vmax.bf16 %v2230, 0
        %v2311 = vmax.bf16 %v2231, 0
        %v2312 = vmax.bf16 %v2232, 0
        %v2313 = vmax.bf16 %v2233, 0
        %v2314 = vmax.bf16 %v2234, 0
        %v2315 = vmax.bf16 %v2235, 0
        %v2316 = vmax.bf16 %v2236, 0
        %v2317 = vmax.bf16 %v2237, 0
        %v2318 = vmax.bf16 %v2238, 0
        %v2319 = vmax.bf16 %v2239, 0
        %v2320 = vmax.bf16 %v2240, 0
        %v2321 = vmax.bf16 %v2241, 0
        %v2322 = vmax.bf16 %v2242, 0
        %v2323 = vmax.bf16 %v2243, 0
        %v2324 = vmax.bf16 %v2244, 0
        %v2325 = vmax.bf16 %v2245, 0
        %v2326 = vmax.bf16 %v2246, 0
        %v2327 = vmax.bf16 %v2247, 0
        %v2328 = vmax.bf16 %v2248, 0
        %v2329 = vmax.bf16 %v2249, 0
        %v2330 = vmax.bf16 %v2250, 0
        %v2331 = vmax.bf16 %v2251, 0
        %v2332 = vmax.bf16 %v2252, 0
        %v2333 = vmax.bf16 %v2253, 0
        %v2334 = vmax.bf16 %v2254, 0
        %v2335 = vmax.bf16 %v2255, 0
        %v2336 = vmax.bf16 %v2256, 0
        %v2337 = vmax.bf16 %v2257, 0
        %v2338 = vmax.bf16 %v2258, 0
        %v2339 = vmax.bf16 %v2259, 0
        %v2340 = vmax.bf16 %v2260, 0
        %v2341 = vmax.bf16 %v2261, 0
        %v2342 = vmax.bf16 %v2262, 0
        %v2343 = vmax.bf16 %v2263, 0
        %v2344 = vmax.bf16 %v2264, 0
        %v2345 = vmax.bf16 %v2265, 0
        %v2346 = vmax.bf16 %v2266, 0
        %v2347 = vmax.bf16 %v2267, 0
        %v2348 = vmax.bf16 %v2268, 0
        %v2349 = vld [vmem:[#allocation8] sm:$0xf]
        %v2350 = vld [vmem:[#allocation8 + $0x4] sm:$0xf]
        %v2351 = vld [vmem:[#allocation8 + $0x8] sm:$0xf]
        %v2352 = vld [vmem:[#allocation8 + $0xc] sm:$0xf]
        %v2353 = vld [vmem:[#allocation8 + $0x10] sm:$0xf]
        %v2354 = vld [vmem:[#allocation8 + $0x14] sm:$0xf]
        %v2355 = vld [vmem:[#allocation8 + $0x18] sm:$0xf]
        %v2356 = vld [vmem:[#allocation8 + $0x1c] sm:$0xf]
        %v2357 = vld [vmem:[#allocation8 + $0x20] sm:$0xf]
        %v2358 = vld [vmem:[#allocation8 + $0x24] sm:$0xf]
        %v2359 = vld [vmem:[#allocation8 + $0x28] sm:$0xf]
        %v2360 = vld [vmem:[#allocation8 + $0x2c] sm:$0xf]
        %v2361 = vld [vmem:[#allocation8 + $0x30] sm:$0xf]
        %v2362 = vld [vmem:[#allocation8 + $0x34] sm:$0xf]
        %v2363 = vld [vmem:[#allocation8 + $0x38] sm:$0xf]
        %v2364 = vld [vmem:[#allocation8 + $0x3c] sm:$0xf]
        %v2381 = vunpack.c.l.b16 %v2349
        %v2382 = vunpack.c.l.b16 %v2350
        %v2383 = vunpack.c.l.b16 %v2351
        %v2384 = vunpack.c.l.b16 %v2352
        %v2385 = vunpack.c.l.b16 %v2353
        %v2386 = vunpack.c.l.b16 %v2354
        %v2387 = vunpack.c.l.b16 %v2355
        %v2388 = vunpack.c.l.b16 %v2356
        %v2389 = vunpack.c.l.b16 %v2357
        %v2390 = vunpack.c.l.b16 %v2358
        %v2391 = vunpack.c.l.b16 %v2359
        %v2392 = vunpack.c.l.b16 %v2360
        %v2393 = vunpack.c.l.b16 %v2361
        %v2394 = vunpack.c.l.b16 %v2362
        %v2395 = vunpack.c.l.b16 %v2363
        %v2396 = vunpack.c.l.b16 %v2364
        %v2397 = vpack.c.b16 %v2382, %v2381
        %v2398 = vpack.c.b16 %v2384, %v2383
        %v2399 = vpack.c.b16 %v2386, %v2385
        %v2400 = vpack.c.b16 %v2388, %v2387
        %v2401 = vpack.c.b16 %v2390, %v2389
        %v2402 = vpack.c.b16 %v2392, %v2391
        %v2403 = vpack.c.b16 %v2394, %v2393
        %v2404 = vpack.c.b16 %v2396, %v2395
        %v2406 = vsel %vm1476, %v2397, 0
        %v2409 = vsel %vm1476, %v2398, 0
        %v2412 = vsel %vm1476, %v2399, 0
        %v2415 = vsel %vm1476, %v2400, 0
        %v2418 = vsel %vm1476, %v2401, 0
        %v2421 = vsel %vm1476, %v2402, 0
        %v2424 = vsel %vm1476, %v2403, 0
        %v2427 = vsel %vm1476, %v2404, 0
        %v2430 = vsel %vm1492, %v2333, 0
        %v2433 = vsel %vm1492, %v2334, 0
        %v2436 = vsel %vm1492, %v2335, 0
        %v2439 = vsel %vm1492, %v2336, 0
        %v2442 = vsel %vm1492, %v2337, 0
        %v2445 = vsel %vm1492, %v2338, 0
        %v2448 = vsel %vm1492, %v2339, 0
        %v2451 = vsel %vm1492, %v2340, 0
        %v2454 = vsel %vm1492, %v2341, 0
        %v2457 = vsel %vm1492, %v2342, 0
        %v2460 = vsel %vm1492, %v2343, 0
        %v2463 = vsel %vm1492, %v2344, 0
        %v2466 = vsel %vm1492, %v2345, 0
        %v2469 = vsel %vm1492, %v2346, 0
        %v2472 = vsel %vm1492, %v2347, 0
        %v2475 = vsel %vm1492, %v2348, 0
        %2477 = vmatprep.subr.bf16.mxu0 %v2270
        %2478 = vmatpush1.bf16.msra.mxu0 %v2269
        %2479 = vmatprep.subr.bf16.mxu0 %v2286
        %2480 = vmatpush1.bf16.msra.mxu0 %v2285
        %2481 = vmatprep.subr.bf16.mxu0 %v2302
        %2482 = vmatpush1.bf16.msra.mxu0 %v2301
        %2483 = vmatprep.subr.bf16.mxu0 %v2318
        %2484 = vmatpush1.bf16.msra.mxu0 %v2317
        %2485 = vmatprep.subr.bf16.mxu0 %v2433
        %2486 = vmatpush1.bf16.msra.mxu0 %v2430
        %2487 = vmatprep.subr.bf16.mxu0 0
        %2488 = vmatpush1.bf16.msra.mxu0 0
        %2489 = vmatprep.subr.bf16.mxu0 0
        %2490 = vmatpush1.bf16.msra.mxu0 0
        %2491 = vmatprep.subr.bf16.mxu0 0
        %2492 = vmatpush1.bf16.msra.mxu0 0
        %2493 = vmatprep.subr.bf16.mxu0 0
        %2494 = vmatpush1.bf16.msra.mxu0 0
        %2495 = vmatprep.subr.bf16.mxu0 0
        %2496 = vmatpush1.bf16.msra.mxu0 0
        %2497 = vmatprep.subr.bf16.mxu0 0
        %2498 = vmatpush1.bf16.msra.mxu0 0
        %2499 = vmatprep.subr.bf16.mxu0 0
        %2500 = vmatpush1.bf16.msra.mxu0 0
        %2501 = vmatprep.subr.bf16.mxu0 0
        %2502 = vmatpush1.bf16.msra.mxu0 0
        %2503 = vmatprep.subr.bf16.mxu0 0
        %2504 = vmatpush1.bf16.msra.mxu0 0
        %2505 = vmatprep.subr.bf16.mxu0 0
        %2506 = vmatpush1.bf16.msra.mxu0 0
        %2507 = vmatprep.subr.bf16.mxu0 0
        %2508 = vmatpush1.bf16.msra.mxu0 0
        %2509 = vmatprep.mubr.bf16.mxu0 0
        %2510 = vmatmul.mubr.bf16.gmra.mrb[0].mxu0 %v2406
        %v2511 = vpop.f32.mrb[0].mxu0
        %v2512 = vadd.f32 0.0, %v2511
        %v2513 = vpop.f32.mrb[0].mxu0
        %v2514 = vadd.f32 0.0, %v2513
        %v2515 = vpop.f32.mrb[0].mxu0
        %v2516 = vadd.f32 0.0, %v2515
        %v2517 = vpop.f32.mrb[0].mxu0
        %v2518 = vadd.f32 0.0, %v2517
        %2519 = vmatprep.mubr.bf16.mxu0 0
        %2520 = vmatmul.mubr.bf16.gmra.mrb[0].mxu0 %v2409
        %v2521 = vpop.f32.mrb[0].mxu0
        %v2522 = vadd.f32 0.0, %v2521
        %v2523 = vpop.f32.mrb[0].mxu0
        %v2524 = vadd.f32 0.0, %v2523
        %v2525 = vpop.f32.mrb[0].mxu0
        %v2526 = vadd.f32 0.0, %v2525
        %v2527 = vpop.f32.mrb[0].mxu0
        %v2528 = vadd.f32 0.0, %v2527
        %2529 = vmatprep.mubr.bf16.mxu0 0
        %2530 = vmatmul.mubr.bf16.gmra.mrb[0].mxu0 %v2412
        %v2531 = vpop.f32.mrb[0].mxu0
        %v2532 = vadd.f32 0.0, %v2531
        %v2533 = vpop.f32.mrb[0].mxu0
        %v2534 = vadd.f32 0.0, %v2533
        %v2535 = vpop.f32.mrb[0].mxu0
        %v2536 = vadd.f32 0.0, %v2535
        %v2537 = vpop.f32.mrb[0].mxu0
        %v2538 = vadd.f32 0.0, %v2537
        %2539 = vmatprep.mubr.bf16.mxu0 0
        %2540 = vmatmul.mubr.bf16.gmra.mrb[0].mxu0 %v2415
        %v2541 = vpop.f32.mrb[0].mxu0
        %v2542 = vadd.f32 0.0, %v2541
        %v2543 = vpop.f32.mrb[0].mxu0
        %v2544 = vadd.f32 0.0, %v2543
        %v2545 = vpop.f32.mrb[0].mxu0
        %v2546 = vadd.f32 0.0, %v2545
        %v2547 = vpop.f32.mrb[0].mxu0
        %v2548 = vadd.f32 0.0, %v2547
        %2549 = vmatprep.mubr.bf16.mxu0 0
        %2550 = vmatmul.mubr.bf16.gmra.mrb[0].mxu0 %v2418
        %v2551 = vpop.f32.mrb[0].mxu0
        %v2552 = vadd.f32 0.0, %v2551
        %v2553 = vpop.f32.mrb[0].mxu0
        %v2554 = vadd.f32 0.0, %v2553
        %v2555 = vpop.f32.mrb[0].mxu0
        %v2556 = vadd.f32 0.0, %v2555
        %v2557 = vpop.f32.mrb[0].mxu0
        %v2558 = vadd.f32 0.0, %v2557
        %2559 = vmatprep.mubr.bf16.mxu0 0
        %2560 = vmatmul.mubr.bf16.gmra.mrb[0].mxu0 %v2421
        %v2561 = vpop.f32.mrb[0].mxu0
        %v2562 = vadd.f32 0.0, %v2561
        %v2563 = vpop.f32.mrb[0].mxu0
        %v2564 = vadd.f32 0.0, %v2563
        %v2565 = vpop.f32.mrb[0].mxu0
        %v2566 = vadd.f32 0.0, %v2565
        %v2567 = vpop.f32.mrb[0].mxu0
        %v2568 = vadd.f32 0.0, %v2567
        %2569 = vmatprep.mubr.bf16.mxu0 0
        %2570 = vmatmul.mubr.bf16.gmra.mrb[0].mxu0 %v2424
        %v2571 = vpop.f32.mrb[0].mxu0
        %v2572 = vadd.f32 0.0, %v2571
        %v2573 = vpop.f32.mrb[0].mxu0
        %v2574 = vadd.f32 0.0, %v2573
        %v2575 = vpop.f32.mrb[0].mxu0
        %v2576 = vadd.f32 0.0, %v2575
        %v2577 = vpop.f32.mrb[0].mxu0
        %v2578 = vadd.f32 0.0, %v2577
        %2579 = vmatprep.mubr.bf16.mxu0 0
        %2580 = vmatmul.mubr.bf16.gmra.mrb[0].mxu0 %v2427
        %v2581 = vpop.f32.mrb[0].mxu0
        %v2582 = vadd.f32 0.0, %v2581
        %v2583 = vpop.f32.mrb[0].mxu0
        %v2584 = vadd.f32 0.0, %v2583
        %v2585 = vpop.f32.mrb[0].mxu0
        %v2586 = vadd.f32 0.0, %v2585
        %v2587 = vpop.f32.mrb[0].mxu0
        %v2588 = vadd.f32 0.0, %v2587
        %2589 = vdwg.mxu0
        %2590 = vmatprep.subr.bf16.mxu0 %v2272
        %2591 = vmatpush1.bf16.msra.mxu0 %v2271
        %2592 = vmatprep.subr.bf16.mxu0 %v2288
        %2593 = vmatpush1.bf16.msra.mxu0 %v2287
        %2594 = vmatprep.subr.bf16.mxu0 %v2304
        %2595 = vmatpush1.bf16.msra.mxu0 %v2303
        %2596 = vmatprep.subr.bf16.mxu0 %v2320
        %2597 = vmatpush1.bf16.msra.mxu0 %v2319
        %2598 = vmatprep.subr.bf16.mxu0 %v2439
        %2599 = vmatpush1.bf16.msra.mxu0 %v2436
        %2600 = vmatprep.subr.bf16.mxu0 0
        %2601 = vmatpush1.bf16.msra.mxu0 0
        %2602 = vmatprep.subr.bf16.mxu0 0
        %2603 = vmatpush1.bf16.msra.mxu0 0
        %2604 = vmatprep.subr.bf16.mxu0 0
        %2605 = vmatpush1.bf16.msra.mxu0 0
        %2606 = vmatprep.subr.bf16.mxu0 0
        %2607 = vmatpush1.bf16.msra.mxu0 0
        %2608 = vmatprep.subr.bf16.mxu0 0
        %2609 = vmatpush1.bf16.msra.mxu0 0
        %2610 = vmatprep.subr.bf16.mxu0 0
        %2611 = vmatpush1.bf16.msra.mxu0 0
        %2612 = vmatprep.subr.bf16.mxu0 0
        %2613 = vmatpush1.bf16.msra.mxu0 0
        %2614 = vmatprep.subr.bf16.mxu0 0
        %2615 = vmatpush1.bf16.msra.mxu0 0
        %2616 = vmatprep.subr.bf16.mxu0 0
        %2617 = vmatpush1.bf16.msra.mxu0 0
        %2618 = vmatprep.subr.bf16.mxu0 0
        %2619 = vmatpush1.bf16.msra.mxu0 0
        %2620 = vmatprep.subr.bf16.mxu0 0
        %2621 = vmatpush1.bf16.msra.mxu0 0
        %2622 = vmatprep.mubr.bf16.mxu0 0
        %2623 = vmatmul.mubr.bf16.gmra.mrb[0].mxu0 %v2406
        %v2624 = vpop.f32.mrb[0].mxu0
        %v2625 = vadd.f32 0.0, %v2624
        %v2626 = vpop.f32.mrb[0].mxu0
        %v2627 = vadd.f32 0.0, %v2626
        %v2628 = vpop.f32.mrb[0].mxu0
        %v2629 = vadd.f32 0.0, %v2628
        %v2630 = vpop.f32.mrb[0].mxu0
        %v2631 = vadd.f32 0.0, %v2630
        %2632 = vmatprep.mubr.bf16.mxu0 0
        %2633 = vmatmul.mubr.bf16.gmra.mrb[0].mxu0 %v2409
        %v2634 = vpop.f32.mrb[0].mxu0
        %v2635 = vadd.f32 0.0, %v2634
        %v2636 = vpop.f32.mrb[0].mxu0
        %v2637 = vadd.f32 0.0, %v2636
        %v2638 = vpop.f32.mrb[0].mxu0
        %v2639 = vadd.f32 0.0, %v2638
        %v2640 = vpop.f32.mrb[0].mxu0
        %v2641 = vadd.f32 0.0, %v2640
        %2642 = vmatprep.mubr.bf16.mxu0 0
        %2643 = vmatmul.mubr.bf16.gmra.mrb[0].mxu0 %v2412
        %v2644 = vpop.f32.mrb[0].mxu0
        %v2645 = vadd.f32 0.0, %v2644
        %v2646 = vpop.f32.mrb[0].mxu0
        %v2647 = vadd.f32 0.0, %v2646
        %v2648 = vpop.f32.mrb[0].mxu0
        %v2649 = vadd.f32 0.0, %v2648
        %v2650 = vpop.f32.mrb[0].mxu0
        %v2651 = vadd.f32 0.0, %v2650
        %2652 = vmatprep.mubr.bf16.mxu0 0
        %2653 = vmatmul.mubr.bf16.gmra.mrb[0].mxu0 %v2415
        %v2654 = vpop.f32.mrb[0].mxu0
        %v2655 = vadd.f32 0.0, %v2654
        %v2656 = vpop.f32.mrb[0].mxu0
        %v2657 = vadd.f32 0.0, %v2656
        %v2658 = vpop.f32.mrb[0].mxu0
        %v2659 = vadd.f32 0.0, %v2658
        %v2660 = vpop.f32.mrb[0].mxu0
        %v2661 = vadd.f32 0.0, %v2660
        %2662 = vmatprep.mubr.bf16.mxu0 0
        %2663 = vmatmul.mubr.bf16.gmra.mrb[0].mxu0 %v2418
        %v2664 = vpop.f32.mrb[0].mxu0
        %v2665 = vadd.f32 0.0, %v2664
        %v2666 = vpop.f32.mrb[0].mxu0
        %v2667 = vadd.f32 0.0, %v2666
        %v2668 = vpop.f32.mrb[0].mxu0
        %v2669 = vadd.f32 0.0, %v2668
        %v2670 = vpop.f32.mrb[0].mxu0
        %v2671 = vadd.f32 0.0, %v2670
        %2672 = vmatprep.mubr.bf16.mxu0 0
        %2673 = vmatmul.mubr.bf16.gmra.mrb[0].mxu0 %v2421
        %v2674 = vpop.f32.mrb[0].mxu0
        %v2675 = vadd.f32 0.0, %v2674
        %v2676 = vpop.f32.mrb[0].mxu0
        %v2677 = vadd.f32 0.0, %v2676
        %v2678 = vpop.f32.mrb[0].mxu0
        %v2679 = vadd.f32 0.0, %v2678
        %v2680 = vpop.f32.mrb[0].mxu0
        %v2681 = vadd.f32 0.0, %v2680
        %2682 = vmatprep.mubr.bf16.mxu0 0
        %2683 = vmatmul.mubr.bf16.gmra.mrb[0].mxu0 %v2424
        %v2684 = vpop.f32.mrb[0].mxu0
        %v2685 = vadd.f32 0.0, %v2684
        %v2686 = vpop.f32.mrb[0].mxu0
        %v2687 = vadd.f32 0.0, %v2686
        %v2688 = vpop.f32.mrb[0].mxu0
        %v2689 = vadd.f32 0.0, %v2688
        %v2690 = vpop.f32.mrb[0].mxu0
        %v2691 = vadd.f32 0.0, %v2690
        %2692 = vmatprep.mubr.bf16.mxu0 0
        %2693 = vmatmul.mubr.bf16.gmra.mrb[0].mxu0 %v2427
        %v2694 = vpop.f32.mrb[0].mxu0
        %v2695 = vadd.f32 0.0, %v2694
        %v2696 = vpop.f32.mrb[0].mxu0
        %v2697 = vadd.f32 0.0, %v2696
        %v2698 = vpop.f32.mrb[0].mxu0
        %v2699 = vadd.f32 0.0, %v2698
        %v2700 = vpop.f32.mrb[0].mxu0
        %v2701 = vadd.f32 0.0, %v2700
        %2702 = vdwg.mxu0
        %2703 = vmatprep.subr.bf16.mxu0 %v2274
        %2704 = vmatpush1.bf16.msra.mxu0 %v2273
        %2705 = vmatprep.subr.bf16.mxu0 %v2290
        %2706 = vmatpush1.bf16.msra.mxu0 %v2289
        %2707 = vmatprep.subr.bf16.mxu0 %v2306
        %2708 = vmatpush1.bf16.msra.mxu0 %v2305
        %2709 = vmatprep.subr.bf16.mxu0 %v2322
        %2710 = vmatpush1.bf16.msra.mxu0 %v2321
        %2711 = vmatprep.subr.bf16.mxu0 %v2445
        %2712 = vmatpush1.bf16.msra.mxu0 %v2442
        %2713 = vmatprep.subr.bf16.mxu0 0
        %2714 = vmatpush1.bf16.msra.mxu0 0
        %2715 = vmatprep.subr.bf16.mxu0 0
        %2716 = vmatpush1.bf16.msra.mxu0 0
        %2717 = vmatprep.subr.bf16.mxu0 0
        %2718 = vmatpush1.bf16.msra.mxu0 0
        %2719 = vmatprep.subr.bf16.mxu0 0
        %2720 = vmatpush1.bf16.msra.mxu0 0
        %2721 = vmatprep.subr.bf16.mxu0 0
        %2722 = vmatpush1.bf16.msra.mxu0 0
        %2723 = vmatprep.subr.bf16.mxu0 0
        %2724 = vmatpush1.bf16.msra.mxu0 0
        %2725 = vmatprep.subr.bf16.mxu0 0
        %2726 = vmatpush1.bf16.msra.mxu0 0
        %2727 = vmatprep.subr.bf16.mxu0 0
        %2728 = vmatpush1.bf16.msra.mxu0 0
        %2729 = vmatprep.subr.bf16.mxu0 0
        %2730 = vmatpush1.bf16.msra.mxu0 0
        %2731 = vmatprep.subr.bf16.mxu0 0
        %2732 = vmatpush1.bf16.msra.mxu0 0
        %2733 = vmatprep.subr.bf16.mxu0 0
        %2734 = vmatpush1.bf16.msra.mxu0 0
        %2735 = vmatprep.mubr.bf16.mxu0 0
        %2736 = vmatmul.mubr.bf16.gmra.mrb[0].mxu0 %v2406
        %v2737 = vpop.f32.mrb[0].mxu0
        %v2738 = vadd.f32 0.0, %v2737
        %v2739 = vpop.f32.mrb[0].mxu0
        %v2740 = vadd.f32 0.0, %v2739
        %v2741 = vpop.f32.mrb[0].mxu0
        %v2742 = vadd.f32 0.0, %v2741
        %v2743 = vpop.f32.mrb[0].mxu0
        %v2744 = vadd.f32 0.0, %v2743
        %2745 = vmatprep.mubr.bf16.mxu0 0
        %2746 = vmatmul.mubr.bf16.gmra.mrb[0].mxu0 %v2409
        %v2747 = vpop.f32.mrb[0].mxu0
        %v2748 = vadd.f32 0.0, %v2747
        %v2749 = vpop.f32.mrb[0].mxu0
        %v2750 = vadd.f32 0.0, %v2749
        %v2751 = vpop.f32.mrb[0].mxu0
        %v2752 = vadd.f32 0.0, %v2751
        %v2753 = vpop.f32.mrb[0].mxu0
        %v2754 = vadd.f32 0.0, %v2753
        %2755 = vmatprep.mubr.bf16.mxu0 0
        %2756 = vmatmul.mubr.bf16.gmra.mrb[0].mxu0 %v2412
        %v2757 = vpop.f32.mrb[0].mxu0
        %v2758 = vadd.f32 0.0, %v2757
        %v2759 = vpop.f32.mrb[0].mxu0
        %v2760 = vadd.f32 0.0, %v2759
        %v2761 = vpop.f32.mrb[0].mxu0
        %v2762 = vadd.f32 0.0, %v2761
        %v2763 = vpop.f32.mrb[0].mxu0
        %v2764 = vadd.f32 0.0, %v2763
        %2765 = vmatprep.mubr.bf16.mxu0 0
        %2766 = vmatmul.mubr.bf16.gmra.mrb[0].mxu0 %v2415
        %v2767 = vpop.f32.mrb[0].mxu0
        %v2768 = vadd.f32 0.0, %v2767
        %v2769 = vpop.f32.mrb[0].mxu0
        %v2770 = vadd.f32 0.0, %v2769
        %v2771 = vpop.f32.mrb[0].mxu0
        %v2772 = vadd.f32 0.0, %v2771
        %v2773 = vpop.f32.mrb[0].mxu0
        %v2774 = vadd.f32 0.0, %v2773
        %2775 = vmatprep.mubr.bf16.mxu0 0
        %2776 = vmatmul.mubr.bf16.gmra.mrb[0].mxu0 %v2418
        %v2777 = vpop.f32.mrb[0].mxu0
        %v2778 = vadd.f32 0.0, %v2777
        %v2779 = vpop.f32.mrb[0].mxu0
        %v2780 = vadd.f32 0.0, %v2779
        %v2781 = vpop.f32.mrb[0].mxu0
        %v2782 = vadd.f32 0.0, %v2781
        %v2783 = vpop.f32.mrb[0].mxu0
        %v2784 = vadd.f32 0.0, %v2783
        %2785 = vmatprep.mubr.bf16.mxu0 0
        %2786 = vmatmul.mubr.bf16.gmra.mrb[0].mxu0 %v2421
        %v2787 = vpop.f32.mrb[0].mxu0
        %v2788 = vadd.f32 0.0, %v2787
        %v2789 = vpop.f32.mrb[0].mxu0
        %v2790 = vadd.f32 0.0, %v2789
        %v2791 = vpop.f32.mrb[0].mxu0
        %v2792 = vadd.f32 0.0, %v2791
        %v2793 = vpop.f32.mrb[0].mxu0
        %v2794 = vadd.f32 0.0, %v2793
        %2795 = vmatprep.mubr.bf16.mxu0 0
        %2796 = vmatmul.mubr.bf16.gmra.mrb[0].mxu0 %v2424
        %v2797 = vpop.f32.mrb[0].mxu0
        %v2798 = vadd.f32 0.0, %v2797
        %v2799 = vpop.f32.mrb[0].mxu0
        %v2800 = vadd.f32 0.0, %v2799
        %v2801 = vpop.f32.mrb[0].mxu0
        %v2802 = vadd.f32 0.0, %v2801
        %v2803 = vpop.f32.mrb[0].mxu0
        %v2804 = vadd.f32 0.0, %v2803
        %2805 = vmatprep.mubr.bf16.mxu0 0
        %2806 = vmatmul.mubr.bf16.gmra.mrb[0].mxu0 %v2427
        %v2807 = vpop.f32.mrb[0].mxu0
        %v2808 = vadd.f32 0.0, %v2807
        %v2809 = vpop.f32.mrb[0].mxu0
        %v2810 = vadd.f32 0.0, %v2809
        %v2811 = vpop.f32.mrb[0].mxu0
        %v2812 = vadd.f32 0.0, %v2811
        %v2813 = vpop.f32.mrb[0].mxu0
        %v2814 = vadd.f32 0.0, %v2813
        %2815 = vdwg.mxu0
        %2816 = vmatprep.subr.bf16.mxu0 %v2276
        %2817 = vmatpush1.bf16.msra.mxu0 %v2275
        %2818 = vmatprep.subr.bf16.mxu0 %v2292
        %2819 = vmatpush1.bf16.msra.mxu0 %v2291
        %2820 = vmatprep.subr.bf16.mxu0 %v2308
        %2821 = vmatpush1.bf16.msra.mxu0 %v2307
        %2822 = vmatprep.subr.bf16.mxu0 %v2324
        %2823 = vmatpush1.bf16.msra.mxu0 %v2323
        %2824 = vmatprep.subr.bf16.mxu0 %v2451
        %2825 = vmatpush1.bf16.msra.mxu0 %v2448
        %2826 = vmatprep.subr.bf16.mxu0 0
        %2827 = vmatpush1.bf16.msra.mxu0 0
        %2828 = vmatprep.subr.bf16.mxu0 0
        %2829 = vmatpush1.bf16.msra.mxu0 0
        %2830 = vmatprep.subr.bf16.mxu0 0
        %2831 = vmatpush1.bf16.msra.mxu0 0
        %2832 = vmatprep.subr.bf16.mxu0 0
        %2833 = vmatpush1.bf16.msra.mxu0 0
        %2834 = vmatprep.subr.bf16.mxu0 0
        %2835 = vmatpush1.bf16.msra.mxu0 0
        %2836 = vmatprep.subr.bf16.mxu0 0
        %2837 = vmatpush1.bf16.msra.mxu0 0
        %2838 = vmatprep.subr.bf16.mxu0 0
        %2839 = vmatpush1.bf16.msra.mxu0 0
        %2840 = vmatprep.subr.bf16.mxu0 0
        %2841 = vmatpush1.bf16.msra.mxu0 0
        %2842 = vmatprep.subr.bf16.mxu0 0
        %2843 = vmatpush1.bf16.msra.mxu0 0
        %2844 = vmatprep.subr.bf16.mxu0 0
        %2845 = vmatpush1.bf16.msra.mxu0 0
        %2846 = vmatprep.subr.bf16.mxu0 0
        %2847 = vmatpush1.bf16.msra.mxu0 0
        %2848 = vmatprep.mubr.bf16.mxu0 0
        %2849 = vmatmul.mubr.bf16.gmra.mrb[0].mxu0 %v2406
        %v2850 = vpop.f32.mrb[0].mxu0
        %v2851 = vadd.f32 0.0, %v2850
        %v2852 = vpop.f32.mrb[0].mxu0
        %v2853 = vadd.f32 0.0, %v2852
        %v2854 = vpop.f32.mrb[0].mxu0
        %v2855 = vadd.f32 0.0, %v2854
        %v2856 = vpop.f32.mrb[0].mxu0
        %v2857 = vadd.f32 0.0, %v2856
        %2858 = vmatprep.mubr.bf16.mxu0 0
        %2859 = vmatmul.mubr.bf16.gmra.mrb[0].mxu0 %v2409
        %v2860 = vpop.f32.mrb[0].mxu0
        %v2861 = vadd.f32 0.0, %v2860
        %v2862 = vpop.f32.mrb[0].mxu0
        %v2863 = vadd.f32 0.0, %v2862
        %v2864 = vpop.f32.mrb[0].mxu0
        %v2865 = vadd.f32 0.0, %v2864
        %v2866 = vpop.f32.mrb[0].mxu0
        %v2867 = vadd.f32 0.0, %v2866
        %2868 = vmatprep.mubr.bf16.mxu0 0
        %2869 = vmatmul.mubr.bf16.gmra.mrb[0].mxu0 %v2412
        %v2870 = vpop.f32.mrb[0].mxu0
        %v2871 = vadd.f32 0.0, %v2870
        %v2872 = vpop.f32.mrb[0].mxu0
        %v2873 = vadd.f32 0.0, %v2872
        %v2874 = vpop.f32.mrb[0].mxu0
        %v2875 = vadd.f32 0.0, %v2874
        %v2876 = vpop.f32.mrb[0].mxu0
        %v2877 = vadd.f32 0.0, %v2876
        %2878 = vmatprep.mubr.bf16.mxu0 0
        %2879 = vmatmul.mubr.bf16.gmra.mrb[0].mxu0 %v2415
        %v2880 = vpop.f32.mrb[0].mxu0
        %v2881 = vadd.f32 0.0, %v2880
        %v2882 = vpop.f32.mrb[0].mxu0
        %v2883 = vadd.f32 0.0, %v2882
        %v2884 = vpop.f32.mrb[0].mxu0
        %v2885 = vadd.f32 0.0, %v2884
        %v2886 = vpop.f32.mrb[0].mxu0
        %v2887 = vadd.f32 0.0, %v2886
        %2888 = vmatprep.mubr.bf16.mxu0 0
        %2889 = vmatmul.mubr.bf16.gmra.mrb[0].mxu0 %v2418
        %v2890 = vpop.f32.mrb[0].mxu0
        %v2891 = vadd.f32 0.0, %v2890
        %v2892 = vpop.f32.mrb[0].mxu0
        %v2893 = vadd.f32 0.0, %v2892
        %v2894 = vpop.f32.mrb[0].mxu0
        %v2895 = vadd.f32 0.0, %v2894
        %v2896 = vpop.f32.mrb[0].mxu0
        %v2897 = vadd.f32 0.0, %v2896
        %2898 = vmatprep.mubr.bf16.mxu0 0
        %2899 = vmatmul.mubr.bf16.gmra.mrb[0].mxu0 %v2421
        %v2900 = vpop.f32.mrb[0].mxu0
        %v2901 = vadd.f32 0.0, %v2900
        %v2902 = vpop.f32.mrb[0].mxu0
        %v2903 = vadd.f32 0.0, %v2902
        %v2904 = vpop.f32.mrb[0].mxu0
        %v2905 = vadd.f32 0.0, %v2904
        %v2906 = vpop.f32.mrb[0].mxu0
        %v2907 = vadd.f32 0.0, %v2906
        %2908 = vmatprep.mubr.bf16.mxu0 0
        %2909 = vmatmul.mubr.bf16.gmra.mrb[0].mxu0 %v2424
        %v2910 = vpop.f32.mrb[0].mxu0
        %v2911 = vadd.f32 0.0, %v2910
        %v2912 = vpop.f32.mrb[0].mxu0
        %v2913 = vadd.f32 0.0, %v2912
        %v2914 = vpop.f32.mrb[0].mxu0
        %v2915 = vadd.f32 0.0, %v2914
        %v2916 = vpop.f32.mrb[0].mxu0
        %v2917 = vadd.f32 0.0, %v2916
        %2918 = vmatprep.mubr.bf16.mxu0 0
        %2919 = vmatmul.mubr.bf16.gmra.mrb[0].mxu0 %v2427
        %v2920 = vpop.f32.mrb[0].mxu0
        %v2921 = vadd.f32 0.0, %v2920
        %v2922 = vpop.f32.mrb[0].mxu0
        %v2923 = vadd.f32 0.0, %v2922
        %v2924 = vpop.f32.mrb[0].mxu0
        %v2925 = vadd.f32 0.0, %v2924
        %v2926 = vpop.f32.mrb[0].mxu0
        %v2927 = vadd.f32 0.0, %v2926
        %2928 = vdwg.mxu0
        %2929 = vmatprep.subr.bf16.mxu0 %v2278
        %2930 = vmatpush1.bf16.msra.mxu0 %v2277
        %2931 = vmatprep.subr.bf16.mxu0 %v2294
        %2932 = vmatpush1.bf16.msra.mxu0 %v2293
        %2933 = vmatprep.subr.bf16.mxu0 %v2310
        %2934 = vmatpush1.bf16.msra.mxu0 %v2309
        %2935 = vmatprep.subr.bf16.mxu0 %v2326
        %2936 = vmatpush1.bf16.msra.mxu0 %v2325
        %2937 = vmatprep.subr.bf16.mxu0 %v2457
        %2938 = vmatpush1.bf16.msra.mxu0 %v2454
        %2939 = vmatprep.subr.bf16.mxu0 0
        %2940 = vmatpush1.bf16.msra.mxu0 0
        %2941 = vmatprep.subr.bf16.mxu0 0
        %2942 = vmatpush1.bf16.msra.mxu0 0
        %2943 = vmatprep.subr.bf16.mxu0 0
        %2944 = vmatpush1.bf16.msra.mxu0 0
        %2945 = vmatprep.subr.bf16.mxu0 0
        %2946 = vmatpush1.bf16.msra.mxu0 0
        %2947 = vmatprep.subr.bf16.mxu0 0
        %2948 = vmatpush1.bf16.msra.mxu0 0
        %2949 = vmatprep.subr.bf16.mxu0 0
        %2950 = vmatpush1.bf16.msra.mxu0 0
        %2951 = vmatprep.subr.bf16.mxu0 0
        %2952 = vmatpush1.bf16.msra.mxu0 0
        %2953 = vmatprep.subr.bf16.mxu0 0
        %2954 = vmatpush1.bf16.msra.mxu0 0
        %2955 = vmatprep.subr.bf16.mxu0 0
        %2956 = vmatpush1.bf16.msra.mxu0 0
        %2957 = vmatprep.subr.bf16.mxu0 0
        %2958 = vmatpush1.bf16.msra.mxu0 0
        %2959 = vmatprep.subr.bf16.mxu0 0
        %2960 = vmatpush1.bf16.msra.mxu0 0
        %2961 = vmatprep.mubr.bf16.mxu0 0
        %2962 = vmatmul.mubr.bf16.gmra.mrb[0].mxu0 %v2406
        %v2963 = vpop.f32.mrb[0].mxu0
        %v2964 = vadd.f32 0.0, %v2963
        %v2965 = vpop.f32.mrb[0].mxu0
        %v2966 = vadd.f32 0.0, %v2965
        %v2967 = vpop.f32.mrb[0].mxu0
        %v2968 = vadd.f32 0.0, %v2967
        %v2969 = vpop.f32.mrb[0].mxu0
        %v2970 = vadd.f32 0.0, %v2969
        %2971 = vmatprep.mubr.bf16.mxu0 0
        %2972 = vmatmul.mubr.bf16.gmra.mrb[0].mxu0 %v2409
        %v2973 = vpop.f32.mrb[0].mxu0
        %v2974 = vadd.f32 0.0, %v2973
        %v2975 = vpop.f32.mrb[0].mxu0
        %v2976 = vadd.f32 0.0, %v2975
        %v2977 = vpop.f32.mrb[0].mxu0
        %v2978 = vadd.f32 0.0, %v2977
        %v2979 = vpop.f32.mrb[0].mxu0
        %v2980 = vadd.f32 0.0, %v2979
        %2981 = vmatprep.mubr.bf16.mxu0 0
        %2982 = vmatmul.mubr.bf16.gmra.mrb[0].mxu0 %v2412
        %v2983 = vpop.f32.mrb[0].mxu0
        %v2984 = vadd.f32 0.0, %v2983
        %v2985 = vpop.f32.mrb[0].mxu0
        %v2986 = vadd.f32 0.0, %v2985
        %v2987 = vpop.f32.mrb[0].mxu0
        %v2988 = vadd.f32 0.0, %v2987
        %v2989 = vpop.f32.mrb[0].mxu0
        %v2990 = vadd.f32 0.0, %v2989
        %2991 = vmatprep.mubr.bf16.mxu0 0
        %2992 = vmatmul.mubr.bf16.gmra.mrb[0].mxu0 %v2415
        %v2993 = vpop.f32.mrb[0].mxu0
        %v2994 = vadd.f32 0.0, %v2993
        %v2995 = vpop.f32.mrb[0].mxu0
        %v2996 = vadd.f32 0.0, %v2995
        %v2997 = vpop.f32.mrb[0].mxu0
        %v2998 = vadd.f32 0.0, %v2997
        %v2999 = vpop.f32.mrb[0].mxu0
        %v3000 = vadd.f32 0.0, %v2999
        %3001 = vmatprep.mubr.bf16.mxu0 0
        %3002 = vmatmul.mubr.bf16.gmra.mrb[0].mxu0 %v2418
        %v3003 = vpop.f32.mrb[0].mxu0
        %v3004 = vadd.f32 0.0, %v3003
        %v3005 = vpop.f32.mrb[0].mxu0
        %v3006 = vadd.f32 0.0, %v3005
        %v3007 = vpop.f32.mrb[0].mxu0
        %v3008 = vadd.f32 0.0, %v3007
        %v3009 = vpop.f32.mrb[0].mxu0
        %v3010 = vadd.f32 0.0, %v3009
        %3011 = vmatprep.mubr.bf16.mxu0 0
        %3012 = vmatmul.mubr.bf16.gmra.mrb[0].mxu0 %v2421
        %v3013 = vpop.f32.mrb[0].mxu0
        %v3014 = vadd.f32 0.0, %v3013
        %v3015 = vpop.f32.mrb[0].mxu0
        %v3016 = vadd.f32 0.0, %v3015
        %v3017 = vpop.f32.mrb[0].mxu0
        %v3018 = vadd.f32 0.0, %v3017
        %v3019 = vpop.f32.mrb[0].mxu0
        %v3020 = vadd.f32 0.0, %v3019
        %3021 = vmatprep.mubr.bf16.mxu0 0
        %3022 = vmatmul.mubr.bf16.gmra.mrb[0].mxu0 %v2424
        %v3023 = vpop.f32.mrb[0].mxu0
        %v3024 = vadd.f32 0.0, %v3023
        %v3025 = vpop.f32.mrb[0].mxu0
        %v3026 = vadd.f32 0.0, %v3025
        %v3027 = vpop.f32.mrb[0].mxu0
        %v3028 = vadd.f32 0.0, %v3027
        %v3029 = vpop.f32.mrb[0].mxu0
        %v3030 = vadd.f32 0.0, %v3029
        %3031 = vmatprep.mubr.bf16.mxu0 0
        %3032 = vmatmul.mubr.bf16.gmra.mrb[0].mxu0 %v2427
        %v3033 = vpop.f32.mrb[0].mxu0
        %v3034 = vadd.f32 0.0, %v3033
        %v3035 = vpop.f32.mrb[0].mxu0
        %v3036 = vadd.f32 0.0, %v3035
        %v3037 = vpop.f32.mrb[0].mxu0
        %v3038 = vadd.f32 0.0, %v3037
        %v3039 = vpop.f32.mrb[0].mxu0
        %v3040 = vadd.f32 0.0, %v3039
        %3041 = vdwg.mxu0
        %3042 = vmatprep.subr.bf16.mxu0 %v2280
        %3043 = vmatpush1.bf16.msra.mxu0 %v2279
        %3044 = vmatprep.subr.bf16.mxu0 %v2296
        %3045 = vmatpush1.bf16.msra.mxu0 %v2295
        %3046 = vmatprep.subr.bf16.mxu0 %v2312
        %3047 = vmatpush1.bf16.msra.mxu0 %v2311
        %3048 = vmatprep.subr.bf16.mxu0 %v2328
        %3049 = vmatpush1.bf16.msra.mxu0 %v2327
        %3050 = vmatprep.subr.bf16.mxu0 %v2463
        %3051 = vmatpush1.bf16.msra.mxu0 %v2460
        %3052 = vmatprep.subr.bf16.mxu0 0
        %3053 = vmatpush1.bf16.msra.mxu0 0
        %3054 = vmatprep.subr.bf16.mxu0 0
        %3055 = vmatpush1.bf16.msra.mxu0 0
        %3056 = vmatprep.subr.bf16.mxu0 0
        %3057 = vmatpush1.bf16.msra.mxu0 0
        %3058 = vmatprep.subr.bf16.mxu0 0
        %3059 = vmatpush1.bf16.msra.mxu0 0
        %3060 = vmatprep.subr.bf16.mxu0 0
        %3061 = vmatpush1.bf16.msra.mxu0 0
        %3062 = vmatprep.subr.bf16.mxu0 0
        %3063 = vmatpush1.bf16.msra.mxu0 0
        %3064 = vmatprep.subr.bf16.mxu0 0
        %3065 = vmatpush1.bf16.msra.mxu0 0
        %3066 = vmatprep.subr.bf16.mxu0 0
        %3067 = vmatpush1.bf16.msra.mxu0 0
        %3068 = vmatprep.subr.bf16.mxu0 0
        %3069 = vmatpush1.bf16.msra.mxu0 0
        %3070 = vmatprep.subr.bf16.mxu0 0
        %3071 = vmatpush1.bf16.msra.mxu0 0
        %3072 = vmatprep.subr.bf16.mxu0 0
        %3073 = vmatpush1.bf16.msra.mxu0 0
        %3074 = vmatprep.mubr.bf16.mxu0 0
        %3075 = vmatmul.mubr.bf16.gmra.mrb[0].mxu0 %v2406
        %v3076 = vpop.f32.mrb[0].mxu0
        %v3077 = vadd.f32 0.0, %v3076
        %v3078 = vpop.f32.mrb[0].mxu0
        %v3079 = vadd.f32 0.0, %v3078
        %v3080 = vpop.f32.mrb[0].mxu0
        %v3081 = vadd.f32 0.0, %v3080
        %v3082 = vpop.f32.mrb[0].mxu0
        %v3083 = vadd.f32 0.0, %v3082
        %3084 = vmatprep.mubr.bf16.mxu0 0
        %3085 = vmatmul.mubr.bf16.gmra.mrb[0].mxu0 %v2409
        %v3086 = vpop.f32.mrb[0].mxu0
        %v3087 = vadd.f32 0.0, %v3086
        %v3088 = vpop.f32.mrb[0].mxu0
        %v3089 = vadd.f32 0.0, %v3088
        %v3090 = vpop.f32.mrb[0].mxu0
        %v3091 = vadd.f32 0.0, %v3090
        %v3092 = vpop.f32.mrb[0].mxu0
        %v3093 = vadd.f32 0.0, %v3092
        %3094 = vmatprep.mubr.bf16.mxu0 0
        %3095 = vmatmul.mubr.bf16.gmra.mrb[0].mxu0 %v2412
        %v3096 = vpop.f32.mrb[0].mxu0
        %v3097 = vadd.f32 0.0, %v3096
        %v3098 = vpop.f32.mrb[0].mxu0
        %v3099 = vadd.f32 0.0, %v3098
        %v3100 = vpop.f32.mrb[0].mxu0
        %v3101 = vadd.f32 0.0, %v3100
        %v3102 = vpop.f32.mrb[0].mxu0
        %v3103 = vadd.f32 0.0, %v3102
        %3104 = vmatprep.mubr.bf16.mxu0 0
        %3105 = vmatmul.mubr.bf16.gmra.mrb[0].mxu0 %v2415
        %v3106 = vpop.f32.mrb[0].mxu0
        %v3107 = vadd.f32 0.0, %v3106
        %v3108 = vpop.f32.mrb[0].mxu0
        %v3109 = vadd.f32 0.0, %v3108
        %v3110 = vpop.f32.mrb[0].mxu0
        %v3111 = vadd.f32 0.0, %v3110
        %v3112 = vpop.f32.mrb[0].mxu0
        %v3113 = vadd.f32 0.0, %v3112
        %3114 = vmatprep.mubr.bf16.mxu0 0
        %3115 = vmatmul.mubr.bf16.gmra.mrb[0].mxu0 %v2418
        %v3116 = vpop.f32.mrb[0].mxu0
        %v3117 = vadd.f32 0.0, %v3116
        %v3118 = vpop.f32.mrb[0].mxu0
        %v3119 = vadd.f32 0.0, %v3118
        %v3120 = vpop.f32.mrb[0].mxu0
        %v3121 = vadd.f32 0.0, %v3120
        %v3122 = vpop.f32.mrb[0].mxu0
        %v3123 = vadd.f32 0.0, %v3122
        %3124 = vmatprep.mubr.bf16.mxu0 0
        %3125 = vmatmul.mubr.bf16.gmra.mrb[0].mxu0 %v2421
        %v3126 = vpop.f32.mrb[0].mxu0
        %v3127 = vadd.f32 0.0, %v3126
        %v3128 = vpop.f32.mrb[0].mxu0
        %v3129 = vadd.f32 0.0, %v3128
        %v3130 = vpop.f32.mrb[0].mxu0
        %v3131 = vadd.f32 0.0, %v3130
        %v3132 = vpop.f32.mrb[0].mxu0
        %v3133 = vadd.f32 0.0, %v3132
        %3134 = vmatprep.mubr.bf16.mxu0 0
        %3135 = vmatmul.mubr.bf16.gmra.mrb[0].mxu0 %v2424
        %v3136 = vpop.f32.mrb[0].mxu0
        %v3137 = vadd.f32 0.0, %v3136
        %v3138 = vpop.f32.mrb[0].mxu0
        %v3139 = vadd.f32 0.0, %v3138
        %v3140 = vpop.f32.mrb[0].mxu0
        %v3141 = vadd.f32 0.0, %v3140
        %v3142 = vpop.f32.mrb[0].mxu0
        %v3143 = vadd.f32 0.0, %v3142
        %3144 = vmatprep.mubr.bf16.mxu0 0
        %3145 = vmatmul.mubr.bf16.gmra.mrb[0].mxu0 %v2427
        %v3146 = vpop.f32.mrb[0].mxu0
        %v3147 = vadd.f32 0.0, %v3146
        %v3148 = vpop.f32.mrb[0].mxu0
        %v3149 = vadd.f32 0.0, %v3148
        %v3150 = vpop.f32.mrb[0].mxu0
        %v3151 = vadd.f32 0.0, %v3150
        %v3152 = vpop.f32.mrb[0].mxu0
        %v3153 = vadd.f32 0.0, %v3152
        %3154 = vdwg.mxu0
        %3155 = vmatprep.subr.bf16.mxu0 %v2282
        %3156 = vmatpush1.bf16.msra.mxu0 %v2281
        %3157 = vmatprep.subr.bf16.mxu0 %v2298
        %3158 = vmatpush1.bf16.msra.mxu0 %v2297
        %3159 = vmatprep.subr.bf16.mxu0 %v2314
        %3160 = vmatpush1.bf16.msra.mxu0 %v2313
        %3161 = vmatprep.subr.bf16.mxu0 %v2330
        %3162 = vmatpush1.bf16.msra.mxu0 %v2329
        %3163 = vmatprep.subr.bf16.mxu0 %v2469
        %3164 = vmatpush1.bf16.msra.mxu0 %v2466
        %3165 = vmatprep.subr.bf16.mxu0 0
        %3166 = vmatpush1.bf16.msra.mxu0 0
        %3167 = vmatprep.subr.bf16.mxu0 0
        %3168 = vmatpush1.bf16.msra.mxu0 0
        %3169 = vmatprep.subr.bf16.mxu0 0
        %3170 = vmatpush1.bf16.msra.mxu0 0
        %3171 = vmatprep.subr.bf16.mxu0 0
        %3172 = vmatpush1.bf16.msra.mxu0 0
        %3173 = vmatprep.subr.bf16.mxu0 0
        %3174 = vmatpush1.bf16.msra.mxu0 0
        %3175 = vmatprep.subr.bf16.mxu0 0
        %3176 = vmatpush1.bf16.msra.mxu0 0
        %3177 = vmatprep.subr.bf16.mxu0 0
        %3178 = vmatpush1.bf16.msra.mxu0 0
        %3179 = vmatprep.subr.bf16.mxu0 0
        %3180 = vmatpush1.bf16.msra.mxu0 0
        %3181 = vmatprep.subr.bf16.mxu0 0
        %3182 = vmatpush1.bf16.msra.mxu0 0
        %3183 = vmatprep.subr.bf16.mxu0 0
        %3184 = vmatpush1.bf16.msra.mxu0 0
        %3185 = vmatprep.subr.bf16.mxu0 0
        %3186 = vmatpush1.bf16.msra.mxu0 0
        %3187 = vmatprep.mubr.bf16.mxu0 0
        %3188 = vmatmul.mubr.bf16.gmra.mrb[0].mxu0 %v2406
        %v3189 = vpop.f32.mrb[0].mxu0
        %v3190 = vadd.f32 0.0, %v3189
        %v3191 = vpop.f32.mrb[0].mxu0
        %v3192 = vadd.f32 0.0, %v3191
        %v3193 = vpop.f32.mrb[0].mxu0
        %v3194 = vadd.f32 0.0, %v3193
        %v3195 = vpop.f32.mrb[0].mxu0
        %v3196 = vadd.f32 0.0, %v3195
        %3197 = vmatprep.mubr.bf16.mxu0 0
        %3198 = vmatmul.mubr.bf16.gmra.mrb[0].mxu0 %v2409
        %v3199 = vpop.f32.mrb[0].mxu0
        %v3200 = vadd.f32 0.0, %v3199
        %v3201 = vpop.f32.mrb[0].mxu0
        %v3202 = vadd.f32 0.0, %v3201
        %v3203 = vpop.f32.mrb[0].mxu0
        %v3204 = vadd.f32 0.0, %v3203
        %v3205 = vpop.f32.mrb[0].mxu0
        %v3206 = vadd.f32 0.0, %v3205
        %3207 = vmatprep.mubr.bf16.mxu0 0
        %3208 = vmatmul.mubr.bf16.gmra.mrb[0].mxu0 %v2412
        %v3209 = vpop.f32.mrb[0].mxu0
        %v3210 = vadd.f32 0.0, %v3209
        %v3211 = vpop.f32.mrb[0].mxu0
        %v3212 = vadd.f32 0.0, %v3211
        %v3213 = vpop.f32.mrb[0].mxu0
        %v3214 = vadd.f32 0.0, %v3213
        %v3215 = vpop.f32.mrb[0].mxu0
        %v3216 = vadd.f32 0.0, %v3215
        %3217 = vmatprep.mubr.bf16.mxu0 0
        %3218 = vmatmul.mubr.bf16.gmra.mrb[0].mxu0 %v2415
        %v3219 = vpop.f32.mrb[0].mxu0
        %v3220 = vadd.f32 0.0, %v3219
        %v3221 = vpop.f32.mrb[0].mxu0
        %v3222 = vadd.f32 0.0, %v3221
        %v3223 = vpop.f32.mrb[0].mxu0
        %v3224 = vadd.f32 0.0, %v3223
        %v3225 = vpop.f32.mrb[0].mxu0
        %v3226 = vadd.f32 0.0, %v3225
        %3227 = vmatprep.mubr.bf16.mxu0 0
        %3228 = vmatmul.mubr.bf16.gmra.mrb[0].mxu0 %v2418
        %v3229 = vpop.f32.mrb[0].mxu0
        %v3230 = vadd.f32 0.0, %v3229
        %v3231 = vpop.f32.mrb[0].mxu0
        %v3232 = vadd.f32 0.0, %v3231
        %v3233 = vpop.f32.mrb[0].mxu0
        %v3234 = vadd.f32 0.0, %v3233
        %v3235 = vpop.f32.mrb[0].mxu0
        %v3236 = vadd.f32 0.0, %v3235
        %3237 = vmatprep.mubr.bf16.mxu0 0
        %3238 = vmatmul.mubr.bf16.gmra.mrb[0].mxu0 %v2421
        %v3239 = vpop.f32.mrb[0].mxu0
        %v3240 = vadd.f32 0.0, %v3239
        %v3241 = vpop.f32.mrb[0].mxu0
        %v3242 = vadd.f32 0.0, %v3241
        %v3243 = vpop.f32.mrb[0].mxu0
        %v3244 = vadd.f32 0.0, %v3243
        %v3245 = vpop.f32.mrb[0].mxu0
        %v3246 = vadd.f32 0.0, %v3245
        %3247 = vmatprep.mubr.bf16.mxu0 0
        %3248 = vmatmul.mubr.bf16.gmra.mrb[0].mxu0 %v2424
        %v3249 = vpop.f32.mrb[0].mxu0
        %v3250 = vadd.f32 0.0, %v3249
        %v3251 = vpop.f32.mrb[0].mxu0
        %v3252 = vadd.f32 0.0, %v3251
        %v3253 = vpop.f32.mrb[0].mxu0
        %v3254 = vadd.f32 0.0, %v3253
        %v3255 = vpop.f32.mrb[0].mxu0
        %v3256 = vadd.f32 0.0, %v3255
        %3257 = vmatprep.mubr.bf16.mxu0 0
        %3258 = vmatmul.mubr.bf16.gmra.mrb[0].mxu0 %v2427
        %v3259 = vpop.f32.mrb[0].mxu0
        %v3260 = vadd.f32 0.0, %v3259
        %v3261 = vpop.f32.mrb[0].mxu0
        %v3262 = vadd.f32 0.0, %v3261
        %v3263 = vpop.f32.mrb[0].mxu0
        %v3264 = vadd.f32 0.0, %v3263
        %v3265 = vpop.f32.mrb[0].mxu0
        %v3266 = vadd.f32 0.0, %v3265
        %3267 = vdwg.mxu0
        %3268 = vmatprep.subr.bf16.mxu0 %v2284
        %3269 = vmatpush1.bf16.msra.mxu0 %v2283
        %3270 = vmatprep.subr.bf16.mxu0 %v2300
        %3271 = vmatpush1.bf16.msra.mxu0 %v2299
        %3272 = vmatprep.subr.bf16.mxu0 %v2316
        %3273 = vmatpush1.bf16.msra.mxu0 %v2315
        %3274 = vmatprep.subr.bf16.mxu0 %v2332
        %3275 = vmatpush1.bf16.msra.mxu0 %v2331
        %3276 = vmatprep.subr.bf16.mxu0 %v2475
        %3277 = vmatpush1.bf16.msra.mxu0 %v2472
        %3278 = vmatprep.subr.bf16.mxu0 0
        %3279 = vmatpush1.bf16.msra.mxu0 0
        %3280 = vmatprep.subr.bf16.mxu0 0
        %3281 = vmatpush1.bf16.msra.mxu0 0
        %3282 = vmatprep.subr.bf16.mxu0 0
        %3283 = vmatpush1.bf16.msra.mxu0 0
        %3284 = vmatprep.subr.bf16.mxu0 0
        %3285 = vmatpush1.bf16.msra.mxu0 0
        %3286 = vmatprep.subr.bf16.mxu0 0
        %3287 = vmatpush1.bf16.msra.mxu0 0
        %3288 = vmatprep.subr.bf16.mxu0 0
        %3289 = vmatpush1.bf16.msra.mxu0 0
        %3290 = vmatprep.subr.bf16.mxu0 0
        %3291 = vmatpush1.bf16.msra.mxu0 0
        %3292 = vmatprep.subr.bf16.mxu0 0
        %3293 = vmatpush1.bf16.msra.mxu0 0
        %3294 = vmatprep.subr.bf16.mxu0 0
        %3295 = vmatpush1.bf16.msra.mxu0 0
        %3296 = vmatprep.subr.bf16.mxu0 0
        %3297 = vmatpush1.bf16.msra.mxu0 0
        %3298 = vmatprep.subr.bf16.mxu0 0
        %3299 = vmatpush1.bf16.msra.mxu0 0
        %3300 = vmatprep.mubr.bf16.mxu0 0
        %3301 = vmatmul.mubr.bf16.gmra.mrb[0].mxu0 %v2406
        %v3302 = vpop.f32.mrb[0].mxu0
        %v3303 = vadd.f32 0.0, %v3302
        %v3304 = vpop.f32.mrb[0].mxu0
        %v3305 = vadd.f32 0.0, %v3304
        %v3306 = vpop.f32.mrb[0].mxu0
        %v3307 = vadd.f32 0.0, %v3306
        %v3308 = vpop.f32.mrb[0].mxu0
        %v3309 = vadd.f32 0.0, %v3308
        %3310 = vmatprep.mubr.bf16.mxu0 0
        %3311 = vmatmul.mubr.bf16.gmra.mrb[0].mxu0 %v2409
        %v3312 = vpop.f32.mrb[0].mxu0
        %v3313 = vadd.f32 0.0, %v3312
        %v3314 = vpop.f32.mrb[0].mxu0
        %v3315 = vadd.f32 0.0, %v3314
        %v3316 = vpop.f32.mrb[0].mxu0
        %v3317 = vadd.f32 0.0, %v3316
        %v3318 = vpop.f32.mrb[0].mxu0
        %v3319 = vadd.f32 0.0, %v3318
        %3320 = vmatprep.mubr.bf16.mxu0 0
        %3321 = vmatmul.mubr.bf16.gmra.mrb[0].mxu0 %v2412
        %v3322 = vpop.f32.mrb[0].mxu0
        %v3323 = vadd.f32 0.0, %v3322
        %v3324 = vpop.f32.mrb[0].mxu0
        %v3325 = vadd.f32 0.0, %v3324
        %v3326 = vpop.f32.mrb[0].mxu0
        %v3327 = vadd.f32 0.0, %v3326
        %v3328 = vpop.f32.mrb[0].mxu0
        %v3329 = vadd.f32 0.0, %v3328
        %3330 = vmatprep.mubr.bf16.mxu0 0
        %3331 = vmatmul.mubr.bf16.gmra.mrb[0].mxu0 %v2415
        %v3332 = vpop.f32.mrb[0].mxu0
        %v3333 = vadd.f32 0.0, %v3332
        %v3334 = vpop.f32.mrb[0].mxu0
        %v3335 = vadd.f32 0.0, %v3334
        %v3336 = vpop.f32.mrb[0].mxu0
        %v3337 = vadd.f32 0.0, %v3336
        %v3338 = vpop.f32.mrb[0].mxu0
        %v3339 = vadd.f32 0.0, %v3338
        %3340 = vmatprep.mubr.bf16.mxu0 0
        %3341 = vmatmul.mubr.bf16.gmra.mrb[0].mxu0 %v2418
        %v3342 = vpop.f32.mrb[0].mxu0
        %v3343 = vadd.f32 0.0, %v3342
        %v3344 = vpop.f32.mrb[0].mxu0
        %v3345 = vadd.f32 0.0, %v3344
        %v3346 = vpop.f32.mrb[0].mxu0
        %v3347 = vadd.f32 0.0, %v3346
        %v3348 = vpop.f32.mrb[0].mxu0
        %v3349 = vadd.f32 0.0, %v3348
        %3350 = vmatprep.mubr.bf16.mxu0 0
        %3351 = vmatmul.mubr.bf16.gmra.mrb[0].mxu0 %v2421
        %v3352 = vpop.f32.mrb[0].mxu0
        %v3353 = vadd.f32 0.0, %v3352
        %v3354 = vpop.f32.mrb[0].mxu0
        %v3355 = vadd.f32 0.0, %v3354
        %v3356 = vpop.f32.mrb[0].mxu0
        %v3357 = vadd.f32 0.0, %v3356
        %v3358 = vpop.f32.mrb[0].mxu0
        %v3359 = vadd.f32 0.0, %v3358
        %3360 = vmatprep.mubr.bf16.mxu0 0
        %3361 = vmatmul.mubr.bf16.gmra.mrb[0].mxu0 %v2424
        %v3362 = vpop.f32.mrb[0].mxu0
        %v3363 = vadd.f32 0.0, %v3362
        %v3364 = vpop.f32.mrb[0].mxu0
        %v3365 = vadd.f32 0.0, %v3364
        %v3366 = vpop.f32.mrb[0].mxu0
        %v3367 = vadd.f32 0.0, %v3366
        %v3368 = vpop.f32.mrb[0].mxu0
        %v3369 = vadd.f32 0.0, %v3368
        %3370 = vmatprep.mubr.bf16.mxu0 0
        %3371 = vmatmul.mubr.bf16.gmra.mrb[0].mxu0 %v2427
        %v3372 = vpop.f32.mrb[0].mxu0
        %v3373 = vadd.f32 0.0, %v3372
        %v3374 = vpop.f32.mrb[0].mxu0
        %v3375 = vadd.f32 0.0, %v3374
        %v3376 = vpop.f32.mrb[0].mxu0
        %v3377 = vadd.f32 0.0, %v3376
        %v3378 = vpop.f32.mrb[0].mxu0
        %v3379 = vadd.f32 0.0, %v3378
        %3380 = vdwg.mxu0
        %v3381 = vmax.f32 %v2512, %v2514
        %v3382 = vmax.f32 %v2516, %v2518
        %v3383 = vmax.f32 %v2522, %v2524
        %v3384 = vmax.f32 %v2526, %v2528
        %v3385 = vmax.f32 %v2532, %v2534
        %v3386 = vmax.f32 %v2536, %v2538
        %v3387 = vmax.f32 %v2542, %v2544
        %v3388 = vmax.f32 %v2546, %v2548
        %v3389 = vmax.f32 %v2552, %v2554
        %v3390 = vmax.f32 %v2556, %v2558
        %v3391 = vmax.f32 %v2562, %v2564
        %v3392 = vmax.f32 %v2566, %v2568
        %v3393 = vmax.f32 %v2572, %v2574
        %v3394 = vmax.f32 %v2576, %v2578
        %v3395 = vmax.f32 %v2582, %v2584
        %v3396 = vmax.f32 %v2586, %v2588
        %v3397 = vmax.f32 %v3381, %v2625
        %v3398 = vmax.f32 %v3382, %v2629
        %v3399 = vmax.f32 %v3383, %v2635
        %v3400 = vmax.f32 %v3384, %v2639
        %v3401 = vmax.f32 %v3385, %v2645
        %v3402 = vmax.f32 %v3386, %v2649
        %v3403 = vmax.f32 %v3387, %v2655
        %v3404 = vmax.f32 %v3388, %v2659
        %v3405 = vmax.f32 %v3389, %v2665
        %v3406 = vmax.f32 %v3390, %v2669
        %v3407 = vmax.f32 %v3391, %v2675
        %v3408 = vmax.f32 %v3392, %v2679
        %v3409 = vmax.f32 %v3393, %v2685
        %v3410 = vmax.f32 %v3394, %v2689
        %v3411 = vmax.f32 %v3395, %v2695
        %v3412 = vmax.f32 %v3396, %v2699
        %v3413 = vmax.f32 %v3397, %v2627
        %v3414 = vmax.f32 %v3398, %v2631
        %v3415 = vmax.f32 %v3399, %v2637
        %v3416 = vmax.f32 %v3400, %v2641
        %v3417 = vmax.f32 %v3401, %v2647
        %v3418 = vmax.f32 %v3402, %v2651
        %v3419 = vmax.f32 %v3403, %v2657
        %v3420 = vmax.f32 %v3404, %v2661
        %v3421 = vmax.f32 %v3405, %v2667
        %v3422 = vmax.f32 %v3406, %v2671
        %v3423 = vmax.f32 %v3407, %v2677
        %v3424 = vmax.f32 %v3408, %v2681
        %v3425 = vmax.f32 %v3409, %v2687
        %v3426 = vmax.f32 %v3410, %v2691
        %v3427 = vmax.f32 %v3411, %v2697
        %v3428 = vmax.f32 %v3412, %v2701
        %v3429 = vmax.f32 %v3413, %v2738
        %v3430 = vmax.f32 %v3414, %v2742
        %v3431 = vmax.f32 %v3415, %v2748
        %v3432 = vmax.f32 %v3416, %v2752
        %v3433 = vmax.f32 %v3417, %v2758
        %v3434 = vmax.f32 %v3418, %v2762
        %v3435 = vmax.f32 %v3419, %v2768
        %v3436 = vmax.f32 %v3420, %v2772
        %v3437 = vmax.f32 %v3421, %v2778
        %v3438 = vmax.f32 %v3422, %v2782
        %v3439 = vmax.f32 %v3423, %v2788
        %v3440 = vmax.f32 %v3424, %v2792
        %v3441 = vmax.f32 %v3425, %v2798
        %v3442 = vmax.f32 %v3426, %v2802
        %v3443 = vmax.f32 %v3427, %v2808
        %v3444 = vmax.f32 %v3428, %v2812
        %v3445 = vmax.f32 %v3429, %v2740
        %v3446 = vmax.f32 %v3430, %v2744
        %v3447 = vmax.f32 %v3431, %v2750
        %v3448 = vmax.f32 %v3432, %v2754
        %v3449 = vmax.f32 %v3433, %v2760
        %v3450 = vmax.f32 %v3434, %v2764
        %v3451 = vmax.f32 %v3435, %v2770
        %v3452 = vmax.f32 %v3436, %v2774
        %v3453 = vmax.f32 %v3437, %v2780
        %v3454 = vmax.f32 %v3438, %v2784
        %v3455 = vmax.f32 %v3439, %v2790
        %v3456 = vmax.f32 %v3440, %v2794
        %v3457 = vmax.f32 %v3441, %v2800
        %v3458 = vmax.f32 %v3442, %v2804
        %v3459 = vmax.f32 %v3443, %v2810
        %v3460 = vmax.f32 %v3444, %v2814
        %v3461 = vmax.f32 %v3445, %v2851
        %v3462 = vmax.f32 %v3446, %v2855
        %v3463 = vmax.f32 %v3447, %v2861
        %v3464 = vmax.f32 %v3448, %v2865
        %v3465 = vmax.f32 %v3449, %v2871
        %v3466 = vmax.f32 %v3450, %v2875
        %v3467 = vmax.f32 %v3451, %v2881
        %v3468 = vmax.f32 %v3452, %v2885
        %v3469 = vmax.f32 %v3453, %v2891
        %v3470 = vmax.f32 %v3454, %v2895
        %v3471 = vmax.f32 %v3455, %v2901
        %v3472 = vmax.f32 %v3456, %v2905
        %v3473 = vmax.f32 %v3457, %v2911
        %v3474 = vmax.f32 %v3458, %v2915
        %v3475 = vmax.f32 %v3459, %v2921
        %v3476 = vmax.f32 %v3460, %v2925
        %v3477 = vmax.f32 %v3461, %v2853
        %v3478 = vmax.f32 %v3462, %v2857
        %v3479 = vmax.f32 %v3463, %v2863
        %v3480 = vmax.f32 %v3464, %v2867
        %v3481 = vmax.f32 %v3465, %v2873
        %v3482 = vmax.f32 %v3466, %v2877
        %v3483 = vmax.f32 %v3467, %v2883
        %v3484 = vmax.f32 %v3468, %v2887
        %v3485 = vmax.f32 %v3469, %v2893
        %v3486 = vmax.f32 %v3470, %v2897
        %v3487 = vmax.f32 %v3471, %v2903
        %v3488 = vmax.f32 %v3472, %v2907
        %v3489 = vmax.f32 %v3473, %v2913
        %v3490 = vmax.f32 %v3474, %v2917
        %v3491 = vmax.f32 %v3475, %v2923
        %v3492 = vmax.f32 %v3476, %v2927
        %v3493 = vmax.f32 %v3477, %v2964
        %v3494 = vmax.f32 %v3478, %v2968
        %v3495 = vmax.f32 %v3479, %v2974
        %v3496 = vmax.f32 %v3480, %v2978
        %v3497 = vmax.f32 %v3481, %v2984
        %v3498 = vmax.f32 %v3482, %v2988
        %v3499 = vmax.f32 %v3483, %v2994
        %v3500 = vmax.f32 %v3484, %v2998
        %v3501 = vmax.f32 %v3485, %v3004
        %v3502 = vmax.f32 %v3486, %v3008
        %v3503 = vmax.f32 %v3487, %v3014
        %v3504 = vmax.f32 %v3488, %v3018
        %v3505 = vmax.f32 %v3489, %v3024
        %v3506 = vmax.f32 %v3490, %v3028
        %v3507 = vmax.f32 %v3491, %v3034
        %v3508 = vmax.f32 %v3492, %v3038
        %v3509 = vmax.f32 %v3493, %v2966
        %v3510 = vmax.f32 %v3494, %v2970
        %v3511 = vmax.f32 %v3495, %v2976
        %v3512 = vmax.f32 %v3496, %v2980
        %v3513 = vmax.f32 %v3497, %v2986
        %v3514 = vmax.f32 %v3498, %v2990
        %v3515 = vmax.f32 %v3499, %v2996
        %v3516 = vmax.f32 %v3500, %v3000
        %v3517 = vmax.f32 %v3501, %v3006
        %v3518 = vmax.f32 %v3502, %v3010
        %v3519 = vmax.f32 %v3503, %v3016
        %v3520 = vmax.f32 %v3504, %v3020
        %v3521 = vmax.f32 %v3505, %v3026
        %v3522 = vmax.f32 %v3506, %v3030
        %v3523 = vmax.f32 %v3507, %v3036
        %v3524 = vmax.f32 %v3508, %v3040
        %v3525 = vmax.f32 %v3509, %v3077
        %v3526 = vmax.f32 %v3510, %v3081
        %v3527 = vmax.f32 %v3511, %v3087
        %v3528 = vmax.f32 %v3512, %v3091
        %v3529 = vmax.f32 %v3513, %v3097
        %v3530 = vmax.f32 %v3514, %v3101
        %v3531 = vmax.f32 %v3515, %v3107
        %v3532 = vmax.f32 %v3516, %v3111
        %v3533 = vmax.f32 %v3517, %v3117
        %v3534 = vmax.f32 %v3518, %v3121
        %v3535 = vmax.f32 %v3519, %v3127
        %v3536 = vmax.f32 %v3520, %v3131
        %v3537 = vmax.f32 %v3521, %v3137
        %v3538 = vmax.f32 %v3522, %v3141
        %v3539 = vmax.f32 %v3523, %v3147
        %v3540 = vmax.f32 %v3524, %v3151
        %v3541 = vmax.f32 %v3525, %v3079
        %v3542 = vmax.f32 %v3526, %v3083
        %v3543 = vmax.f32 %v3527, %v3089
        %v3544 = vmax.f32 %v3528, %v3093
        %v3545 = vmax.f32 %v3529, %v3099
        %v3546 = vmax.f32 %v3530, %v3103
        %v3547 = vmax.f32 %v3531, %v3109
        %v3548 = vmax.f32 %v3532, %v3113
        %v3549 = vmax.f32 %v3533, %v3119
        %v3550 = vmax.f32 %v3534, %v3123
        %v3551 = vmax.f32 %v3535, %v3129
        %v3552 = vmax.f32 %v3536, %v3133
        %v3553 = vmax.f32 %v3537, %v3139
        %v3554 = vmax.f32 %v3538, %v3143
        %v3555 = vmax.f32 %v3539, %v3149
        %v3556 = vmax.f32 %v3540, %v3153
        %v3557 = vmax.f32 %v3541, %v3190
        %v3558 = vmax.f32 %v3542, %v3194
        %v3559 = vmax.f32 %v3543, %v3200
        %v3560 = vmax.f32 %v3544, %v3204
        %v3561 = vmax.f32 %v3545, %v3210
        %v3562 = vmax.f32 %v3546, %v3214
        %v3563 = vmax.f32 %v3547, %v3220
        %v3564 = vmax.f32 %v3548, %v3224
        %v3565 = vmax.f32 %v3549, %v3230
        %v3566 = vmax.f32 %v3550, %v3234
        %v3567 = vmax.f32 %v3551, %v3240
        %v3568 = vmax.f32 %v3552, %v3244
        %v3569 = vmax.f32 %v3553, %v3250
        %v3570 = vmax.f32 %v3554, %v3254
        %v3571 = vmax.f32 %v3555, %v3260
        %v3572 = vmax.f32 %v3556, %v3264
        %v3573 = vmax.f32 %v3557, %v3192
        %v3574 = vmax.f32 %v3558, %v3196
        %v3575 = vmax.f32 %v3559, %v3202
        %v3576 = vmax.f32 %v3560, %v3206
        %v3577 = vmax.f32 %v3561, %v3212
        %v3578 = vmax.f32 %v3562, %v3216
        %v3579 = vmax.f32 %v3563, %v3222
        %v3580 = vmax.f32 %v3564, %v3226
        %v3581 = vmax.f32 %v3565, %v3232
        %v3582 = vmax.f32 %v3566, %v3236
        %v3583 = vmax.f32 %v3567, %v3242
        %v3584 = vmax.f32 %v3568, %v3246
        %v3585 = vmax.f32 %v3569, %v3252
        %v3586 = vmax.f32 %v3570, %v3256
        %v3587 = vmax.f32 %v3571, %v3262
        %v3588 = vmax.f32 %v3572, %v3266
        %v3589 = vmax.f32 %v3573, %v3303
        %v3590 = vmax.f32 %v3574, %v3307
        %v3591 = vmax.f32 %v3575, %v3313
        %v3592 = vmax.f32 %v3576, %v3317
        %v3593 = vmax.f32 %v3577, %v3323
        %v3594 = vmax.f32 %v3578, %v3327
        %v3595 = vmax.f32 %v3579, %v3333
        %v3596 = vmax.f32 %v3580, %v3337
        %v3597 = vmax.f32 %v3581, %v3343
        %v3598 = vmax.f32 %v3582, %v3347
        %v3599 = vmax.f32 %v3583, %v3353
        %v3600 = vmax.f32 %v3584, %v3357
        %v3601 = vmax.f32 %v3585, %v3363
        %v3602 = vmax.f32 %v3586, %v3367
        %v3603 = vmax.f32 %v3587, %v3373
        %v3604 = vmax.f32 %v3588, %v3377
        %v3605 = vmax.f32 %v3589, %v3305
        %v3606 = vmax.f32 %v3590, %v3309
        %v3607 = vmax.f32 %v3591, %v3315
        %v3608 = vmax.f32 %v3592, %v3319
        %v3609 = vmax.f32 %v3593, %v3325
        %v3610 = vmax.f32 %v3594, %v3329
        %v3611 = vmax.f32 %v3595, %v3335
        %v3612 = vmax.f32 %v3596, %v3339
        %v3613 = vmax.f32 %v3597, %v3345
        %v3614 = vmax.f32 %v3598, %v3349
        %v3615 = vmax.f32 %v3599, %v3355
        %v3616 = vmax.f32 %v3600, %v3359
        %v3617 = vmax.f32 %v3601, %v3365
        %v3618 = vmax.f32 %v3602, %v3369
        %v3619 = vmax.f32 %v3603, %v3375
        %v3620 = vmax.f32 %v3604, %v3379
        %v3621 = vmax.f32 %v3605, 0.0
        %v3622 = vmax.f32 %v3606, 0.0
        %v3623 = vmax.f32 %v3607, 0.0
        %v3624 = vmax.f32 %v3608, 0.0
        %v3625 = vmax.f32 %v3609, 0.0
        %v3626 = vmax.f32 %v3610, 0.0
        %v3627 = vmax.f32 %v3611, 0.0
        %v3628 = vmax.f32 %v3612, 0.0
        %v3629 = vmax.f32 %v3613, 0.0
        %v3630 = vmax.f32 %v3614, 0.0
        %v3631 = vmax.f32 %v3615, 0.0
        %v3632 = vmax.f32 %v3616, 0.0
        %v3633 = vmax.f32 %v3617, 0.0
        %v3634 = vmax.f32 %v3618, 0.0
        %v3635 = vmax.f32 %v3619, 0.0
        %v3636 = vmax.f32 %v3620, 0.0
        %3637 = vxpose.xlu0.b32.start [1/16] %v3621, 128
        %3638 = vxpose.xlu0.b32.cont [2/16] %v3622, 128
        %3639 = vxpose.xlu0.b32.cont [3/16] %v3623, 128
        %3640 = vxpose.xlu0.b32.cont [4/16] %v3624, 128
        %3641 = vxpose.xlu0.b32.cont [5/16] %v3625, 128
        %3642 = vxpose.xlu0.b32.cont [6/16] %v3626, 128
        %3643 = vxpose.xlu0.b32.cont [7/16] %v3627, 128
        %3644 = vxpose.xlu0.b32.cont [8/16] %v3628, 128
        %3645 = vxpose.xlu0.b32.cont [9/16] %v3629, 128
        %3646 = vxpose.xlu0.b32.cont [10/16] %v3630, 128
        %3647 = vxpose.xlu0.b32.cont [11/16] %v3631, 128
        %3648 = vxpose.xlu0.b32.cont [12/16] %v3632, 128
        %3649 = vxpose.xlu0.b32.cont [13/16] %v3633, 128
        %3650 = vxpose.xlu0.b32.cont [14/16] %v3634, 128
        %3651 = vxpose.xlu0.b32.cont [15/16] %v3635, 128
        %3652 = vxpose.xlu0.b32.end [16/16] %v3636, 128
        %v3653 = vpop.trf.xlu0
        %v3654 = vpop.trf.xlu0
        %v3655 = vpop.trf.xlu0
        %v3656 = vpop.trf.xlu0
        %v3657 = vpop.trf.xlu0
        %v3658 = vpop.trf.xlu0
        %v3659 = vpop.trf.xlu0
        %v3660 = vpop.trf.xlu0
        %v3661 = vpop.trf.xlu0
        %v3662 = vpop.trf.xlu0
        %v3663 = vpop.trf.xlu0
        %v3664 = vpop.trf.xlu0
        %v3665 = vpop.trf.xlu0
        %v3666 = vpop.trf.xlu0
        %v3667 = vpop.trf.xlu0
        %v3668 = vpop.trf.xlu0
        %3669 = vst [vmem:[%s275] sm:$0xff] %v3653
        %3670 = vst [vmem:[%s275 + $0x8] sm:$0xff] %v3654
        %3671 = vst [vmem:[%s275 + $0x10] sm:$0xff] %v3655
        %3672 = vst [vmem:[%s275 + $0x18] sm:$0xff] %v3656
        %3673 = vst [vmem:[%s275 + $0x20] sm:$0xff] %v3657
        %3674 = vst [vmem:[%s275 + $0x28] sm:$0xff] %v3658
        %3675 = vst [vmem:[%s275 + $0x30] sm:$0xff] %v3659
        %3676 = vst [vmem:[%s275 + $0x38] sm:$0xff] %v3660
        %3677 = vst [vmem:[%s275 + $0x40] sm:$0xff] %v3661
        %3678 = vst [vmem:[%s275 + $0x48] sm:$0xff] %v3662
        %3679 = vst [vmem:[%s275 + $0x50] sm:$0xff] %v3663
        %3680 = vst [vmem:[%s275 + $0x58] sm:$0xff] %v3664
        %3681 = vst [vmem:[%s275 + $0x60] sm:$0xff] %v3665
        %3682 = vst [vmem:[%s275 + $0x68] sm:$0xff] %v3666
        %3683 = vst [vmem:[%s275 + $0x70] sm:$0xff] %v3667
        %3684 = vst [vmem:[%s275 + $0x78] sm:$0xff] %v3668
        %s3685 = sand.u32 %s136, 1
        %s3686 = scalar_lea.sflag [#allocation4], %s3685
        %s3687 = sand.u32 %s136, 1
        %s3688 = smul.addr %s3687, 128
        %s3689 = scalar_lea.vmem [#allocation10], %s3688
        // Predicated region
        $region53: #{tpu_custom_call.1} parent=35 // pred_check
          %p3690 = pneg %p146
        $region54: #{tpu_custom_call.1} parent=35 // pred_check_branch
          %3692 = sbr.rel (%p3690) target = $region56
        $region55: #{tpu_custom_call.1} parent=35 // pred_region
          %s3693 = smul.u32 16, %s28
          %s3695 = ssub.s32 2048, 2048
          %3696 = vsyncadd %s3686, %s3695
          %s3697 = smul.addr %s27, 16
          %s3698 = sadd.s32 %s3693, %s3697
          %s3699 = smul.addr %s3698, 128
          %s3700 = scalar_lea.hbm %s4, %s3699
          %s3701 = sshll.u32 %s3689, 4
          %s3702 = int_to_ptr.vmem [resolvable:$true] %s3701
          %3707 = dma.vmem_to_hbm [thread:$0]  %s3702, 2048, %s3700, %s3686, 128, 128, 8
        $region56: #{tpu_custom_call.1} parent=35 // pred_fallthru
          _
      $region36: #{tpu_custom_call.1} parent=5 // pred_fallthru
        _
      %p3708 = scmp.le.s32.totalorder 2, %s18
      // Predicated region
      $region57: #{tpu_custom_call.1} parent=5 // pred_check
        %p3709 = pneg %p3708
      $region58: #{tpu_custom_call.1} parent=5 // pred_check_branch
        %3711 = sbr.rel (%p3709) target = $region60
      $region59: #{tpu_custom_call.1} parent=5 // pred_region
        %s3712 = ssub.s32 %s18, 2
        // Predicated region
        $region61: #{tpu_custom_call.1} parent=59 // pred_check
          %p3713 = pneg %p152
        $region62: #{tpu_custom_call.1} parent=59 // pred_check_branch
          %3715 = sbr.rel (%p3713) target = $region64
        $region63: #{tpu_custom_call.1} parent=59 // pred_region
          %s3716 = sand.u32 %s137, 1
          %s3717 = scalar_lea.sflag [#allocation4], %s3716
          %s3718 = sand.u32 %s137, 1
          %s3719 = smul.addr %s3718, 128
          %s3720 = scalar_lea.vmem [#allocation10], %s3719
          %3721 = dma.done %s3717, 2048
        $region64: #{tpu_custom_call.1} parent=59 // pred_fallthru
          _
      $region60: #{tpu_custom_call.1} parent=5 // pred_fallthru
        _
    $region6: #{tpu_custom_call.1} parent=1 // loop_footer
      %s22 = sadd.s32 1, %s18
    $region7: #{tpu_custom_call.1} parent=1 // loop_footer_branch
      %17 = sbr.rel target = $region3
    $region8: #{tpu_custom_call.1} parent=1 // loop_exit
      _
    %3722 = vsyncpa [#allocation3], 1
    %s3723 = scalar_lea.sflag [#allocation3], 1
    %3724 = vsyncpa %s3723, 1
    %3725 = vsyncpa [#allocation6], 1
    %3726 = vsyncpa [#allocation9], 1
    %3727 = vsyncpa [#allocation4], 1
    %s3728 = scalar_lea.sflag [#allocation4], 1
    %3729 = vsyncpa %s3728, 1

</llo_original>
